<compile_context>
chip_gen: v7x
topology: tpu7x:2x2x1
jax: 0.10.0
libtpu: 0.0.40
codegen_flags: <defaults>
</compile_context>

<pallas_src>
import jax
import jax.numpy as jnp
from jax import lax
from jax.experimental import pallas as pl
from jax.experimental.pallas import tpu as pltpu


# ----------------------------------------------------------------------------
# Host-side packing helpers.
# ----------------------------------------------------------------------------
def _reorder_gate_cols(w):
    """PyTorch gate order [i, f, g, o] -> kernel order [i, f, o, g] (last axis)."""
    H = w.shape[-1] // 4
    return jnp.concatenate([w[..., :2 * H], w[..., 3 * H:], w[..., 2 * H:3 * H]],
                           axis=-1)


def _round8(n):
    return -(-n // 8) * 8


def _pack_params(params, H):
    """Pack every weight/bias into one (rows, 8H) f32 buffer with static offsets."""
    W8 = 8 * H
    segs, layer_offs, off = [], [], 0
    for layer in params["lstm"]:
        wih = jnp.concatenate([_reorder_gate_cols(layer["wih_f"]),
                               _reorder_gate_cols(layer["wih_b"])], axis=1)   # (Din, 8H)
        whh = jnp.concatenate([_reorder_gate_cols(layer["whh_f"]),
                               _reorder_gate_cols(layer["whh_b"])], axis=1)   # (H, 8H)
        b = jnp.concatenate([_reorder_gate_cols(layer["b_f"]),
                             _reorder_gate_cols(layer["b_b"])], axis=1)       # (1, 8H)
        o_wih = off; off += _round8(wih.shape[0])
        o_whh = off; off += _round8(whh.shape[0])
        o_b = off;   off += _round8(b.shape[0])
        layer_offs.append((o_wih, o_whh, o_b))
        segs += [(o_wih, wih), (o_whh, whh), (o_b, b)]
    wout_off = off; off += _round8(params["w_out"].shape[0])
    bout_off = off; off += _round8(params["b_out"].shape[0])
    segs += [(wout_off, params["w_out"]), (bout_off, params["b_out"])]

    buf = jnp.zeros((off, W8), jnp.float32)
    for o, arr in segs:
        buf = buf.at[o:o + arr.shape[0], :arr.shape[1]].set(arr.astype(jnp.float32))
    return buf, layer_offs, wout_off, bout_off


# ----------------------------------------------------------------------------
# Fused kernel builder. Refs: x_flat, w_buf, logits_out, gx, hf, hb scratch.
# ----------------------------------------------------------------------------
def _make_bilstm_kernel(T, Bp, H, D, C, num_layers, layer_offs, wout_off, bout_off):
    twoB = 2 * Bp
    H3, H4, H8 = 3 * H, 4 * H, 8 * H

    def kernel(x_ref, w_ref, o_ref, gx_ref, hf_ref, hb_ref):
        # Constant row mask: forward rows (< Bp) take the first 4H columns of the
        # widened recurrent matmul result; backward rows take the second 4H.
        fwd_rows = lax.broadcasted_iota(jnp.int32, (twoB, H4), 0) < Bp

        # ---- layer-0 hoisted input projection (both directions at once) ------
        wih0, _, b0 = layer_offs[0]
        gx_ref[...] = (
            jnp.dot(x_ref[...], w_ref[wih0:wih0 + D, :],
                    preferred_element_type=jnp.float32)
            + w_ref[b0:b0 + 1, :]
        )  # (T*Bp, 8H): cols [0,4H) forward gates, [4H,8H) backward gates

        acc = jnp.zeros((twoB, H), jnp.float32)
        for l in range(num_layers):
            is_last = (l == num_layers - 1)
            whh_off = layer_offs[l][1]

            h = jnp.zeros((twoB, H), jnp.float32)
            c = jnp.zeros((twoB, H), jnp.float32)
            acc = jnp.zeros((twoB, H), jnp.float32)

            # Fully-unrolled static time loop (T small). Every slice is static
            # and (8,128)-aligned thanks to Bp padding.
            for t in range(T):
                # forward gates from time t, backward gates from time T-1-t;
                # each operand is a whole vreg row-group so the concat is free.
                gx = jnp.concatenate(
                    [gx_ref[t * Bp:(t + 1) * Bp, 0:H4],
                     gx_ref[(T - 1 - t) * Bp:(T - t) * Bp, H4:H8]], axis=0)

                # Widened recurrent matmul: (2Bp,H) @ (H,8H); pick the valid
                # 128-lane half per row block with a single aligned select.
                # TODO(synk): keep this RHS MXU-resident across the time loop
                # (pltpu.matmul_push_rhs/acc_lhs/pop) — skipped for robustness.
                hh = jnp.dot(h, w_ref[whh_off:whh_off + H, :],
                             preferred_element_type=jnp.float32)      # (2Bp, 8H)
                gates = gx + jnp.where(fwd_rows, hh[:, 0:H4], hh[:, H4:H8])

                # Gate order is [i, f, o, g]: one sigmoid over 3H, one tanh over H.
                sig = jax.nn.sigmoid(gates[:, 0:H3])
                g_g = jnp.tanh(gates[:, H3:H4])
                i_g = sig[:, 0:H]
                f_g = sig[:, H:2 * H]
                o_g = sig[:, 2 * H:H3]

                c = f_g * c + i_g * g_g
                h = o_g * jnp.tanh(c)

                if is_last:
                    acc = acc + h
                else:
                    # Aligned vreg-group stores; backward-time reversal is folded
                    # into the (static) store address.
                    hf_ref[t * Bp:(t + 1) * Bp, :] = h[:Bp]
                    hb_ref[(T - 1 - t) * Bp:(T - t) * Bp, :] = h[Bp:]

            if not is_last:
                # Hoisted input projection for the next layer from the VMEM slabs.
                nwih, _, nb = layer_offs[l + 1]
                gx_ref[...] = (
                    jnp.dot(hf_ref[...], w_ref[nwih:nwih + H, :],
                            preferred_element_type=jnp.float32)
                    + jnp.dot(hb_ref[...], w_ref[nwih + H:nwih + 2 * H, :],
                              preferred_element_type=jnp.float32)
                    + w_ref[nb:nb + 1, :]
                )
            # TODO(synk): inter-layer Dropout(0.25) is training-mode only in
            # PyTorch; eval semantics (identity) are implemented here.

        # ---- fused mean-pool over time + output Linear ------------------------
        w_top = w_ref[wout_off:wout_off + H, 0:C]          # multiplies fwd half
        w_bot = w_ref[wout_off + H:wout_off + 2 * H, 0:C]  # multiplies bwd half
        b_out = w_ref[bout_off:bout_off + 1, 0:C]
        o_ref[...] = (
            (jnp.dot(acc[:Bp], w_top, preferred_element_type=jnp.float32)
             + jnp.dot(acc[Bp:], w_bot, preferred_element_type=jnp.float32))
            * (1.0 / T)
            + b_out
        )

    return kernel


# ----------------------------------------------------------------------------
# Wrapper: pad batch to sublane width, pack operands, launch one pallas_call.
# ----------------------------------------------------------------------------
def bilstm_forward(x, params):
    """x: (B, T, input_size) batch-first, like the PyTorch module."""
    B, T, D = x.shape
    layers = params["lstm"]
    num_layers = len(layers)
    H = layers[0]["whh_f"].shape[0]
    C = params["w_out"].shape[1]
    Bp = _round8(B)  # pad batch to the f32 sublane count

    # Time-major, batch-padded flat layout: row t*Bp + b == x[b, t] (zeros for b>=B).
    xt = jnp.transpose(x, (1, 0, 2)).astype(jnp.float32)      # (T, B, D)
    xt = jnp.pad(xt, ((0, 0), (0, Bp - B), (0, 0)))
    x_flat = xt.reshape(T * Bp, D)

    w_buf, layer_offs, wout_off, bout_off = _pack_params(params, H)

    kernel = _make_bilstm_kernel(T, Bp, H, D, C, num_layers,
                                 layer_offs, wout_off, bout_off)
    vmem = pl.BlockSpec(memory_space=pltpu.MemorySpace.VMEM)
    # TODO(synk): on v7x, split fwd/bwd directions across the two TensorCores
    # (grid=(2,) parallel); single-core version kept here for portability.
    logits = pl.pallas_call(
        kernel,
        out_shape=jax.ShapeDtypeStruct((Bp, C), jnp.float32),
        in_specs=[vmem, vmem],
        out_specs=vmem,
        scratch_shapes=[
            pltpu.VMEM((T * Bp, 8 * H), jnp.float32),   # hoisted gate projections
            pltpu.VMEM((T * Bp, H), jnp.float32),       # fwd hidden outs (time order)
            pltpu.VMEM((T * Bp, H), jnp.float32),       # bwd hidden outs (time order)
        ],
    )(x_flat, w_buf)
    return logits[:B]


# ----------------------------------------------------------------------------
# Deterministic parameter construction (PyTorch-style U(-1/sqrt(H), 1/sqrt(H))).
# Weights stored transposed relative to PyTorch: (D, 4H) and (H, 4H),
# PyTorch gate column order [i, f, g, o].
# ----------------------------------------------------------------------------
def init_params(key, input_size, hidden_size, num_layers, num_classes):
    H = hidden_size
    scale = 1.0 / jnp.sqrt(jnp.float32(H))
    layers = []
    for l in range(num_layers):
        d_in = input_size if l == 0 else 2 * H
        layer = {}
        for tag in ("f", "b"):
            key, k1, k2, k3, k4 = jax.random.split(key, 5)
            layer[f"wih_{tag}"] = jax.random.uniform(
                k1, (d_in, 4 * H), jnp.float32, -scale, scale)
            layer[f"whh_{tag}"] = jax.random.uniform(
                k2, (H, 4 * H), jnp.float32, -scale, scale)
            b_ih = jax.random.uniform(k3, (4 * H,), jnp.float32, -scale, scale)
            b_hh = jax.random.uniform(k4, (4 * H,), jnp.float32, -scale, scale)
            layer[f"b_{tag}"] = (b_ih + b_hh).reshape(1, 4 * H)
        layers.append(layer)
    key, k5, k6 = jax.random.split(key, 3)
    lin_scale = 1.0 / jnp.sqrt(jnp.float32(2 * H))
    w_out = jax.random.uniform(
        k5, (2 * H, num_classes), jnp.float32, -lin_scale, lin_scale)
    b_out = jax.random.uniform(
        k6, (1, num_classes), jnp.float32, -lin_scale, lin_scale)
    return {"lstm": layers, "w_out": w_out, "b_out": b_out}


# ----------------------------------------------------------------------------
# Pure-JAX reference (mirrors torch.nn.LSTM bidirectional eval semantics).
# ----------------------------------------------------------------------------
def _lstm_cell_ref(x_t, h, c, w_ih, w_hh, b, H):
    gates = (jnp.dot(x_t, w_ih, precision="highest")
             + jnp.dot(h, w_hh, precision="highest") + b)
    i = jax.nn.sigmoid(gates[:, 0:H])
    f = jax.nn.sigmoid(gates[:, H:2 * H])
    g = jnp.tanh(gates[:, 2 * H:3 * H])
    o = jax.nn.sigmoid(gates[:, 3 * H:4 * H])
    c = f * c + i * g
    h = o * jnp.tanh(c)
    return h, c


def bilstm_reference(x, params):
    B, T, _ = x.shape
    layer_in = x.astype(jnp.float32)
    for layer in params["lstm"]:
        H = layer["whh_f"].shape[0]
        hf = jnp.zeros((B, H), jnp.float32)
        cf = jnp.zeros((B, H), jnp.float32)
        outs_f = []
        for t in range(T):
            hf, cf = _lstm_cell_ref(layer_in[:, t], hf, cf,
                                    layer["wih_f"], layer["whh_f"], layer["b_f"], H)
            outs_f.append(hf)
        hb = jnp.zeros((B, H), jnp.float32)
        cb = jnp.zeros((B, H), jnp.float32)
        outs_b = [None] * T
        for t in range(T - 1, -1, -1):
            hb, cb = _lstm_cell_ref(layer_in[:, t], hb, cb,
                                    layer["wih_b"], layer["whh_b"], layer["b_b"], H)
            outs_b[t] = hb
        layer_in = jnp.stack(
            [jnp.concatenate([outs_f[t], outs_b[t]], axis=-1) for t in range(T)],
            axis=1)
    pooled = jnp.mean(layer_in, axis=1)
    return jnp.dot(pooled, params["w_out"], precision="highest") + params["b_out"]


if __name__ == "__main__":
    # Module config: BiLSTM(input_size=16, hidden_size=32, num_layers=2,
    #                       dropout=0.25, num_classes=4)
    input_size, hidden_size, num_layers, num_classes = 16, 32, 2, 4
    batch, seq = 2, 8

    root = jax.random.PRNGKey(0)
    k_x, k_p = jax.random.split(root)
    x = jax.random.normal(k_x, (batch, seq, input_size), dtype=jnp.float32)
    params = init_params(k_p, input_size, hidden_size, num_layers, num_classes)

    logits = bilstm_forward(x, params)
    jax.block_until_ready(logits)
    assert logits.shape == (batch, num_classes)

    ref = bilstm_reference(x, params)
    max_diff = float(jnp.max(jnp.abs(logits - ref)))
    assert jnp.allclose(logits, ref, atol=1e-3, rtol=1e-3), f"max diff {max_diff}"

    print("KERNEL_OK")
</pallas_src>

<mosaic_0001>
module attributes {stable_mosaic.version = 11 : i64} {
  func.func @kernel(%arg0: memref<64x16xf32, #tpu.memory_space<vmem>>, %arg1: memref<232x256xf32, #tpu.memory_space<vmem>>, %arg2: memref<8x4xf32, #tpu.memory_space<vmem>>, %arg3: memref<64x256xf32, #tpu.memory_space<vmem>>, %arg4: memref<64x32xf32, #tpu.memory_space<vmem>>, %arg5: memref<64x32xf32, #tpu.memory_space<vmem>>) attributes {dimension_semantics = [], scalar_prefetch = 0 : i64, scratch_operands = 3 : i64, tpu.core_type = #tpu.core_type<tc>} {
    %0 = tpu.iota {dimensions = array<i32: 0>} : vector<16x128xi32>
    %c8_i32 = arith.constant 8 : i32
    %1 = vector.broadcast %c8_i32 : i32 to vector<16x128xi32>
    %2 = arith.cmpi slt, %0, %1 : vector<16x128xi32>
    %c0 = arith.constant 0 : index
    %c0_0 = arith.constant 0 : index
    %3 = vector.load %arg0[%c0, %c0_0] : memref<64x16xf32, #tpu.memory_space<vmem>>, vector<64x16xf32>
    %c0_1 = arith.constant 0 : index
    %c0_2 = arith.constant 0 : index
    %4 = vector.load %arg1[%c0_1, %c0_2] : memref<232x256xf32, #tpu.memory_space<vmem>>, vector<16x256xf32>
    %cst = arith.constant dense<0.000000e+00> : vector<64x256xf32>
    %5 = tpu.matmul %3, %4, %cst {dimension_numbers = #tpu.dot_dimension_numbers<[1], [0], [0], [1], [0, 0, 1, 1], [], []>} : vector<64x16xf32>, vector<16x256xf32>, vector<64x256xf32> -> vector<64x256xf32>
    %c48 = arith.constant 48 : index
    %c0_3 = arith.constant 0 : index
    %6 = vector.load %arg1[%c48, %c0_3] : memref<232x256xf32, #tpu.memory_space<vmem>>, vector<1x256xf32>
    %7 = vector.broadcast %6 : vector<1x256xf32> to vector<64x256xf32>
    %8 = arith.addf %5, %7 : vector<64x256xf32>
    %c0_4 = arith.constant 0 : index
    %c0_5 = arith.constant 0 : index
    %9 = vector.load %arg3[%c0_4, %c0_5] : memref<64x256xf32, #tpu.memory_space<vmem>>, vector<64x256xf32>
    tpu.vector_store %arg3[%c0_4, %c0_5], %8 {strides = array<i32>} : memref<64x256xf32, #tpu.memory_space<vmem>>, vector<64x256xf32>,
    %cst_6 = arith.constant 0.000000e+00 : f32
    %10 = vector.broadcast %cst_6 : f32 to vector<16x32xf32>
    %cst_7 = arith.constant 0.000000e+00 : f32
    %11 = vector.broadcast %cst_7 : f32 to vector<16x32xf32>
    %c0_8 = arith.constant 0 : index
    %c0_9 = arith.constant 0 : index
    %12 = vector.load %arg3[%c0_8, %c0_9] : memref<64x256xf32, #tpu.memory_space<vmem>>, vector<8x128xf32>
    %c56 = arith.constant 56 : index
    %c128 = arith.constant 128 : index
    %13 = vector.load %arg3[%c56, %c128] : memref<64x256xf32, #tpu.memory_space<vmem>>, vector<8x128xf32>
    %14 = tpu.concatenate %12, %13 in 0 : vector<8x128xf32>, vector<8x128xf32> -> vector<16x128xf32>
    %c16 = arith.constant 16 : index
    %c0_10 = arith.constant 0 : index
    %15 = vector.load %arg1[%c16, %c0_10] : memref<232x256xf32, #tpu.memory_space<vmem>>, vector<32x256xf32>
    %cst_11 = arith.constant dense<0.000000e+00> : vector<16x256xf32>
    %16 = tpu.matmul %10, %15, %cst_11 {dimension_numbers = #tpu.dot_dimension_numbers<[1], [0], [0], [1], [0, 0, 1, 1], [], []>} : vector<16x32xf32>, vector<32x256xf32>, vector<16x256xf32> -> vector<16x256xf32>
    %17 = vector.extract_strided_slice %16 {offsets = [0, 0], sizes = [16, 128], strides = [1, 1]} : vector<16x256xf32> to vector<16x128xf32>
    %18 = vector.extract_strided_slice %16 {offsets = [0, 128], sizes = [16, 128], strides = [1, 1]} : vector<16x256xf32> to vector<16x128xf32>
    %19 = arith.select %2, %17, %18 : vector<16x128xi1>, vector<16x128xf32>
    %20 = arith.addf %14, %19 : vector<16x128xf32>
    %21 = vector.extract_strided_slice %20 {offsets = [0, 0], sizes = [16, 96], strides = [1, 1]} : vector<16x128xf32> to vector<16x96xf32>
    %22 = arith.negf %21 : vector<16x96xf32>
    %23 = math.exp %22 : vector<16x96xf32>
    %cst_12 = arith.constant 1.000000e+00 : f32
    %24 = vector.broadcast %cst_12 : f32 to vector<16x96xf32>
    %25 = arith.addf %24, %23 : vector<16x96xf32>
    %26 = arith.divf %24, %25 : vector<16x96xf32>
    %27 = vector.extract_strided_slice %20 {offsets = [0, 96], sizes = [16, 32], strides = [1, 1]} : vector<16x128xf32> to vector<16x32xf32>
    %28 = math.tanh %27 : vector<16x32xf32>
    %29 = vector.extract_strided_slice %26 {offsets = [0, 0], sizes = [16, 32], strides = [1, 1]} : vector<16x96xf32> to vector<16x32xf32>
    %30 = vector.extract_strided_slice %26 {offsets = [0, 32], sizes = [16, 32], strides = [1, 1]} : vector<16x96xf32> to vector<16x32xf32>
    %31 = vector.extract_strided_slice %26 {offsets = [0, 64], sizes = [16, 32], strides = [1, 1]} : vector<16x96xf32> to vector<16x32xf32>
    %32 = arith.mulf %30, %11 : vector<16x32xf32>
    %33 = arith.mulf %29, %28 : vector<16x32xf32>
    %34 = arith.addf %32, %33 : vector<16x32xf32>
    %35 = math.tanh %34 : vector<16x32xf32>
    %36 = arith.mulf %31, %35 : vector<16x32xf32>
    %37 = vector.extract_strided_slice %36 {offsets = [0, 0], sizes = [8, 32], strides = [1, 1]} : vector<16x32xf32> to vector<8x32xf32>
    %c0_13 = arith.constant 0 : index
    %c0_14 = arith.constant 0 : index
    %38 = vector.load %arg4[%c0_13, %c0_14] : memref<64x32xf32, #tpu.memory_space<vmem>>, vector<8x32xf32>
    tpu.vector_store %arg4[%c0_13, %c0_14], %37 {strides = array<i32>} : memref<64x32xf32, #tpu.memory_space<vmem>>, vector<8x32xf32>,
    %39 = vector.extract_strided_slice %36 {offsets = [8, 0], sizes = [8, 32], strides = [1, 1]} : vector<16x32xf32> to vector<8x32xf32>
    %c56_15 = arith.constant 56 : index
    %c0_16 = arith.constant 0 : index
    %40 = vector.load %arg5[%c56_15, %c0_16] : memref<64x32xf32, #tpu.memory_space<vmem>>, vector<8x32xf32>
    tpu.vector_store %arg5[%c56_15, %c0_16], %39 {strides = array<i32>} : memref<64x32xf32, #tpu.memory_space<vmem>>, vector<8x32xf32>,
    %c8 = arith.constant 8 : index
    %c0_17 = arith.constant 0 : index
    %41 = vector.load %arg3[%c8, %c0_17] : memref<64x256xf32, #tpu.memory_space<vmem>>, vector<8x128xf32>
    %c48_18 = arith.constant 48 : index
    %c128_19 = arith.constant 128 : index
    %42 = vector.load %arg3[%c48_18, %c128_19] : memref<64x256xf32, #tpu.memory_space<vmem>>, vector<8x128xf32>
    %43 = tpu.concatenate %41, %42 in 0 : vector<8x128xf32>, vector<8x128xf32> -> vector<16x128xf32>
    %c16_20 = arith.constant 16 : index
    %c0_21 = arith.constant 0 : index
    %44 = vector.load %arg1[%c16_20, %c0_21] : memref<232x256xf32, #tpu.memory_space<vmem>>, vector<32x256xf32>
    %cst_22 = arith.constant dense<0.000000e+00> : vector<16x256xf32>
    %45 = tpu.matmul %36, %44, %cst_22 {dimension_numbers = #tpu.dot_dimension_numbers<[1], [0], [0], [1], [0, 0, 1, 1], [], []>} : vector<16x32xf32>, vector<32x256xf32>, vector<16x256xf32> -> vector<16x256xf32>
    %46 = vector.extract_strided_slice %45 {offsets = [0, 0], sizes = [16, 128], strides = [1, 1]} : vector<16x256xf32> to vector<16x128xf32>
    %47 = vector.extract_strided_slice %45 {offsets = [0, 128], sizes = [16, 128], strides = [1, 1]} : vector<16x256xf32> to vector<16x128xf32>
    %48 = arith.select %2, %46, %47 : vector<16x128xi1>, vector<16x128xf32>
    %49 = arith.addf %43, %48 : vector<16x128xf32>
    %50 = vector.extract_strided_slice %49 {offsets = [0, 0], sizes = [16, 96], strides = [1, 1]} : vector<16x128xf32> to vector<16x96xf32>
    %51 = arith.negf %50 : vector<16x96xf32>
    %52 = math.exp %51 : vector<16x96xf32>
    %cst_23 = arith.constant 1.000000e+00 : f32
    %53 = vector.broadcast %cst_23 : f32 to vector<16x96xf32>
    %54 = arith.addf %53, %52 : vector<16x96xf32>
    %55 = arith.divf %53, %54 : vector<16x96xf32>
    %56 = vector.extract_strided_slice %49 {offsets = [0, 96], sizes = [16, 32], strides = [1, 1]} : vector<16x128xf32> to vector<16x32xf32>
    %57 = math.tanh %56 : vector<16x32xf32>
    %58 = vector.extract_strided_slice %55 {offsets = [0, 0], sizes = [16, 32], strides = [1, 1]} : vector<16x96xf32> to vector<16x32xf32>
    %59 = vector.extract_strided_slice %55 {offsets = [0, 32], sizes = [16, 32], strides = [1, 1]} : vector<16x96xf32> to vector<16x32xf32>
    %60 = vector.extract_strided_slice %55 {offsets = [0, 64], sizes = [16, 32], strides = [1, 1]} : vector<16x96xf32> to vector<16x32xf32>
    %61 = arith.mulf %59, %34 : vector<16x32xf32>
    %62 = arith.mulf %58, %57 : vector<16x32xf32>
    %63 = arith.addf %61, %62 : vector<16x32xf32>
    %64 = math.tanh %63 : vector<16x32xf32>
    %65 = arith.mulf %60, %64 : vector<16x32xf32>
    %66 = vector.extract_strided_slice %65 {offsets = [0, 0], sizes = [8, 32], strides = [1, 1]} : vector<16x32xf32> to vector<8x32xf32>
    %c8_24 = arith.constant 8 : index
    %c0_25 = arith.constant 0 : index
    %67 = vector.load %arg4[%c8_24, %c0_25] : memref<64x32xf32, #tpu.memory_space<vmem>>, vector<8x32xf32>
    tpu.vector_store %arg4[%c8_24, %c0_25], %66 {strides = array<i32>} : memref<64x32xf32, #tpu.memory_space<vmem>>, vector<8x32xf32>,
    %68 = vector.extract_strided_slice %65 {offsets = [8, 0], sizes = [8, 32], strides = [1, 1]} : vector<16x32xf32> to vector<8x32xf32>
    %c48_26 = arith.constant 48 : index
    %c0_27 = arith.constant 0 : index
    %69 = vector.load %arg5[%c48_26, %c0_27] : memref<64x32xf32, #tpu.memory_space<vmem>>, vector<8x32xf32>
    tpu.vector_store %arg5[%c48_26, %c0_27], %68 {strides = array<i32>} : memref<64x32xf32, #tpu.memory_space<vmem>>, vector<8x32xf32>,
    %c16_28 = arith.constant 16 : index
    %c0_29 = arith.constant 0 : index
    %70 = vector.load %arg3[%c16_28, %c0_29] : memref<64x256xf32, #tpu.memory_space<vmem>>, vector<8x128xf32>
    %c40 = arith.constant 40 : index
    %c128_30 = arith.constant 128 : index
    %71 = vector.load %arg3[%c40, %c128_30] : memref<64x256xf32, #tpu.memory_space<vmem>>, vector<8x128xf32>
    %72 = tpu.concatenate %70, %71 in 0 : vector<8x128xf32>, vector<8x128xf32> -> vector<16x128xf32>
    %c16_31 = arith.constant 16 : index
    %c0_32 = arith.constant 0 : index
    %73 = vector.load %arg1[%c16_31, %c0_32] : memref<232x256xf32, #tpu.memory_space<vmem>>, vector<32x256xf32>
    %cst_33 = arith.constant dense<0.000000e+00> : vector<16x256xf32>
    %74 = tpu.matmul %65, %73, %cst_33 {dimension_numbers = #tpu.dot_dimension_numbers<[1], [0], [0], [1], [0, 0, 1, 1], [], []>} : vector<16x32xf32>, vector<32x256xf32>, vector<16x256xf32> -> vector<16x256xf32>
    %75 = vector.extract_strided_slice %74 {offsets = [0, 0], sizes = [16, 128], strides = [1, 1]} : vector<16x256xf32> to vector<16x128xf32>
    %76 = vector.extract_strided_slice %74 {offsets = [0, 128], sizes = [16, 128], strides = [1, 1]} : vector<16x256xf32> to vector<16x128xf32>
    %77 = arith.select %2, %75, %76 : vector<16x128xi1>, vector<16x128xf32>
    %78 = arith.addf %72, %77 : vector<16x128xf32>
    %79 = vector.extract_strided_slice %78 {offsets = [0, 0], sizes = [16, 96], strides = [1, 1]} : vector<16x128xf32> to vector<16x96xf32>
    %80 = arith.negf %79 : vector<16x96xf32>
    %81 = math.exp %80 : vector<16x96xf32>
    %cst_34 = arith.constant 1.000000e+00 : f32
    %82 = vector.broadcast %cst_34 : f32 to vector<16x96xf32>
    %83 = arith.addf %82, %81 : vector<16x96xf32>
    %84 = arith.divf %82, %83 : vector<16x96xf32>
    %85 = vector.extract_strided_slice %78 {offsets = [0, 96], sizes = [16, 32], strides = [1, 1]} : vector<16x128xf32> to vector<16x32xf32>
    %86 = math.tanh %85 : vector<16x32xf32>
    %87 = vector.extract_strided_slice %84 {offsets = [0, 0], sizes = [16, 32], strides = [1, 1]} : vector<16x96xf32> to vector<16x32xf32>
    %88 = vector.extract_strided_slice %84 {offsets = [0, 32], sizes = [16, 32], strides = [1, 1]} : vector<16x96xf32> to vector<16x32xf32>
    %89 = vector.extract_strided_slice %84 {offsets = [0, 64], sizes = [16, 32], strides = [1, 1]} : vector<16x96xf32> to vector<16x32xf32>
    %90 = arith.mulf %88, %63 : vector<16x32xf32>
    %91 = arith.mulf %87, %86 : vector<16x32xf32>
    %92 = arith.addf %90, %91 : vector<16x32xf32>
    %93 = math.tanh %92 : vector<16x32xf32>
    %94 = arith.mulf %89, %93 : vector<16x32xf32>
    %95 = vector.extract_strided_slice %94 {offsets = [0, 0], sizes = [8, 32], strides = [1, 1]} : vector<16x32xf32> to vector<8x32xf32>
    %c16_35 = arith.constant 16 : index
    %c0_36 = arith.constant 0 : index
    %96 = vector.load %arg4[%c16_35, %c0_36] : memref<64x32xf32, #tpu.memory_space<vmem>>, vector<8x32xf32>
    tpu.vector_store %arg4[%c16_35, %c0_36], %95 {strides = array<i32>} : memref<64x32xf32, #tpu.memory_space<vmem>>, vector<8x32xf32>,
    %97 = vector.extract_strided_slice %94 {offsets = [8, 0], sizes = [8, 32], strides = [1, 1]} : vector<16x32xf32> to vector<8x32xf32>
    %c40_37 = arith.constant 40 : index
    %c0_38 = arith.constant 0 : index
    %98 = vector.load %arg5[%c40_37, %c0_38] : memref<64x32xf32, #tpu.memory_space<vmem>>, vector<8x32xf32>
    tpu.vector_store %arg5[%c40_37, %c0_38], %97 {strides = array<i32>} : memref<64x32xf32, #tpu.memory_space<vmem>>, vector<8x32xf32>,
    %c24 = arith.constant 24 : index
    %c0_39 = arith.constant 0 : index
    %99 = vector.load %arg3[%c24, %c0_39] : memref<64x256xf32, #tpu.memory_space<vmem>>, vector<8x128xf32>
    %c32 = arith.constant 32 : index
    %c128_40 = arith.constant 128 : index
    %100 = vector.load %arg3[%c32, %c128_40] : memref<64x256xf32, #tpu.memory_space<vmem>>, vector<8x128xf32>
    %101 = tpu.concatenate %99, %100 in 0 : vector<8x128xf32>, vector<8x128xf32> -> vector<16x128xf32>
    %c16_41 = arith.constant 16 : index
    %c0_42 = arith.constant 0 : index
    %102 = vector.load %arg1[%c16_41, %c0_42] : memref<232x256xf32, #tpu.memory_space<vmem>>, vector<32x256xf32>
    %cst_43 = arith.constant dense<0.000000e+00> : vector<16x256xf32>
    %103 = tpu.matmul %94, %102, %cst_43 {dimension_numbers = #tpu.dot_dimension_numbers<[1], [0], [0], [1], [0, 0, 1, 1], [], []>} : vector<16x32xf32>, vector<32x256xf32>, vector<16x256xf32> -> vector<16x256xf32>
    %104 = vector.extract_strided_slice %103 {offsets = [0, 0], sizes = [16, 128], strides = [1, 1]} : vector<16x256xf32> to vector<16x128xf32>
    %105 = vector.extract_strided_slice %103 {offsets = [0, 128], sizes = [16, 128], strides = [1, 1]} : vector<16x256xf32> to vector<16x128xf32>
    %106 = arith.select %2, %104, %105 : vector<16x128xi1>, vector<16x128xf32>
    %107 = arith.addf %101, %106 : vector<16x128xf32>
    %108 = vector.extract_strided_slice %107 {offsets = [0, 0], sizes = [16, 96], strides = [1, 1]} : vector<16x128xf32> to vector<16x96xf32>
    %109 = arith.negf %108 : vector<16x96xf32>
    %110 = math.exp %109 : vector<16x96xf32>
    %cst_44 = arith.constant 1.000000e+00 : f32
    %111 = vector.broadcast %cst_44 : f32 to vector<16x96xf32>
    %112 = arith.addf %111, %110 : vector<16x96xf32>
    %113 = arith.divf %111, %112 : vector<16x96xf32>
    %114 = vector.extract_strided_slice %107 {offsets = [0, 96], sizes = [16, 32], strides = [1, 1]} : vector<16x128xf32> to vector<16x32xf32>
    %115 = math.tanh %114 : vector<16x32xf32>
    %116 = vector.extract_strided_slice %113 {offsets = [0, 0], sizes = [16, 32], strides = [1, 1]} : vector<16x96xf32> to vector<16x32xf32>
    %117 = vector.extract_strided_slice %113 {offsets = [0, 32], sizes = [16, 32], strides = [1, 1]} : vector<16x96xf32> to vector<16x32xf32>
    %118 = vector.extract_strided_slice %113 {offsets = [0, 64], sizes = [16, 32], strides = [1, 1]} : vector<16x96xf32> to vector<16x32xf32>
    %119 = arith.mulf %117, %92 : vector<16x32xf32>
    %120 = arith.mulf %116, %115 : vector<16x32xf32>
    %121 = arith.addf %119, %120 : vector<16x32xf32>
    %122 = math.tanh %121 : vector<16x32xf32>
    %123 = arith.mulf %118, %122 : vector<16x32xf32>
    %124 = vector.extract_strided_slice %123 {offsets = [0, 0], sizes = [8, 32], strides = [1, 1]} : vector<16x32xf32> to vector<8x32xf32>
    %c24_45 = arith.constant 24 : index
    %c0_46 = arith.constant 0 : index
    %125 = vector.load %arg4[%c24_45, %c0_46] : memref<64x32xf32, #tpu.memory_space<vmem>>, vector<8x32xf32>
    tpu.vector_store %arg4[%c24_45, %c0_46], %124 {strides = array<i32>} : memref<64x32xf32, #tpu.memory_space<vmem>>, vector<8x32xf32>,
    %126 = vector.extract_strided_slice %123 {offsets = [8, 0], sizes = [8, 32], strides = [1, 1]} : vector<16x32xf32> to vector<8x32xf32>
    %c32_47 = arith.constant 32 : index
    %c0_48 = arith.constant 0 : index
    %127 = vector.load %arg5[%c32_47, %c0_48] : memref<64x32xf32, #tpu.memory_space<vmem>>, vector<8x32xf32>
    tpu.vector_store %arg5[%c32_47, %c0_48], %126 {strides = array<i32>} : memref<64x32xf32, #tpu.memory_space<vmem>>, vector<8x32xf32>,
    %c32_49 = arith.constant 32 : index
    %c0_50 = arith.constant 0 : index
    %128 = vector.load %arg3[%c32_49, %c0_50] : memref<64x256xf32, #tpu.memory_space<vmem>>, vector<8x128xf32>
    %c24_51 = arith.constant 24 : index
    %c128_52 = arith.constant 128 : index
    %129 = vector.load %arg3[%c24_51, %c128_52] : memref<64x256xf32, #tpu.memory_space<vmem>>, vector<8x128xf32>
    %130 = tpu.concatenate %128, %129 in 0 : vector<8x128xf32>, vector<8x128xf32> -> vector<16x128xf32>
    %c16_53 = arith.constant 16 : index
    %c0_54 = arith.constant 0 : index
    %131 = vector.load %arg1[%c16_53, %c0_54] : memref<232x256xf32, #tpu.memory_space<vmem>>, vector<32x256xf32>
    %cst_55 = arith.constant dense<0.000000e+00> : vector<16x256xf32>
    %132 = tpu.matmul %123, %131, %cst_55 {dimension_numbers = #tpu.dot_dimension_numbers<[1], [0], [0], [1], [0, 0, 1, 1], [], []>} : vector<16x32xf32>, vector<32x256xf32>, vector<16x256xf32> -> vector<16x256xf32>
    %133 = vector.extract_strided_slice %132 {offsets = [0, 0], sizes = [16, 128], strides = [1, 1]} : vector<16x256xf32> to vector<16x128xf32>
    %134 = vector.extract_strided_slice %132 {offsets = [0, 128], sizes = [16, 128], strides = [1, 1]} : vector<16x256xf32> to vector<16x128xf32>
    %135 = arith.select %2, %133, %134 : vector<16x128xi1>, vector<16x128xf32>
    %136 = arith.addf %130, %135 : vector<16x128xf32>
    %137 = vector.extract_strided_slice %136 {offsets = [0, 0], sizes = [16, 96], strides = [1, 1]} : vector<16x128xf32> to vector<16x96xf32>
    %138 = arith.negf %137 : vector<16x96xf32>
    %139 = math.exp %138 : vector<16x96xf32>
    %cst_56 = arith.constant 1.000000e+00 : f32
    %140 = vector.broadcast %cst_56 : f32 to vector<16x96xf32>
    %141 = arith.addf %140, %139 : vector<16x96xf32>
    %142 = arith.divf %140, %141 : vector<16x96xf32>
    %143 = vector.extract_strided_slice %136 {offsets = [0, 96], sizes = [16, 32], strides = [1, 1]} : vector<16x128xf32> to vector<16x32xf32>
    %144 = math.tanh %143 : vector<16x32xf32>
    %145 = vector.extract_strided_slice %142 {offsets = [0, 0], sizes = [16, 32], strides = [1, 1]} : vector<16x96xf32> to vector<16x32xf32>
    %146 = vector.extract_strided_slice %142 {offsets = [0, 32], sizes = [16, 32], strides = [1, 1]} : vector<16x96xf32> to vector<16x32xf32>
    %147 = vector.extract_strided_slice %142 {offsets = [0, 64], sizes = [16, 32], strides = [1, 1]} : vector<16x96xf32> to vector<16x32xf32>
    %148 = arith.mulf %146, %121 : vector<16x32xf32>
    %149 = arith.mulf %145, %144 : vector<16x32xf32>
    %150 = arith.addf %148, %149 : vector<16x32xf32>
    %151 = math.tanh %150 : vector<16x32xf32>
    %152 = arith.mulf %147, %151 : vector<16x32xf32>
    %153 = vector.extract_strided_slice %152 {offsets = [0, 0], sizes = [8, 32], strides = [1, 1]} : vector<16x32xf32> to vector<8x32xf32>
    %c32_57 = arith.constant 32 : index
    %c0_58 = arith.constant 0 : index
    %154 = vector.load %arg4[%c32_57, %c0_58] : memref<64x32xf32, #tpu.memory_space<vmem>>, vector<8x32xf32>
    tpu.vector_store %arg4[%c32_57, %c0_58], %153 {strides = array<i32>} : memref<64x32xf32, #tpu.memory_space<vmem>>, vector<8x32xf32>,
    %155 = vector.extract_strided_slice %152 {offsets = [8, 0], sizes = [8, 32], strides = [1, 1]} : vector<16x32xf32> to vector<8x32xf32>
    %c24_59 = arith.constant 24 : index
    %c0_60 = arith.constant 0 : index
    %156 = vector.load %arg5[%c24_59, %c0_60] : memref<64x32xf32, #tpu.memory_space<vmem>>, vector<8x32xf32>
    tpu.vector_store %arg5[%c24_59, %c0_60], %155 {strides = array<i32>} : memref<64x32xf32, #tpu.memory_space<vmem>>, vector<8x32xf32>,
    %c40_61 = arith.constant 40 : index
    %c0_62 = arith.constant 0 : index
    %157 = vector.load %arg3[%c40_61, %c0_62] : memref<64x256xf32, #tpu.memory_space<vmem>>, vector<8x128xf32>
    %c16_63 = arith.constant 16 : index
    %c128_64 = arith.constant 128 : index
    %158 = vector.load %arg3[%c16_63, %c128_64] : memref<64x256xf32, #tpu.memory_space<vmem>>, vector<8x128xf32>
    %159 = tpu.concatenate %157, %158 in 0 : vector<8x128xf32>, vector<8x128xf32> -> vector<16x128xf32>
    %c16_65 = arith.constant 16 : index
    %c0_66 = arith.constant 0 : index
    %160 = vector.load %arg1[%c16_65, %c0_66] : memref<232x256xf32, #tpu.memory_space<vmem>>, vector<32x256xf32>
    %cst_67 = arith.constant dense<0.000000e+00> : vector<16x256xf32>
    %161 = tpu.matmul %152, %160, %cst_67 {dimension_numbers = #tpu.dot_dimension_numbers<[1], [0], [0], [1], [0, 0, 1, 1], [], []>} : vector<16x32xf32>, vector<32x256xf32>, vector<16x256xf32> -> vector<16x256xf32>
    %162 = vector.extract_strided_slice %161 {offsets = [0, 0], sizes = [16, 128], strides = [1, 1]} : vector<16x256xf32> to vector<16x128xf32>
    %163 = vector.extract_strided_slice %161 {offsets = [0, 128], sizes = [16, 128], strides = [1, 1]} : vector<16x256xf32> to vector<16x128xf32>
    %164 = arith.select %2, %162, %163 : vector<16x128xi1>, vector<16x128xf32>
    %165 = arith.addf %159, %164 : vector<16x128xf32>
    %166 = vector.extract_strided_slice %165 {offsets = [0, 0], sizes = [16, 96], strides = [1, 1]} : vector<16x128xf32> to vector<16x96xf32>
    %167 = arith.negf %166 : vector<16x96xf32>
    %168 = math.exp %167 : vector<16x96xf32>
    %cst_68 = arith.constant 1.000000e+00 : f32
    %169 = vector.broadcast %cst_68 : f32 to vector<16x96xf32>
    %170 = arith.addf %169, %168 : vector<16x96xf32>
    %171 = arith.divf %169, %170 : vector<16x96xf32>
    %172 = vector.extract_strided_slice %165 {offsets = [0, 96], sizes = [16, 32], strides = [1, 1]} : vector<16x128xf32> to vector<16x32xf32>
    %173 = math.tanh %172 : vector<16x32xf32>
    %174 = vector.extract_strided_slice %171 {offsets = [0, 0], sizes = [16, 32], strides = [1, 1]} : vector<16x96xf32> to vector<16x32xf32>
    %175 = vector.extract_strided_slice %171 {offsets = [0, 32], sizes = [16, 32], strides = [1, 1]} : vector<16x96xf32> to vector<16x32xf32>
    %176 = vector.extract_strided_slice %171 {offsets = [0, 64], sizes = [16, 32], strides = [1, 1]} : vector<16x96xf32> to vector<16x32xf32>
    %177 = arith.mulf %175, %150 : vector<16x32xf32>
    %178 = arith.mulf %174, %173 : vector<16x32xf32>
    %179 = arith.addf %177, %178 : vector<16x32xf32>
    %180 = math.tanh %179 : vector<16x32xf32>
    %181 = arith.mulf %176, %180 : vector<16x32xf32>
    %182 = vector.extract_strided_slice %181 {offsets = [0, 0], sizes = [8, 32], strides = [1, 1]} : vector<16x32xf32> to vector<8x32xf32>
    %c40_69 = arith.constant 40 : index
    %c0_70 = arith.constant 0 : index
    %183 = vector.load %arg4[%c40_69, %c0_70] : memref<64x32xf32, #tpu.memory_space<vmem>>, vector<8x32xf32>
    tpu.vector_store %arg4[%c40_69, %c0_70], %182 {strides = array<i32>} : memref<64x32xf32, #tpu.memory_space<vmem>>, vector<8x32xf32>,
    %184 = vector.extract_strided_slice %181 {offsets = [8, 0], sizes = [8, 32], strides = [1, 1]} : vector<16x32xf32> to vector<8x32xf32>
    %c16_71 = arith.constant 16 : index
    %c0_72 = arith.constant 0 : index
    %185 = vector.load %arg5[%c16_71, %c0_72] : memref<64x32xf32, #tpu.memory_space<vmem>>, vector<8x32xf32>
    tpu.vector_store %arg5[%c16_71, %c0_72], %184 {strides = array<i32>} : memref<64x32xf32, #tpu.memory_space<vmem>>, vector<8x32xf32>,
    %c48_73 = arith.constant 48 : index
    %c0_74 = arith.constant 0 : index
    %186 = vector.load %arg3[%c48_73, %c0_74] : memref<64x256xf32, #tpu.memory_space<vmem>>, vector<8x128xf32>
    %c8_75 = arith.constant 8 : index
    %c128_76 = arith.constant 128 : index
    %187 = vector.load %arg3[%c8_75, %c128_76] : memref<64x256xf32, #tpu.memory_space<vmem>>, vector<8x128xf32>
    %188 = tpu.concatenate %186, %187 in 0 : vector<8x128xf32>, vector<8x128xf32> -> vector<16x128xf32>
    %c16_77 = arith.constant 16 : index
    %c0_78 = arith.constant 0 : index
    %189 = vector.load %arg1[%c16_77, %c0_78] : memref<232x256xf32, #tpu.memory_space<vmem>>, vector<32x256xf32>
    %cst_79 = arith.constant dense<0.000000e+00> : vector<16x256xf32>
    %190 = tpu.matmul %181, %189, %cst_79 {dimension_numbers = #tpu.dot_dimension_numbers<[1], [0], [0], [1], [0, 0, 1, 1], [], []>} : vector<16x32xf32>, vector<32x256xf32>, vector<16x256xf32> -> vector<16x256xf32>
    %191 = vector.extract_strided_slice %190 {offsets = [0, 0], sizes = [16, 128], strides = [1, 1]} : vector<16x256xf32> to vector<16x128xf32>
    %192 = vector.extract_strided_slice %190 {offsets = [0, 128], sizes = [16, 128], strides = [1, 1]} : vector<16x256xf32> to vector<16x128xf32>
    %193 = arith.select %2, %191, %192 : vector<16x128xi1>, vector<16x128xf32>
    %194 = arith.addf %188, %193 : vector<16x128xf32>
    %195 = vector.extract_strided_slice %194 {offsets = [0, 0], sizes = [16, 96], strides = [1, 1]} : vector<16x128xf32> to vector<16x96xf32>
    %196 = arith.negf %195 : vector<16x96xf32>
    %197 = math.exp %196 : vector<16x96xf32>
    %cst_80 = arith.constant 1.000000e+00 : f32
    %198 = vector.broadcast %cst_80 : f32 to vector<16x96xf32>
    %199 = arith.addf %198, %197 : vector<16x96xf32>
    %200 = arith.divf %198, %199 : vector<16x96xf32>
    %201 = vector.extract_strided_slice %194 {offsets = [0, 96], sizes = [16, 32], strides = [1, 1]} : vector<16x128xf32> to vector<16x32xf32>
    %202 = math.tanh %201 : vector<16x32xf32>
    %203 = vector.extract_strided_slice %200 {offsets = [0, 0], sizes = [16, 32], strides = [1, 1]} : vector<16x96xf32> to vector<16x32xf32>
    %204 = vector.extract_strided_slice %200 {offsets = [0, 32], sizes = [16, 32], strides = [1, 1]} : vector<16x96xf32> to vector<16x32xf32>
    %205 = vector.extract_strided_slice %200 {offsets = [0, 64], sizes = [16, 32], strides = [1, 1]} : vector<16x96xf32> to vector<16x32xf32>
    %206 = arith.mulf %204, %179 : vector<16x32xf32>
    %207 = arith.mulf %203, %202 : vector<16x32xf32>
    %208 = arith.addf %206, %207 : vector<16x32xf32>
    %209 = math.tanh %208 : vector<16x32xf32>
    %210 = arith.mulf %205, %209 : vector<16x32xf32>
    %211 = vector.extract_strided_slice %210 {offsets = [0, 0], sizes = [8, 32], strides = [1, 1]} : vector<16x32xf32> to vector<8x32xf32>
    %c48_81 = arith.constant 48 : index
    %c0_82 = arith.constant 0 : index
    %212 = vector.load %arg4[%c48_81, %c0_82] : memref<64x32xf32, #tpu.memory_space<vmem>>, vector<8x32xf32>
    tpu.vector_store %arg4[%c48_81, %c0_82], %211 {strides = array<i32>} : memref<64x32xf32, #tpu.memory_space<vmem>>, vector<8x32xf32>,
    %213 = vector.extract_strided_slice %210 {offsets = [8, 0], sizes = [8, 32], strides = [1, 1]} : vector<16x32xf32> to vector<8x32xf32>
    %c8_83 = arith.constant 8 : index
    %c0_84 = arith.constant 0 : index
    %214 = vector.load %arg5[%c8_83, %c0_84] : memref<64x32xf32, #tpu.memory_space<vmem>>, vector<8x32xf32>
    tpu.vector_store %arg5[%c8_83, %c0_84], %213 {strides = array<i32>} : memref<64x32xf32, #tpu.memory_space<vmem>>, vector<8x32xf32>,
    %c56_85 = arith.constant 56 : index
    %c0_86 = arith.constant 0 : index
    %215 = vector.load %arg3[%c56_85, %c0_86] : memref<64x256xf32, #tpu.memory_space<vmem>>, vector<8x128xf32>
    %c0_87 = arith.constant 0 : index
    %c128_88 = arith.constant 128 : index
    %216 = vector.load %arg3[%c0_87, %c128_88] : memref<64x256xf32, #tpu.memory_space<vmem>>, vector<8x128xf32>
    %217 = tpu.concatenate %215, %216 in 0 : vector<8x128xf32>, vector<8x128xf32> -> vector<16x128xf32>
    %c16_89 = arith.constant 16 : index
    %c0_90 = arith.constant 0 : index
    %218 = vector.load %arg1[%c16_89, %c0_90] : memref<232x256xf32, #tpu.memory_space<vmem>>, vector<32x256xf32>
    %cst_91 = arith.constant dense<0.000000e+00> : vector<16x256xf32>
    %219 = tpu.matmul %210, %218, %cst_91 {dimension_numbers = #tpu.dot_dimension_numbers<[1], [0], [0], [1], [0, 0, 1, 1], [], []>} : vector<16x32xf32>, vector<32x256xf32>, vector<16x256xf32> -> vector<16x256xf32>
    %220 = vector.extract_strided_slice %219 {offsets = [0, 0], sizes = [16, 128], strides = [1, 1]} : vector<16x256xf32> to vector<16x128xf32>
    %221 = vector.extract_strided_slice %219 {offsets = [0, 128], sizes = [16, 128], strides = [1, 1]} : vector<16x256xf32> to vector<16x128xf32>
    %222 = arith.select %2, %220, %221 : vector<16x128xi1>, vector<16x128xf32>
    %223 = arith.addf %217, %222 : vector<16x128xf32>
    %224 = vector.extract_strided_slice %223 {offsets = [0, 0], sizes = [16, 96], strides = [1, 1]} : vector<16x128xf32> to vector<16x96xf32>
    %225 = arith.negf %224 : vector<16x96xf32>
    %226 = math.exp %225 : vector<16x96xf32>
    %cst_92 = arith.constant 1.000000e+00 : f32
    %227 = vector.broadcast %cst_92 : f32 to vector<16x96xf32>
    %228 = arith.addf %227, %226 : vector<16x96xf32>
    %229 = arith.divf %227, %228 : vector<16x96xf32>
    %230 = vector.extract_strided_slice %223 {offsets = [0, 96], sizes = [16, 32], strides = [1, 1]} : vector<16x128xf32> to vector<16x32xf32>
    %231 = math.tanh %230 : vector<16x32xf32>
    %232 = vector.extract_strided_slice %229 {offsets = [0, 0], sizes = [16, 32], strides = [1, 1]} : vector<16x96xf32> to vector<16x32xf32>
    %233 = vector.extract_strided_slice %229 {offsets = [0, 32], sizes = [16, 32], strides = [1, 1]} : vector<16x96xf32> to vector<16x32xf32>
    %234 = vector.extract_strided_slice %229 {offsets = [0, 64], sizes = [16, 32], strides = [1, 1]} : vector<16x96xf32> to vector<16x32xf32>
    %235 = arith.mulf %233, %208 : vector<16x32xf32>
    %236 = arith.mulf %232, %231 : vector<16x32xf32>
    %237 = arith.addf %235, %236 : vector<16x32xf32>
    %238 = math.tanh %237 : vector<16x32xf32>
    %239 = arith.mulf %234, %238 : vector<16x32xf32>
    %240 = vector.extract_strided_slice %239 {offsets = [0, 0], sizes = [8, 32], strides = [1, 1]} : vector<16x32xf32> to vector<8x32xf32>
    %c56_93 = arith.constant 56 : index
    %c0_94 = arith.constant 0 : index
    %241 = vector.load %arg4[%c56_93, %c0_94] : memref<64x32xf32, #tpu.memory_space<vmem>>, vector<8x32xf32>
    tpu.vector_store %arg4[%c56_93, %c0_94], %240 {strides = array<i32>} : memref<64x32xf32, #tpu.memory_space<vmem>>, vector<8x32xf32>,
    %242 = vector.extract_strided_slice %239 {offsets = [8, 0], sizes = [8, 32], strides = [1, 1]} : vector<16x32xf32> to vector<8x32xf32>
    %c0_95 = arith.constant 0 : index
    %c0_96 = arith.constant 0 : index
    %243 = vector.load %arg5[%c0_95, %c0_96] : memref<64x32xf32, #tpu.memory_space<vmem>>, vector<8x32xf32>
    tpu.vector_store %arg5[%c0_95, %c0_96], %242 {strides = array<i32>} : memref<64x32xf32, #tpu.memory_space<vmem>>, vector<8x32xf32>,
    %c0_97 = arith.constant 0 : index
    %c0_98 = arith.constant 0 : index
    %244 = vector.load %arg4[%c0_97, %c0_98] : memref<64x32xf32, #tpu.memory_space<vmem>>, vector<64x32xf32>
    %c56_99 = arith.constant 56 : index
    %c0_100 = arith.constant 0 : index
    %245 = vector.load %arg1[%c56_99, %c0_100] : memref<232x256xf32, #tpu.memory_space<vmem>>, vector<32x256xf32>
    %cst_101 = arith.constant dense<0.000000e+00> : vector<64x256xf32>
    %246 = tpu.matmul %244, %245, %cst_101 {dimension_numbers = #tpu.dot_dimension_numbers<[1], [0], [0], [1], [0, 0, 1, 1], [], []>} : vector<64x32xf32>, vector<32x256xf32>, vector<64x256xf32> -> vector<64x256xf32>
    %c0_102 = arith.constant 0 : index
    %c0_103 = arith.constant 0 : index
    %247 = vector.load %arg5[%c0_102, %c0_103] : memref<64x32xf32, #tpu.memory_space<vmem>>, vector<64x32xf32>
    %c88 = arith.constant 88 : index
    %c0_104 = arith.constant 0 : index
    %248 = vector.load %arg1[%c88, %c0_104] : memref<232x256xf32, #tpu.memory_space<vmem>>, vector<32x256xf32>
    %cst_105 = arith.constant dense<0.000000e+00> : vector<64x256xf32>
    %249 = tpu.matmul %247, %248, %cst_105 {dimension_numbers = #tpu.dot_dimension_numbers<[1], [0], [0], [1], [0, 0, 1, 1], [], []>} : vector<64x32xf32>, vector<32x256xf32>, vector<64x256xf32> -> vector<64x256xf32>
    %250 = arith.addf %246, %249 : vector<64x256xf32>
    %c152 = arith.constant 152 : index
    %c0_106 = arith.constant 0 : index
    %251 = vector.load %arg1[%c152, %c0_106] : memref<232x256xf32, #tpu.memory_space<vmem>>, vector<1x256xf32>
    %252 = vector.broadcast %251 : vector<1x256xf32> to vector<64x256xf32>
    %253 = arith.addf %250, %252 : vector<64x256xf32>
    %c0_107 = arith.constant 0 : index
    %c0_108 = arith.constant 0 : index
    %254 = vector.load %arg3[%c0_107, %c0_108] : memref<64x256xf32, #tpu.memory_space<vmem>>, vector<64x256xf32>
    tpu.vector_store %arg3[%c0_107, %c0_108], %253 {strides = array<i32>} : memref<64x256xf32, #tpu.memory_space<vmem>>, vector<64x256xf32>,
    %cst_109 = arith.constant 0.000000e+00 : f32
    %255 = vector.broadcast %cst_109 : f32 to vector<16x32xf32>
    %cst_110 = arith.constant 0.000000e+00 : f32
    %256 = vector.broadcast %cst_110 : f32 to vector<16x32xf32>
    %cst_111 = arith.constant 0.000000e+00 : f32
    %257 = vector.broadcast %cst_111 : f32 to vector<16x32xf32>
    %c0_112 = arith.constant 0 : index
    %c0_113 = arith.constant 0 : index
    %258 = vector.load %arg3[%c0_112, %c0_113] : memref<64x256xf32, #tpu.memory_space<vmem>>, vector<8x128xf32>
    %c56_114 = arith.constant 56 : index
    %c128_115 = arith.constant 128 : index
    %259 = vector.load %arg3[%c56_114, %c128_115] : memref<64x256xf32, #tpu.memory_space<vmem>>, vector<8x128xf32>
    %260 = tpu.concatenate %258, %259 in 0 : vector<8x128xf32>, vector<8x128xf32> -> vector<16x128xf32>
    %c120 = arith.constant 120 : index
    %c0_116 = arith.constant 0 : index
    %261 = vector.load %arg1[%c120, %c0_116] : memref<232x256xf32, #tpu.memory_space<vmem>>, vector<32x256xf32>
    %cst_117 = arith.constant dense<0.000000e+00> : vector<16x256xf32>
    %262 = tpu.matmul %255, %261, %cst_117 {dimension_numbers = #tpu.dot_dimension_numbers<[1], [0], [0], [1], [0, 0, 1, 1], [], []>} : vector<16x32xf32>, vector<32x256xf32>, vector<16x256xf32> -> vector<16x256xf32>
    %263 = vector.extract_strided_slice %262 {offsets = [0, 0], sizes = [16, 128], strides = [1, 1]} : vector<16x256xf32> to vector<16x128xf32>
    %264 = vector.extract_strided_slice %262 {offsets = [0, 128], sizes = [16, 128], strides = [1, 1]} : vector<16x256xf32> to vector<16x128xf32>
    %265 = arith.select %2, %263, %264 : vector<16x128xi1>, vector<16x128xf32>
    %266 = arith.addf %260, %265 : vector<16x128xf32>
    %267 = vector.extract_strided_slice %266 {offsets = [0, 0], sizes = [16, 96], strides = [1, 1]} : vector<16x128xf32> to vector<16x96xf32>
    %268 = arith.negf %267 : vector<16x96xf32>
    %269 = math.exp %268 : vector<16x96xf32>
    %cst_118 = arith.constant 1.000000e+00 : f32
    %270 = vector.broadcast %cst_118 : f32 to vector<16x96xf32>
    %271 = arith.addf %270, %269 : vector<16x96xf32>
    %272 = arith.divf %270, %271 : vector<16x96xf32>
    %273 = vector.extract_strided_slice %266 {offsets = [0, 96], sizes = [16, 32], strides = [1, 1]} : vector<16x128xf32> to vector<16x32xf32>
    %274 = math.tanh %273 : vector<16x32xf32>
    %275 = vector.extract_strided_slice %272 {offsets = [0, 0], sizes = [16, 32], strides = [1, 1]} : vector<16x96xf32> to vector<16x32xf32>
    %276 = vector.extract_strided_slice %272 {offsets = [0, 32], sizes = [16, 32], strides = [1, 1]} : vector<16x96xf32> to vector<16x32xf32>
    %277 = vector.extract_strided_slice %272 {offsets = [0, 64], sizes = [16, 32], strides = [1, 1]} : vector<16x96xf32> to vector<16x32xf32>
    %278 = arith.mulf %276, %256 : vector<16x32xf32>
    %279 = arith.mulf %275, %274 : vector<16x32xf32>
    %280 = arith.addf %278, %279 : vector<16x32xf32>
    %281 = math.tanh %280 : vector<16x32xf32>
    %282 = arith.mulf %277, %281 : vector<16x32xf32>
    %283 = arith.addf %257, %282 : vector<16x32xf32>
    %c8_119 = arith.constant 8 : index
    %c0_120 = arith.constant 0 : index
    %284 = vector.load %arg3[%c8_119, %c0_120] : memref<64x256xf32, #tpu.memory_space<vmem>>, vector<8x128xf32>
    %c48_121 = arith.constant 48 : index
    %c128_122 = arith.constant 128 : index
    %285 = vector.load %arg3[%c48_121, %c128_122] : memref<64x256xf32, #tpu.memory_space<vmem>>, vector<8x128xf32>
    %286 = tpu.concatenate %284, %285 in 0 : vector<8x128xf32>, vector<8x128xf32> -> vector<16x128xf32>
    %c120_123 = arith.constant 120 : index
    %c0_124 = arith.constant 0 : index
    %287 = vector.load %arg1[%c120_123, %c0_124] : memref<232x256xf32, #tpu.memory_space<vmem>>, vector<32x256xf32>
    %cst_125 = arith.constant dense<0.000000e+00> : vector<16x256xf32>
    %288 = tpu.matmul %282, %287, %cst_125 {dimension_numbers = #tpu.dot_dimension_numbers<[1], [0], [0], [1], [0, 0, 1, 1], [], []>} : vector<16x32xf32>, vector<32x256xf32>, vector<16x256xf32> -> vector<16x256xf32>
    %289 = vector.extract_strided_slice %288 {offsets = [0, 0], sizes = [16, 128], strides = [1, 1]} : vector<16x256xf32> to vector<16x128xf32>
    %290 = vector.extract_strided_slice %288 {offsets = [0, 128], sizes = [16, 128], strides = [1, 1]} : vector<16x256xf32> to vector<16x128xf32>
    %291 = arith.select %2, %289, %290 : vector<16x128xi1>, vector<16x128xf32>
    %292 = arith.addf %286, %291 : vector<16x128xf32>
    %293 = vector.extract_strided_slice %292 {offsets = [0, 0], sizes = [16, 96], strides = [1, 1]} : vector<16x128xf32> to vector<16x96xf32>
    %294 = arith.negf %293 : vector<16x96xf32>
    %295 = math.exp %294 : vector<16x96xf32>
    %cst_126 = arith.constant 1.000000e+00 : f32
    %296 = vector.broadcast %cst_126 : f32 to vector<16x96xf32>
    %297 = arith.addf %296, %295 : vector<16x96xf32>
    %298 = arith.divf %296, %297 : vector<16x96xf32>
    %299 = vector.extract_strided_slice %292 {offsets = [0, 96], sizes = [16, 32], strides = [1, 1]} : vector<16x128xf32> to vector<16x32xf32>
    %300 = math.tanh %299 : vector<16x32xf32>
    %301 = vector.extract_strided_slice %298 {offsets = [0, 0], sizes = [16, 32], strides = [1, 1]} : vector<16x96xf32> to vector<16x32xf32>
    %302 = vector.extract_strided_slice %298 {offsets = [0, 32], sizes = [16, 32], strides = [1, 1]} : vector<16x96xf32> to vector<16x32xf32>
    %303 = vector.extract_strided_slice %298 {offsets = [0, 64], sizes = [16, 32], strides = [1, 1]} : vector<16x96xf32> to vector<16x32xf32>
    %304 = arith.mulf %302, %280 : vector<16x32xf32>
    %305 = arith.mulf %301, %300 : vector<16x32xf32>
    %306 = arith.addf %304, %305 : vector<16x32xf32>
    %307 = math.tanh %306 : vector<16x32xf32>
    %308 = arith.mulf %303, %307 : vector<16x32xf32>
    %309 = arith.addf %283, %308 : vector<16x32xf32>
    %c16_127 = arith.constant 16 : index
    %c0_128 = arith.constant 0 : index
    %310 = vector.load %arg3[%c16_127, %c0_128] : memref<64x256xf32, #tpu.memory_space<vmem>>, vector<8x128xf32>
    %c40_129 = arith.constant 40 : index
    %c128_130 = arith.constant 128 : index
    %311 = vector.load %arg3[%c40_129, %c128_130] : memref<64x256xf32, #tpu.memory_space<vmem>>, vector<8x128xf32>
    %312 = tpu.concatenate %310, %311 in 0 : vector<8x128xf32>, vector<8x128xf32> -> vector<16x128xf32>
    %c120_131 = arith.constant 120 : index
    %c0_132 = arith.constant 0 : index
    %313 = vector.load %arg1[%c120_131, %c0_132] : memref<232x256xf32, #tpu.memory_space<vmem>>, vector<32x256xf32>
    %cst_133 = arith.constant dense<0.000000e+00> : vector<16x256xf32>
    %314 = tpu.matmul %308, %313, %cst_133 {dimension_numbers = #tpu.dot_dimension_numbers<[1], [0], [0], [1], [0, 0, 1, 1], [], []>} : vector<16x32xf32>, vector<32x256xf32>, vector<16x256xf32> -> vector<16x256xf32>
    %315 = vector.extract_strided_slice %314 {offsets = [0, 0], sizes = [16, 128], strides = [1, 1]} : vector<16x256xf32> to vector<16x128xf32>
    %316 = vector.extract_strided_slice %314 {offsets = [0, 128], sizes = [16, 128], strides = [1, 1]} : vector<16x256xf32> to vector<16x128xf32>
    %317 = arith.select %2, %315, %316 : vector<16x128xi1>, vector<16x128xf32>
    %318 = arith.addf %312, %317 : vector<16x128xf32>
    %319 = vector.extract_strided_slice %318 {offsets = [0, 0], sizes = [16, 96], strides = [1, 1]} : vector<16x128xf32> to vector<16x96xf32>
    %320 = arith.negf %319 : vector<16x96xf32>
    %321 = math.exp %320 : vector<16x96xf32>
    %cst_134 = arith.constant 1.000000e+00 : f32
    %322 = vector.broadcast %cst_134 : f32 to vector<16x96xf32>
    %323 = arith.addf %322, %321 : vector<16x96xf32>
    %324 = arith.divf %322, %323 : vector<16x96xf32>
    %325 = vector.extract_strided_slice %318 {offsets = [0, 96], sizes = [16, 32], strides = [1, 1]} : vector<16x128xf32> to vector<16x32xf32>
    %326 = math.tanh %325 : vector<16x32xf32>
    %327 = vector.extract_strided_slice %324 {offsets = [0, 0], sizes = [16, 32], strides = [1, 1]} : vector<16x96xf32> to vector<16x32xf32>
    %328 = vector.extract_strided_slice %324 {offsets = [0, 32], sizes = [16, 32], strides = [1, 1]} : vector<16x96xf32> to vector<16x32xf32>
    %329 = vector.extract_strided_slice %324 {offsets = [0, 64], sizes = [16, 32], strides = [1, 1]} : vector<16x96xf32> to vector<16x32xf32>
    %330 = arith.mulf %328, %306 : vector<16x32xf32>
    %331 = arith.mulf %327, %326 : vector<16x32xf32>
    %332 = arith.addf %330, %331 : vector<16x32xf32>
    %333 = math.tanh %332 : vector<16x32xf32>
    %334 = arith.mulf %329, %333 : vector<16x32xf32>
    %335 = arith.addf %309, %334 : vector<16x32xf32>
    %c24_135 = arith.constant 24 : index
    %c0_136 = arith.constant 0 : index
    %336 = vector.load %arg3[%c24_135, %c0_136] : memref<64x256xf32, #tpu.memory_space<vmem>>, vector<8x128xf32>
    %c32_137 = arith.constant 32 : index
    %c128_138 = arith.constant 128 : index
    %337 = vector.load %arg3[%c32_137, %c128_138] : memref<64x256xf32, #tpu.memory_space<vmem>>, vector<8x128xf32>
    %338 = tpu.concatenate %336, %337 in 0 : vector<8x128xf32>, vector<8x128xf32> -> vector<16x128xf32>
    %c120_139 = arith.constant 120 : index
    %c0_140 = arith.constant 0 : index
    %339 = vector.load %arg1[%c120_139, %c0_140] : memref<232x256xf32, #tpu.memory_space<vmem>>, vector<32x256xf32>
    %cst_141 = arith.constant dense<0.000000e+00> : vector<16x256xf32>
    %340 = tpu.matmul %334, %339, %cst_141 {dimension_numbers = #tpu.dot_dimension_numbers<[1], [0], [0], [1], [0, 0, 1, 1], [], []>} : vector<16x32xf32>, vector<32x256xf32>, vector<16x256xf32> -> vector<16x256xf32>
    %341 = vector.extract_strided_slice %340 {offsets = [0, 0], sizes = [16, 128], strides = [1, 1]} : vector<16x256xf32> to vector<16x128xf32>
    %342 = vector.extract_strided_slice %340 {offsets = [0, 128], sizes = [16, 128], strides = [1, 1]} : vector<16x256xf32> to vector<16x128xf32>
    %343 = arith.select %2, %341, %342 : vector<16x128xi1>, vector<16x128xf32>
    %344 = arith.addf %338, %343 : vector<16x128xf32>
    %345 = vector.extract_strided_slice %344 {offsets = [0, 0], sizes = [16, 96], strides = [1, 1]} : vector<16x128xf32> to vector<16x96xf32>
    %346 = arith.negf %345 : vector<16x96xf32>
    %347 = math.exp %346 : vector<16x96xf32>
    %cst_142 = arith.constant 1.000000e+00 : f32
    %348 = vector.broadcast %cst_142 : f32 to vector<16x96xf32>
    %349 = arith.addf %348, %347 : vector<16x96xf32>
    %350 = arith.divf %348, %349 : vector<16x96xf32>
    %351 = vector.extract_strided_slice %344 {offsets = [0, 96], sizes = [16, 32], strides = [1, 1]} : vector<16x128xf32> to vector<16x32xf32>
    %352 = math.tanh %351 : vector<16x32xf32>
    %353 = vector.extract_strided_slice %350 {offsets = [0, 0], sizes = [16, 32], strides = [1, 1]} : vector<16x96xf32> to vector<16x32xf32>
    %354 = vector.extract_strided_slice %350 {offsets = [0, 32], sizes = [16, 32], strides = [1, 1]} : vector<16x96xf32> to vector<16x32xf32>
    %355 = vector.extract_strided_slice %350 {offsets = [0, 64], sizes = [16, 32], strides = [1, 1]} : vector<16x96xf32> to vector<16x32xf32>
    %356 = arith.mulf %354, %332 : vector<16x32xf32>
    %357 = arith.mulf %353, %352 : vector<16x32xf32>
    %358 = arith.addf %356, %357 : vector<16x32xf32>
    %359 = math.tanh %358 : vector<16x32xf32>
    %360 = arith.mulf %355, %359 : vector<16x32xf32>
    %361 = arith.addf %335, %360 : vector<16x32xf32>
    %c32_143 = arith.constant 32 : index
    %c0_144 = arith.constant 0 : index
    %362 = vector.load %arg3[%c32_143, %c0_144] : memref<64x256xf32, #tpu.memory_space<vmem>>, vector<8x128xf32>
    %c24_145 = arith.constant 24 : index
    %c128_146 = arith.constant 128 : index
    %363 = vector.load %arg3[%c24_145, %c128_146] : memref<64x256xf32, #tpu.memory_space<vmem>>, vector<8x128xf32>
    %364 = tpu.concatenate %362, %363 in 0 : vector<8x128xf32>, vector<8x128xf32> -> vector<16x128xf32>
    %c120_147 = arith.constant 120 : index
    %c0_148 = arith.constant 0 : index
    %365 = vector.load %arg1[%c120_147, %c0_148] : memref<232x256xf32, #tpu.memory_space<vmem>>, vector<32x256xf32>
    %cst_149 = arith.constant dense<0.000000e+00> : vector<16x256xf32>
    %366 = tpu.matmul %360, %365, %cst_149 {dimension_numbers = #tpu.dot_dimension_numbers<[1], [0], [0], [1], [0, 0, 1, 1], [], []>} : vector<16x32xf32>, vector<32x256xf32>, vector<16x256xf32> -> vector<16x256xf32>
    %367 = vector.extract_strided_slice %366 {offsets = [0, 0], sizes = [16, 128], strides = [1, 1]} : vector<16x256xf32> to vector<16x128xf32>
    %368 = vector.extract_strided_slice %366 {offsets = [0, 128], sizes = [16, 128], strides = [1, 1]} : vector<16x256xf32> to vector<16x128xf32>
    %369 = arith.select %2, %367, %368 : vector<16x128xi1>, vector<16x128xf32>
    %370 = arith.addf %364, %369 : vector<16x128xf32>
    %371 = vector.extract_strided_slice %370 {offsets = [0, 0], sizes = [16, 96], strides = [1, 1]} : vector<16x128xf32> to vector<16x96xf32>
    %372 = arith.negf %371 : vector<16x96xf32>
    %373 = math.exp %372 : vector<16x96xf32>
    %cst_150 = arith.constant 1.000000e+00 : f32
    %374 = vector.broadcast %cst_150 : f32 to vector<16x96xf32>
    %375 = arith.addf %374, %373 : vector<16x96xf32>
    %376 = arith.divf %374, %375 : vector<16x96xf32>
    %377 = vector.extract_strided_slice %370 {offsets = [0, 96], sizes = [16, 32], strides = [1, 1]} : vector<16x128xf32> to vector<16x32xf32>
    %378 = math.tanh %377 : vector<16x32xf32>
    %379 = vector.extract_strided_slice %376 {offsets = [0, 0], sizes = [16, 32], strides = [1, 1]} : vector<16x96xf32> to vector<16x32xf32>
    %380 = vector.extract_strided_slice %376 {offsets = [0, 32], sizes = [16, 32], strides = [1, 1]} : vector<16x96xf32> to vector<16x32xf32>
    %381 = vector.extract_strided_slice %376 {offsets = [0, 64], sizes = [16, 32], strides = [1, 1]} : vector<16x96xf32> to vector<16x32xf32>
    %382 = arith.mulf %380, %358 : vector<16x32xf32>
    %383 = arith.mulf %379, %378 : vector<16x32xf32>
    %384 = arith.addf %382, %383 : vector<16x32xf32>
    %385 = math.tanh %384 : vector<16x32xf32>
    %386 = arith.mulf %381, %385 : vector<16x32xf32>
    %387 = arith.addf %361, %386 : vector<16x32xf32>
    %c40_151 = arith.constant 40 : index
    %c0_152 = arith.constant 0 : index
    %388 = vector.load %arg3[%c40_151, %c0_152] : memref<64x256xf32, #tpu.memory_space<vmem>>, vector<8x128xf32>
    %c16_153 = arith.constant 16 : index
    %c128_154 = arith.constant 128 : index
    %389 = vector.load %arg3[%c16_153, %c128_154] : memref<64x256xf32, #tpu.memory_space<vmem>>, vector<8x128xf32>
    %390 = tpu.concatenate %388, %389 in 0 : vector<8x128xf32>, vector<8x128xf32> -> vector<16x128xf32>
    %c120_155 = arith.constant 120 : index
    %c0_156 = arith.constant 0 : index
    %391 = vector.load %arg1[%c120_155, %c0_156] : memref<232x256xf32, #tpu.memory_space<vmem>>, vector<32x256xf32>
    %cst_157 = arith.constant dense<0.000000e+00> : vector<16x256xf32>
    %392 = tpu.matmul %386, %391, %cst_157 {dimension_numbers = #tpu.dot_dimension_numbers<[1], [0], [0], [1], [0, 0, 1, 1], [], []>} : vector<16x32xf32>, vector<32x256xf32>, vector<16x256xf32> -> vector<16x256xf32>
    %393 = vector.extract_strided_slice %392 {offsets = [0, 0], sizes = [16, 128], strides = [1, 1]} : vector<16x256xf32> to vector<16x128xf32>
    %394 = vector.extract_strided_slice %392 {offsets = [0, 128], sizes = [16, 128], strides = [1, 1]} : vector<16x256xf32> to vector<16x128xf32>
    %395 = arith.select %2, %393, %394 : vector<16x128xi1>, vector<16x128xf32>
    %396 = arith.addf %390, %395 : vector<16x128xf32>
    %397 = vector.extract_strided_slice %396 {offsets = [0, 0], sizes = [16, 96], strides = [1, 1]} : vector<16x128xf32> to vector<16x96xf32>
    %398 = arith.negf %397 : vector<16x96xf32>
    %399 = math.exp %398 : vector<16x96xf32>
    %cst_158 = arith.constant 1.000000e+00 : f32
    %400 = vector.broadcast %cst_158 : f32 to vector<16x96xf32>
    %401 = arith.addf %400, %399 : vector<16x96xf32>
    %402 = arith.divf %400, %401 : vector<16x96xf32>
    %403 = vector.extract_strided_slice %396 {offsets = [0, 96], sizes = [16, 32], strides = [1, 1]} : vector<16x128xf32> to vector<16x32xf32>
    %404 = math.tanh %403 : vector<16x32xf32>
    %405 = vector.extract_strided_slice %402 {offsets = [0, 0], sizes = [16, 32], strides = [1, 1]} : vector<16x96xf32> to vector<16x32xf32>
    %406 = vector.extract_strided_slice %402 {offsets = [0, 32], sizes = [16, 32], strides = [1, 1]} : vector<16x96xf32> to vector<16x32xf32>
    %407 = vector.extract_strided_slice %402 {offsets = [0, 64], sizes = [16, 32], strides = [1, 1]} : vector<16x96xf32> to vector<16x32xf32>
    %408 = arith.mulf %406, %384 : vector<16x32xf32>
    %409 = arith.mulf %405, %404 : vector<16x32xf32>
    %410 = arith.addf %408, %409 : vector<16x32xf32>
    %411 = math.tanh %410 : vector<16x32xf32>
    %412 = arith.mulf %407, %411 : vector<16x32xf32>
    %413 = arith.addf %387, %412 : vector<16x32xf32>
    %c48_159 = arith.constant 48 : index
    %c0_160 = arith.constant 0 : index
    %414 = vector.load %arg3[%c48_159, %c0_160] : memref<64x256xf32, #tpu.memory_space<vmem>>, vector<8x128xf32>
    %c8_161 = arith.constant 8 : index
    %c128_162 = arith.constant 128 : index
    %415 = vector.load %arg3[%c8_161, %c128_162] : memref<64x256xf32, #tpu.memory_space<vmem>>, vector<8x128xf32>
    %416 = tpu.concatenate %414, %415 in 0 : vector<8x128xf32>, vector<8x128xf32> -> vector<16x128xf32>
    %c120_163 = arith.constant 120 : index
    %c0_164 = arith.constant 0 : index
    %417 = vector.load %arg1[%c120_163, %c0_164] : memref<232x256xf32, #tpu.memory_space<vmem>>, vector<32x256xf32>
    %cst_165 = arith.constant dense<0.000000e+00> : vector<16x256xf32>
    %418 = tpu.matmul %412, %417, %cst_165 {dimension_numbers = #tpu.dot_dimension_numbers<[1], [0], [0], [1], [0, 0, 1, 1], [], []>} : vector<16x32xf32>, vector<32x256xf32>, vector<16x256xf32> -> vector<16x256xf32>
    %419 = vector.extract_strided_slice %418 {offsets = [0, 0], sizes = [16, 128], strides = [1, 1]} : vector<16x256xf32> to vector<16x128xf32>
    %420 = vector.extract_strided_slice %418 {offsets = [0, 128], sizes = [16, 128], strides = [1, 1]} : vector<16x256xf32> to vector<16x128xf32>
    %421 = arith.select %2, %419, %420 : vector<16x128xi1>, vector<16x128xf32>
    %422 = arith.addf %416, %421 : vector<16x128xf32>
    %423 = vector.extract_strided_slice %422 {offsets = [0, 0], sizes = [16, 96], strides = [1, 1]} : vector<16x128xf32> to vector<16x96xf32>
    %424 = arith.negf %423 : vector<16x96xf32>
    %425 = math.exp %424 : vector<16x96xf32>
    %cst_166 = arith.constant 1.000000e+00 : f32
    %426 = vector.broadcast %cst_166 : f32 to vector<16x96xf32>
    %427 = arith.addf %426, %425 : vector<16x96xf32>
    %428 = arith.divf %426, %427 : vector<16x96xf32>
    %429 = vector.extract_strided_slice %422 {offsets = [0, 96], sizes = [16, 32], strides = [1, 1]} : vector<16x128xf32> to vector<16x32xf32>
    %430 = math.tanh %429 : vector<16x32xf32>
    %431 = vector.extract_strided_slice %428 {offsets = [0, 0], sizes = [16, 32], strides = [1, 1]} : vector<16x96xf32> to vector<16x32xf32>
    %432 = vector.extract_strided_slice %428 {offsets = [0, 32], sizes = [16, 32], strides = [1, 1]} : vector<16x96xf32> to vector<16x32xf32>
    %433 = vector.extract_strided_slice %428 {offsets = [0, 64], sizes = [16, 32], strides = [1, 1]} : vector<16x96xf32> to vector<16x32xf32>
    %434 = arith.mulf %432, %410 : vector<16x32xf32>
    %435 = arith.mulf %431, %430 : vector<16x32xf32>
    %436 = arith.addf %434, %435 : vector<16x32xf32>
    %437 = math.tanh %436 : vector<16x32xf32>
    %438 = arith.mulf %433, %437 : vector<16x32xf32>
    %439 = arith.addf %413, %438 : vector<16x32xf32>
    %c56_167 = arith.constant 56 : index
    %c0_168 = arith.constant 0 : index
    %440 = vector.load %arg3[%c56_167, %c0_168] : memref<64x256xf32, #tpu.memory_space<vmem>>, vector<8x128xf32>
    %c0_169 = arith.constant 0 : index
    %c128_170 = arith.constant 128 : index
    %441 = vector.load %arg3[%c0_169, %c128_170] : memref<64x256xf32, #tpu.memory_space<vmem>>, vector<8x128xf32>
    %442 = tpu.concatenate %440, %441 in 0 : vector<8x128xf32>, vector<8x128xf32> -> vector<16x128xf32>
    %c120_171 = arith.constant 120 : index
    %c0_172 = arith.constant 0 : index
    %443 = vector.load %arg1[%c120_171, %c0_172] : memref<232x256xf32, #tpu.memory_space<vmem>>, vector<32x256xf32>
    %cst_173 = arith.constant dense<0.000000e+00> : vector<16x256xf32>
    %444 = tpu.matmul %438, %443, %cst_173 {dimension_numbers = #tpu.dot_dimension_numbers<[1], [0], [0], [1], [0, 0, 1, 1], [], []>} : vector<16x32xf32>, vector<32x256xf32>, vector<16x256xf32> -> vector<16x256xf32>
    %445 = vector.extract_strided_slice %444 {offsets = [0, 0], sizes = [16, 128], strides = [1, 1]} : vector<16x256xf32> to vector<16x128xf32>
    %446 = vector.extract_strided_slice %444 {offsets = [0, 128], sizes = [16, 128], strides = [1, 1]} : vector<16x256xf32> to vector<16x128xf32>
    %447 = arith.select %2, %445, %446 : vector<16x128xi1>, vector<16x128xf32>
    %448 = arith.addf %442, %447 : vector<16x128xf32>
    %449 = vector.extract_strided_slice %448 {offsets = [0, 0], sizes = [16, 96], strides = [1, 1]} : vector<16x128xf32> to vector<16x96xf32>
    %450 = arith.negf %449 : vector<16x96xf32>
    %451 = math.exp %450 : vector<16x96xf32>
    %cst_174 = arith.constant 1.000000e+00 : f32
    %452 = vector.broadcast %cst_174 : f32 to vector<16x96xf32>
    %453 = arith.addf %452, %451 : vector<16x96xf32>
    %454 = arith.divf %452, %453 : vector<16x96xf32>
    %455 = vector.extract_strided_slice %448 {offsets = [0, 96], sizes = [16, 32], strides = [1, 1]} : vector<16x128xf32> to vector<16x32xf32>
    %456 = math.tanh %455 : vector<16x32xf32>
    %457 = vector.extract_strided_slice %454 {offsets = [0, 0], sizes = [16, 32], strides = [1, 1]} : vector<16x96xf32> to vector<16x32xf32>
    %458 = vector.extract_strided_slice %454 {offsets = [0, 32], sizes = [16, 32], strides = [1, 1]} : vector<16x96xf32> to vector<16x32xf32>
    %459 = vector.extract_strided_slice %454 {offsets = [0, 64], sizes = [16, 32], strides = [1, 1]} : vector<16x96xf32> to vector<16x32xf32>
    %460 = arith.mulf %458, %436 : vector<16x32xf32>
    %461 = arith.mulf %457, %456 : vector<16x32xf32>
    %462 = arith.addf %460, %461 : vector<16x32xf32>
    %463 = math.tanh %462 : vector<16x32xf32>
    %464 = arith.mulf %459, %463 : vector<16x32xf32>
    %465 = arith.addf %439, %464 : vector<16x32xf32>
    %c160 = arith.constant 160 : index
    %c0_175 = arith.constant 0 : index
    %466 = vector.load %arg1[%c160, %c0_175] : memref<232x256xf32, #tpu.memory_space<vmem>>, vector<32x4xf32>
    %c192 = arith.constant 192 : index
    %c0_176 = arith.constant 0 : index
    %467 = vector.load %arg1[%c192, %c0_176] : memref<232x256xf32, #tpu.memory_space<vmem>>, vector<32x4xf32>
    %c224 = arith.constant 224 : index
    %c0_177 = arith.constant 0 : index
    %468 = vector.load %arg1[%c224, %c0_177] : memref<232x256xf32, #tpu.memory_space<vmem>>, vector<1x4xf32>
    %469 = vector.extract_strided_slice %465 {offsets = [0, 0], sizes = [8, 32], strides = [1, 1]} : vector<16x32xf32> to vector<8x32xf32>
    %cst_178 = arith.constant dense<0.000000e+00> : vector<8x4xf32>
    %470 = tpu.matmul %469, %466, %cst_178 {dimension_numbers = #tpu.dot_dimension_numbers<[1], [0], [0], [1], [0, 0, 1, 1], [], []>} : vector<8x32xf32>, vector<32x4xf32>, vector<8x4xf32> -> vector<8x4xf32>
    %471 = vector.extract_strided_slice %465 {offsets = [8, 0], sizes = [8, 32], strides = [1, 1]} : vector<16x32xf32> to vector<8x32xf32>
    %cst_179 = arith.constant dense<0.000000e+00> : vector<8x4xf32>
    %472 = tpu.matmul %471, %467, %cst_179 {dimension_numbers = #tpu.dot_dimension_numbers<[1], [0], [0], [1], [0, 0, 1, 1], [], []>} : vector<8x32xf32>, vector<32x4xf32>, vector<8x4xf32> -> vector<8x4xf32>
    %473 = arith.addf %470, %472 : vector<8x4xf32>
    %cst_180 = arith.constant 1.250000e-01 : f32
    %474 = vector.broadcast %cst_180 : f32 to vector<8x4xf32>
    %475 = arith.mulf %473, %474 : vector<8x4xf32>
    %476 = vector.broadcast %468 : vector<1x4xf32> to vector<8x4xf32>
    %477 = arith.addf %475, %476 : vector<8x4xf32>
    %c0_181 = arith.constant 0 : index
    %c0_182 = arith.constant 0 : index
    %478 = vector.load %arg2[%c0_181, %c0_182] : memref<8x4xf32, #tpu.memory_space<vmem>>, vector<8x4xf32>
    tpu.vector_store %arg2[%c0_181, %c0_182], %477 {strides = array<i32>} : memref<8x4xf32, #tpu.memory_space<vmem>>, vector<8x4xf32>,
    return
  }
}

</mosaic_0001>

<llo_original>
// kernel: tpu_custom_call.1
$region0: #{tpu_custom_call.1}
  #allocation0 [shape = 'u32[]', space=smem, size = 0x4, offset = 0x4, fixed_abs, tag = 'smem constant byte address 0x4 - core index']
  #allocation1 [shape = 'u32[144,128]{1,0:T(1,128)}', space=vmem, size = 0x12000, scoped, tag = 'internal scratch']
  #allocation2 [shape = 'f32[64,256]{1,0:T(8,128)}', space=vmem, size = 0x10000, scoped, tag = 'scratch operand']
  #allocation3 [shape = 'f32[64,32]{1,0:T(8,128)}', space=vmem, size = 0x8000, scoped, tag = 'scratch operand']
  #allocation4 [shape = 'f32[64,32]{1,0:T(8,128)}', space=vmem, size = 0x8000, scoped, tag = 'scratch operand']
  %s0 = inlined_call_operand.vmem [shape: f32[64,16], index: 0, kind: input, shape index: {}]
  %s1 = inlined_call_operand.hbm [shape: f32[232,256], index: 1, kind: input, shape index: {}]
  %s2 = inlined_call_operand.vmem [shape: f32[8,4], index: 2, kind: output, shape index: {}]
  %s3 = sld [smem:[#allocation0]]
  $region22: #{tpu_custom_call.1} parent=0
    _
  %s5 = ssub.s32 1, %s3
  %s6 = scalar_select 0, %s5, %s3
  $region1: #{tpu_custom_call.1} parent=0
    #allocation5 [shape = 'u8[237568]{0}', space=vmem, size = 0x3a000, scoped, tag = 'input window, operand 1, single buffered']
    #allocation6 [shape = 's32[1]{0}', space=sflag, size = 0x4, scoped, tag = 'scoped memory for tpu_custom_call.1']
    %7 = vsyncpa [#allocation6], 0
    // Predicated region
    $region2: #{tpu_custom_call.1} parent=1 // pred_check
      _
    $region3: #{tpu_custom_call.1} parent=1 // pred_check_branch
      %9 = sbr.rel (0) target = $region5
    $region4: #{tpu_custom_call.1} parent=1 // pred_region
      _
    $region5: #{tpu_custom_call.1} parent=1 // pred_fallthru
      _
    // Predicated region
    $region6: #{tpu_custom_call.1} parent=1 // pred_check
      _
    $region7: #{tpu_custom_call.1} parent=1 // pred_check_branch
      %11 = sbr.rel (0) target = $region9
    $region8: #{tpu_custom_call.1} parent=1 // pred_region
      %s13 = ssub.s32 7424, 7424
      %14 = vsyncadd [#allocation6], %s13
      %s15 = sshll.u32 [#allocation5], 4
      %s16 = int_to_ptr.vmem [resolvable:$true] %s15
      %21 = dma.hbm_to_vmem [thread:$0]  %s1, 7424, %s16, [#allocation6], 256, 256, 16
    $region9: #{tpu_custom_call.1} parent=1 // pred_fallthru
      _
    // Predicated region
    $region10: #{tpu_custom_call.1} parent=1 // pred_check
      _
    $region11: #{tpu_custom_call.1} parent=1 // pred_check_branch
      %23 = sbr.rel (0) target = $region13
    $region12: #{tpu_custom_call.1} parent=1 // pred_region
      %24 = dma.done [#allocation6], 7424
    $region13: #{tpu_custom_call.1} parent=1 // pred_fallthru
      _
    %v25 = vlaneseq
    %v26 = vshrl.u32 %v25, 7
    %v27 = vadd.s32 %v26, 8
    %vm28 = vcmp.lt.s32.totalorder %v26, 8
    %vm29 = vcmp.lt.s32.totalorder %v27, 8
    %v30 = vld [vmem:[%s0] sm:$0xff]
    %v31 = vld [vmem:[%s0 + $0x8] sm:$0xff]
    %v32 = vld [vmem:[%s0 + $0x10] sm:$0xff]
    %v33 = vld [vmem:[%s0 + $0x18] sm:$0xff]
    %v34 = vld [vmem:[%s0 + $0x20] sm:$0xff]
    %v35 = vld [vmem:[%s0 + $0x28] sm:$0xff]
    %v36 = vld [vmem:[%s0 + $0x30] sm:$0xff]
    %v37 = vld [vmem:[%s0 + $0x38] sm:$0xff]
    %v38 = vld [vmem:[#allocation5] sm:$0xff]
    %v39 = vld [vmem:[#allocation5 + $0x8] sm:$0xff]
    %v40 = vld [vmem:[#allocation5 + $0x10] sm:$0xff]
    %v41 = vld [vmem:[#allocation5 + $0x18] sm:$0xff]
    %s42 = scalar_lea.vmem [#allocation5], 96
    %v43 = vld [vmem:[%s42] ss:$8 sm:$0x3]
    %v45 = vlaneseq
    %v46 = vshrl.u32 %v45, 7
    %v47 = vsub.s32 0, %v46
    %v48 = vrot.slane %v43, %v47
    %v49 = vlaneseq
    %v50 = vshrl.u32 %v49, 7
    %v51 = vsub.s32 1, %v50
    %v52 = vrot.slane %v43, %v51
    %vm55 = vcmask 130048
    %v57 = vsel %vm55, %v30, 0
    %v60 = vsel %vm55, %v31, 0
    %v63 = vsel %vm55, %v32, 0
    %v66 = vsel %vm55, %v33, 0
    %v69 = vsel %vm55, %v34, 0
    %v72 = vsel %vm55, %v35, 0
    %v75 = vsel %vm55, %v36, 0
    %v78 = vsel %vm55, %v37, 0
    %80 = vmatprep.subr.mxu0 %v39
    %81 = vmatpush1.msra.mxu0 %v38
    %82 = vmatprep.subr.mxu0 %v41
    %83 = vmatpush1.msra.mxu0 %v40
    %84 = vmatprep.subr.mxu0 0.0
    %85 = vmatpush1.msra.mxu0 0.0
    %86 = vmatprep.subr.mxu0 0.0
    %87 = vmatpush1.msra.mxu0 0.0
    %88 = vmatprep.subr.mxu0 0.0
    %89 = vmatpush1.msra.mxu0 0.0
    %90 = vmatprep.subr.mxu0 0.0
    %91 = vmatpush1.msra.mxu0 0.0
    %92 = vmatprep.subr.mxu0 0.0
    %93 = vmatpush1.msra.mxu0 0.0
    %94 = vmatprep.subr.mxu0 0.0
    %95 = vmatpush1.msra.mxu0 0.0
    %96 = vmatprep.subr.mxu0 0.0
    %97 = vmatpush1.msra.mxu0 0.0
    %98 = vmatprep.subr.mxu0 0.0
    %99 = vmatpush1.msra.mxu0 0.0
    %100 = vmatprep.subr.mxu0 0.0
    %101 = vmatpush1.msra.mxu0 0.0
    %102 = vmatprep.subr.mxu0 0.0
    %103 = vmatpush1.msra.mxu0 0.0
    %104 = vmatprep.subr.mxu0 0.0
    %105 = vmatpush1.msra.mxu0 0.0
    %106 = vmatprep.subr.mxu0 0.0
    %107 = vmatpush1.msra.mxu0 0.0
    %108 = vmatprep.subr.mxu0 0.0
    %109 = vmatpush1.msra.mxu0 0.0
    %110 = vmatprep.subr.mxu0 0.0
    %111 = vmatpush1.msra.mxu0 0.0
    %112 = vmatprep.subr.mxu0 0.0
    %113 = vmatpush1.msra.mxu0 0.0
    %114 = vmatprep.subr.mxu0 0.0
    %115 = vmatpush1.msra.mxu0 0.0
    %116 = vmatprep.subr.mxu0 0.0
    %117 = vmatpush1.msra.mxu0 0.0
    %118 = vmatprep.subr.mxu0 0.0
    %119 = vmatpush1.msra.mxu0 0.0
    %120 = vmatprep.subr.mxu0 0.0
    %121 = vmatpush1.msra.mxu0 0.0
    %122 = vmatprep.subr.mxu0 0.0
    %123 = vmatpush1.msra.mxu0 0.0
    %124 = vmatprep.subr.mxu0 0.0
    %125 = vmatpush1.msra.mxu0 0.0
    %126 = vmatprep.subr.mxu0 0.0
    %127 = vmatpush1.msra.mxu0 0.0
    %128 = vmatprep.subr.mxu0 0.0
    %129 = vmatpush1.msra.mxu0 0.0
    %130 = vmatprep.subr.mxu0 0.0
    %131 = vmatpush1.msra.mxu0 0.0
    %132 = vmatprep.subr.mxu0 0.0
    %133 = vmatpush1.msra.mxu0 0.0
    %134 = vmatprep.subr.mxu0 0.0
    %135 = vmatpush1.msra.mxu0 0.0
    %136 = vmatprep.subr.mxu0 0.0
    %137 = vmatpush1.msra.mxu0 0.0
    %138 = vmatprep.subr.mxu0 0.0
    %139 = vmatpush1.msra.mxu0 0.0
    %140 = vmatprep.subr.mxu0 0.0
    %141 = vmatpush1.msra.mxu0 0.0
    %142 = vmatprep.subr.mxu0 0.0
    %143 = vmatpush1.msra.mxu0 0.0
    %144 = vmatprep.mubr.f32.mxu0 0.0
    %145 = vmatmul.mubr.f32.gmra.mrb[0].mxu0 %v57
    %v146 = vpop.f32.mrb[0].mxu0
    %v147 = vadd.f32 %v48, %v146
    %v148 = vpop.f32.mrb[0].mxu0
    %v149 = vadd.f32 %v52, %v148
    %150 = vmatprep.mubr.f32.mxu0 0.0
    %151 = vmatmul.mubr.f32.gmra.mrb[0].mxu0 %v60
    %v152 = vpop.f32.mrb[0].mxu0
    %v153 = vadd.f32 %v48, %v152
    %v154 = vpop.f32.mrb[0].mxu0
    %v155 = vadd.f32 %v52, %v154
    %156 = vmatprep.mubr.f32.mxu0 0.0
    %157 = vmatmul.mubr.f32.gmra.mrb[0].mxu0 %v63
    %v158 = vpop.f32.mrb[0].mxu0
    %v159 = vadd.f32 %v48, %v158
    %v160 = vpop.f32.mrb[0].mxu0
    %v161 = vadd.f32 %v52, %v160
    %162 = vmatprep.mubr.f32.mxu0 0.0
    %163 = vmatmul.mubr.f32.gmra.mrb[0].mxu0 %v66
    %v164 = vpop.f32.mrb[0].mxu0
    %v165 = vadd.f32 %v48, %v164
    %v166 = vpop.f32.mrb[0].mxu0
    %v167 = vadd.f32 %v52, %v166
    %168 = vmatprep.mubr.f32.mxu0 0.0
    %169 = vmatmul.mubr.f32.gmra.mrb[0].mxu0 %v69
    %v170 = vpop.f32.mrb[0].mxu0
    %v171 = vadd.f32 %v48, %v170
    %v172 = vpop.f32.mrb[0].mxu0
    %v173 = vadd.f32 %v52, %v172
    %174 = vmatprep.mubr.f32.mxu0 0.0
    %175 = vmatmul.mubr.f32.gmra.mrb[0].mxu0 %v72
    %v176 = vpop.f32.mrb[0].mxu0
    %v177 = vadd.f32 %v48, %v176
    %v178 = vpop.f32.mrb[0].mxu0
    %v179 = vadd.f32 %v52, %v178
    %180 = vmatprep.mubr.f32.mxu0 0.0
    %181 = vmatmul.mubr.f32.gmra.mrb[0].mxu0 %v75
    %v182 = vpop.f32.mrb[0].mxu0
    %v183 = vadd.f32 %v48, %v182
    %v184 = vpop.f32.mrb[0].mxu0
    %v185 = vadd.f32 %v52, %v184
    %186 = vmatprep.mubr.f32.mxu0 0.0
    %187 = vmatmul.mubr.f32.gmra.mrb[0].mxu0 %v78
    %v188 = vpop.f32.mrb[0].mxu0
    %v189 = vadd.f32 %v48, %v188
    %v190 = vpop.f32.mrb[0].mxu0
    %v191 = vadd.f32 %v52, %v190
    %192 = vdwg.mxu0
    %193 = vst [vmem:[#allocation2] sm:$0xff] %v147
    %194 = vst [vmem:[#allocation2 + $0x8] sm:$0xff] %v149
    %195 = vst [vmem:[#allocation2 + $0x10] sm:$0xff] %v153
    %196 = vst [vmem:[#allocation2 + $0x18] sm:$0xff] %v155
    %197 = vst [vmem:[#allocation2 + $0x20] sm:$0xff] %v159
    %198 = vst [vmem:[#allocation2 + $0x28] sm:$0xff] %v161
    %199 = vst [vmem:[#allocation2 + $0x30] sm:$0xff] %v165
    %200 = vst [vmem:[#allocation2 + $0x38] sm:$0xff] %v167
    %201 = vst [vmem:[#allocation2 + $0x40] sm:$0xff] %v171
    %202 = vst [vmem:[#allocation2 + $0x48] sm:$0xff] %v173
    %203 = vst [vmem:[#allocation2 + $0x50] sm:$0xff] %v177
    %204 = vst [vmem:[#allocation2 + $0x58] sm:$0xff] %v179
    %205 = vst [vmem:[#allocation2 + $0x60] sm:$0xff] %v183
    %206 = vst [vmem:[#allocation2 + $0x68] sm:$0xff] %v185
    %207 = vst [vmem:[#allocation2 + $0x70] sm:$0xff] %v189
    %208 = vst [vmem:[#allocation2 + $0x78] sm:$0xff] %v191
    %v209 = vld [vmem:[#allocation2] sm:$0xff]
    %v210 = vld [vmem:[#allocation2 + $0x78] sm:$0xff]
    %v211 = vld [vmem:[#allocation5 + $0x20] sm:$0xff]
    %v212 = vld [vmem:[#allocation5 + $0x28] sm:$0xff]
    %v213 = vld [vmem:[#allocation5 + $0x30] sm:$0xff]
    %v214 = vld [vmem:[#allocation5 + $0x38] sm:$0xff]
    %v215 = vld [vmem:[#allocation5 + $0x40] sm:$0xff]
    %v216 = vld [vmem:[#allocation5 + $0x48] sm:$0xff]
    %v217 = vld [vmem:[#allocation5 + $0x50] sm:$0xff]
    %v218 = vld [vmem:[#allocation5 + $0x58] sm:$0xff]
    %vm219 = vcmask 261120
    %v221 = vsel %vm219, 0.0, 0
    %223 = vmatprep.subr.mxu0 %v212
    %224 = vmatpush1.msra.mxu0 %v211
    %225 = vmatprep.subr.mxu0 %v214
    %226 = vmatpush1.msra.mxu0 %v213
    %227 = vmatprep.subr.mxu0 %v216
    %228 = vmatpush1.msra.mxu0 %v215
    %229 = vmatprep.subr.mxu0 %v218
    %230 = vmatpush1.msra.mxu0 %v217
    %231 = vmatprep.subr.mxu0 0.0
    %232 = vmatpush1.msra.mxu0 0.0
    %233 = vmatprep.subr.mxu0 0.0
    %234 = vmatpush1.msra.mxu0 0.0
    %235 = vmatprep.subr.mxu0 0.0
    %236 = vmatpush1.msra.mxu0 0.0
    %237 = vmatprep.subr.mxu0 0.0
    %238 = vmatpush1.msra.mxu0 0.0
    %239 = vmatprep.subr.mxu0 0.0
    %240 = vmatpush1.msra.mxu0 0.0
    %241 = vmatprep.subr.mxu0 0.0
    %242 = vmatpush1.msra.mxu0 0.0
    %243 = vmatprep.subr.mxu0 0.0
    %244 = vmatpush1.msra.mxu0 0.0
    %245 = vmatprep.subr.mxu0 0.0
    %246 = vmatpush1.msra.mxu0 0.0
    %247 = vmatprep.subr.mxu0 0.0
    %248 = vmatpush1.msra.mxu0 0.0
    %249 = vmatprep.subr.mxu0 0.0
    %250 = vmatpush1.msra.mxu0 0.0
    %251 = vmatprep.subr.mxu0 0.0
    %252 = vmatpush1.msra.mxu0 0.0
    %253 = vmatprep.subr.mxu0 0.0
    %254 = vmatpush1.msra.mxu0 0.0
    %255 = vmatprep.subr.mxu0 0.0
    %256 = vmatpush1.msra.mxu0 0.0
    %257 = vmatprep.subr.mxu0 0.0
    %258 = vmatpush1.msra.mxu0 0.0
    %259 = vmatprep.subr.mxu0 0.0
    %260 = vmatpush1.msra.mxu0 0.0
    %261 = vmatprep.subr.mxu0 0.0
    %262 = vmatpush1.msra.mxu0 0.0
    %263 = vmatprep.subr.mxu0 0.0
    %264 = vmatpush1.msra.mxu0 0.0
    %265 = vmatprep.subr.mxu0 0.0
    %266 = vmatpush1.msra.mxu0 0.0
    %267 = vmatprep.subr.mxu0 0.0
    %268 = vmatpush1.msra.mxu0 0.0
    %269 = vmatprep.subr.mxu0 0.0
    %270 = vmatpush1.msra.mxu0 0.0
    %271 = vmatprep.subr.mxu0 0.0
    %272 = vmatpush1.msra.mxu0 0.0
    %273 = vmatprep.subr.mxu0 0.0
    %274 = vmatpush1.msra.mxu0 0.0
    %275 = vmatprep.subr.mxu0 0.0
    %276 = vmatpush1.msra.mxu0 0.0
    %277 = vmatprep.subr.mxu0 0.0
    %278 = vmatpush1.msra.mxu0 0.0
    %279 = vmatprep.subr.mxu0 0.0
    %280 = vmatpush1.msra.mxu0 0.0
    %281 = vmatprep.subr.mxu0 0.0
    %282 = vmatpush1.msra.mxu0 0.0
    %283 = vmatprep.subr.mxu0 0.0
    %284 = vmatpush1.msra.mxu0 0.0
    %285 = vmatprep.subr.mxu0 0.0
    %286 = vmatpush1.msra.mxu0 0.0
    %287 = vmatprep.mubr.f32.mxu0 0.0
    %288 = vmatmul.mubr.f32.gmra.mrb[0].mxu0 %v221
    %v289 = vpop.f32.mrb[0].mxu0
    %v290 = vadd.f32 0.0, %v289
    %v291 = vpop.f32.mrb[0].mxu0
    %v292 = vadd.f32 0.0, %v291
    %293 = vmatprep.mubr.f32.mxu0 0.0
    %294 = vmatmul.mubr.f32.gmra.mrb[0].mxu0 %v221
    %v295 = vpop.f32.mrb[0].mxu0
    %v296 = vadd.f32 0.0, %v295
    %v297 = vpop.f32.mrb[0].mxu0
    %v298 = vadd.f32 0.0, %v297
    %299 = vdwg.mxu0
    %v300 = vsel %vm28, %v290, %v292
    %v301 = vsel %vm29, %v296, %v298
    %v302 = vadd.f32 %v209, %v300
    %v303 = vadd.f32 %v210, %v301
    %v304 = vxor.u32 %v302, 2147483648
    %v305 = vxor.u32 %v303, 2147483648
    %v306 = vmul.f32 %v304, 1.442695
    %v307 = vpow.pop %v306
    %v308 = vmul.f32 %v305, 1.442695
    %v309 = vpow.pop %v308
    %v310 = vadd.f32 %v307, 1.0
    %v311 = vadd.f32 %v309, 1.0
    %v312 = vrcp.pop %v310
    %v313 = vmul.f32 1.0, %v312
    %v314 = vrcp.pop %v311
    %v315 = vmul.f32 1.0, %v314
    %v316 = vtanh.pop %v302
    %v317 = vtanh.pop %v303
    %v318 = vmul.f32 %v313, 0.0
    %v319 = vmul.f32 %v315, 0.0
    %322 = vrot.lane.b32.xlu0 %v316, 32
    %v323 = vpop.permute.xlu0 %322
    %324 = vrot.lane.b32.xlu0 %v317, 32
    %v325 = vpop.permute.xlu0 %324
    %v328 = vmul.f32 %v313, %v323
    %v329 = vmul.f32 %v315, %v325
    %332 = vrot.lane.b32.xlu0 %v328, 32
    %v333 = vpop.permute.xlu0 %332
    %334 = vrot.lane.b32.xlu0 %v329, 32
    %v335 = vpop.permute.xlu0 %334
    %v338 = vadd.f32 %v318, %v333
    %v339 = vadd.f32 %v319, %v335
    %v340 = vtanh.pop %v338
    %v341 = vtanh.pop %v339
    %344 = vrot.lane.b32.xlu0 %v340, 32
    %v345 = vpop.permute.xlu0 %344
    %346 = vrot.lane.b32.xlu0 %v341, 32
    %v347 = vpop.permute.xlu0 %346
    %v350 = vmul.f32 %v313, %v345
    %v351 = vmul.f32 %v315, %v347
    %353 = vrot.lane.b32.xlu0 %v350, 64
    %v354 = vpop.permute.xlu0 %353
    %356 = vst.msk [vmem:[#allocation3] sm:$0xff] %vm219, %v354
    %358 = vrot.lane.b32.xlu0 %v351, 64
    %v359 = vpop.permute.xlu0 %358
    %361 = vst.msk [vmem:[#allocation4 + $0x38] sm:$0xff] %vm219, %v359
    %v362 = vld [vmem:[#allocation2 + $0x10] sm:$0xff]
    %v363 = vld [vmem:[#allocation2 + $0x68] sm:$0xff]
    %v364 = vld [vmem:[#allocation5 + $0x20] sm:$0xff]
    %v365 = vld [vmem:[#allocation5 + $0x28] sm:$0xff]
    %v366 = vld [vmem:[#allocation5 + $0x30] sm:$0xff]
    %v367 = vld [vmem:[#allocation5 + $0x38] sm:$0xff]
    %v368 = vld [vmem:[#allocation5 + $0x40] sm:$0xff]
    %v369 = vld [vmem:[#allocation5 + $0x48] sm:$0xff]
    %v370 = vld [vmem:[#allocation5 + $0x50] sm:$0xff]
    %v371 = vld [vmem:[#allocation5 + $0x58] sm:$0xff]
    %v372 = vsel %vm219, %v354, 0
    %v374 = vsel %vm219, %v359, 0
    %376 = vmatprep.subr.mxu0 %v365
    %377 = vmatpush1.msra.mxu0 %v364
    %378 = vmatprep.subr.mxu0 %v367
    %379 = vmatpush1.msra.mxu0 %v366
    %380 = vmatprep.subr.mxu0 %v369
    %381 = vmatpush1.msra.mxu0 %v368
    %382 = vmatprep.subr.mxu0 %v371
    %383 = vmatpush1.msra.mxu0 %v370
    %384 = vmatprep.subr.mxu0 0.0
    %385 = vmatpush1.msra.mxu0 0.0
    %386 = vmatprep.subr.mxu0 0.0
    %387 = vmatpush1.msra.mxu0 0.0
    %388 = vmatprep.subr.mxu0 0.0
    %389 = vmatpush1.msra.mxu0 0.0
    %390 = vmatprep.subr.mxu0 0.0
    %391 = vmatpush1.msra.mxu0 0.0
    %392 = vmatprep.subr.mxu0 0.0
    %393 = vmatpush1.msra.mxu0 0.0
    %394 = vmatprep.subr.mxu0 0.0
    %395 = vmatpush1.msra.mxu0 0.0
    %396 = vmatprep.subr.mxu0 0.0
    %397 = vmatpush1.msra.mxu0 0.0
    %398 = vmatprep.subr.mxu0 0.0
    %399 = vmatpush1.msra.mxu0 0.0
    %400 = vmatprep.subr.mxu0 0.0
    %401 = vmatpush1.msra.mxu0 0.0
    %402 = vmatprep.subr.mxu0 0.0
    %403 = vmatpush1.msra.mxu0 0.0
    %404 = vmatprep.subr.mxu0 0.0
    %405 = vmatpush1.msra.mxu0 0.0
    %406 = vmatprep.subr.mxu0 0.0
    %407 = vmatpush1.msra.mxu0 0.0
    %408 = vmatprep.subr.mxu0 0.0
    %409 = vmatpush1.msra.mxu0 0.0
    %410 = vmatprep.subr.mxu0 0.0
    %411 = vmatpush1.msra.mxu0 0.0
    %412 = vmatprep.subr.mxu0 0.0
    %413 = vmatpush1.msra.mxu0 0.0
    %414 = vmatprep.subr.mxu0 0.0
    %415 = vmatpush1.msra.mxu0 0.0
    %416 = vmatprep.subr.mxu0 0.0
    %417 = vmatpush1.msra.mxu0 0.0
    %418 = vmatprep.subr.mxu0 0.0
    %419 = vmatpush1.msra.mxu0 0.0
    %420 = vmatprep.subr.mxu0 0.0
    %421 = vmatpush1.msra.mxu0 0.0
    %422 = vmatprep.subr.mxu0 0.0
    %423 = vmatpush1.msra.mxu0 0.0
    %424 = vmatprep.subr.mxu0 0.0
    %425 = vmatpush1.msra.mxu0 0.0
    %426 = vmatprep.subr.mxu0 0.0
    %427 = vmatpush1.msra.mxu0 0.0
    %428 = vmatprep.subr.mxu0 0.0
    %429 = vmatpush1.msra.mxu0 0.0
    %430 = vmatprep.subr.mxu0 0.0
    %431 = vmatpush1.msra.mxu0 0.0
    %432 = vmatprep.subr.mxu0 0.0
    %433 = vmatpush1.msra.mxu0 0.0
    %434 = vmatprep.subr.mxu0 0.0
    %435 = vmatpush1.msra.mxu0 0.0
    %436 = vmatprep.subr.mxu0 0.0
    %437 = vmatpush1.msra.mxu0 0.0
    %438 = vmatprep.subr.mxu0 0.0
    %439 = vmatpush1.msra.mxu0 0.0
    %440 = vmatprep.mubr.f32.mxu0 0.0
    %441 = vmatmul.mubr.f32.gmra.mrb[0].mxu0 %v372
    %v442 = vpop.f32.mrb[0].mxu0
    %v443 = vadd.f32 0.0, %v442
    %v444 = vpop.f32.mrb[0].mxu0
    %v445 = vadd.f32 0.0, %v444
    %446 = vmatprep.mubr.f32.mxu0 0.0
    %447 = vmatmul.mubr.f32.gmra.mrb[0].mxu0 %v374
    %v448 = vpop.f32.mrb[0].mxu0
    %v449 = vadd.f32 0.0, %v448
    %v450 = vpop.f32.mrb[0].mxu0
    %v451 = vadd.f32 0.0, %v450
    %452 = vdwg.mxu0
    %v453 = vsel %vm28, %v443, %v445
    %v454 = vsel %vm29, %v449, %v451
    %v455 = vadd.f32 %v362, %v453
    %v456 = vadd.f32 %v363, %v454
    %v457 = vxor.u32 %v455, 2147483648
    %v458 = vxor.u32 %v456, 2147483648
    %v459 = vmul.f32 %v457, 1.442695
    %v460 = vpow.pop %v459
    %v461 = vmul.f32 %v458, 1.442695
    %v462 = vpow.pop %v461
    %v463 = vadd.f32 %v460, 1.0
    %v464 = vadd.f32 %v462, 1.0
    %v465 = vrcp.pop %v463
    %v466 = vmul.f32 1.0, %v465
    %v467 = vrcp.pop %v464
    %v468 = vmul.f32 1.0, %v467
    %v469 = vtanh.pop %v455
    %v470 = vtanh.pop %v456
    %v471 = vmul.f32 %v466, %v338
    %v472 = vmul.f32 %v468, %v339
    %475 = vrot.lane.b32.xlu0 %v469, 32
    %v476 = vpop.permute.xlu0 %475
    %477 = vrot.lane.b32.xlu0 %v470, 32
    %v478 = vpop.permute.xlu0 %477
    %v481 = vmul.f32 %v466, %v476
    %v482 = vmul.f32 %v468, %v478
    %485 = vrot.lane.b32.xlu0 %v481, 32
    %v486 = vpop.permute.xlu0 %485
    %487 = vrot.lane.b32.xlu0 %v482, 32
    %v488 = vpop.permute.xlu0 %487
    %v491 = vadd.f32 %v471, %v486
    %v492 = vadd.f32 %v472, %v488
    %v493 = vtanh.pop %v491
    %v494 = vtanh.pop %v492
    %497 = vrot.lane.b32.xlu0 %v493, 32
    %v498 = vpop.permute.xlu0 %497
    %499 = vrot.lane.b32.xlu0 %v494, 32
    %v500 = vpop.permute.xlu0 %499
    %v503 = vmul.f32 %v466, %v498
    %v504 = vmul.f32 %v468, %v500
    %506 = vrot.lane.b32.xlu0 %v503, 64
    %v507 = vpop.permute.xlu0 %506
    %509 = vst.msk [vmem:[#allocation3 + $0x8] sm:$0xff] %vm219, %v507
    %511 = vrot.lane.b32.xlu0 %v504, 64
    %v512 = vpop.permute.xlu0 %511
    %514 = vst.msk [vmem:[#allocation4 + $0x30] sm:$0xff] %vm219, %v512
    %v515 = vld [vmem:[#allocation2 + $0x20] sm:$0xff]
    %v516 = vld [vmem:[#allocation2 + $0x58] sm:$0xff]
    %v517 = vld [vmem:[#allocation5 + $0x20] sm:$0xff]
    %v518 = vld [vmem:[#allocation5 + $0x28] sm:$0xff]
    %v519 = vld [vmem:[#allocation5 + $0x30] sm:$0xff]
    %v520 = vld [vmem:[#allocation5 + $0x38] sm:$0xff]
    %v521 = vld [vmem:[#allocation5 + $0x40] sm:$0xff]
    %v522 = vld [vmem:[#allocation5 + $0x48] sm:$0xff]
    %v523 = vld [vmem:[#allocation5 + $0x50] sm:$0xff]
    %v524 = vld [vmem:[#allocation5 + $0x58] sm:$0xff]
    %v525 = vsel %vm219, %v507, 0
    %v527 = vsel %vm219, %v512, 0
    %529 = vmatprep.subr.mxu0 %v518
    %530 = vmatpush1.msra.mxu0 %v517
    %531 = vmatprep.subr.mxu0 %v520
    %532 = vmatpush1.msra.mxu0 %v519
    %533 = vmatprep.subr.mxu0 %v522
    %534 = vmatpush1.msra.mxu0 %v521
    %535 = vmatprep.subr.mxu0 %v524
    %536 = vmatpush1.msra.mxu0 %v523
    %537 = vmatprep.subr.mxu0 0.0
    %538 = vmatpush1.msra.mxu0 0.0
    %539 = vmatprep.subr.mxu0 0.0
    %540 = vmatpush1.msra.mxu0 0.0
    %541 = vmatprep.subr.mxu0 0.0
    %542 = vmatpush1.msra.mxu0 0.0
    %543 = vmatprep.subr.mxu0 0.0
    %544 = vmatpush1.msra.mxu0 0.0
    %545 = vmatprep.subr.mxu0 0.0
    %546 = vmatpush1.msra.mxu0 0.0
    %547 = vmatprep.subr.mxu0 0.0
    %548 = vmatpush1.msra.mxu0 0.0
    %549 = vmatprep.subr.mxu0 0.0
    %550 = vmatpush1.msra.mxu0 0.0
    %551 = vmatprep.subr.mxu0 0.0
    %552 = vmatpush1.msra.mxu0 0.0
    %553 = vmatprep.subr.mxu0 0.0
    %554 = vmatpush1.msra.mxu0 0.0
    %555 = vmatprep.subr.mxu0 0.0
    %556 = vmatpush1.msra.mxu0 0.0
    %557 = vmatprep.subr.mxu0 0.0
    %558 = vmatpush1.msra.mxu0 0.0
    %559 = vmatprep.subr.mxu0 0.0
    %560 = vmatpush1.msra.mxu0 0.0
    %561 = vmatprep.subr.mxu0 0.0
    %562 = vmatpush1.msra.mxu0 0.0
    %563 = vmatprep.subr.mxu0 0.0
    %564 = vmatpush1.msra.mxu0 0.0
    %565 = vmatprep.subr.mxu0 0.0
    %566 = vmatpush1.msra.mxu0 0.0
    %567 = vmatprep.subr.mxu0 0.0
    %568 = vmatpush1.msra.mxu0 0.0
    %569 = vmatprep.subr.mxu0 0.0
    %570 = vmatpush1.msra.mxu0 0.0
    %571 = vmatprep.subr.mxu0 0.0
    %572 = vmatpush1.msra.mxu0 0.0
    %573 = vmatprep.subr.mxu0 0.0
    %574 = vmatpush1.msra.mxu0 0.0
    %575 = vmatprep.subr.mxu0 0.0
    %576 = vmatpush1.msra.mxu0 0.0
    %577 = vmatprep.subr.mxu0 0.0
    %578 = vmatpush1.msra.mxu0 0.0
    %579 = vmatprep.subr.mxu0 0.0
    %580 = vmatpush1.msra.mxu0 0.0
    %581 = vmatprep.subr.mxu0 0.0
    %582 = vmatpush1.msra.mxu0 0.0
    %583 = vmatprep.subr.mxu0 0.0
    %584 = vmatpush1.msra.mxu0 0.0
    %585 = vmatprep.subr.mxu0 0.0
    %586 = vmatpush1.msra.mxu0 0.0
    %587 = vmatprep.subr.mxu0 0.0
    %588 = vmatpush1.msra.mxu0 0.0
    %589 = vmatprep.subr.mxu0 0.0
    %590 = vmatpush1.msra.mxu0 0.0
    %591 = vmatprep.subr.mxu0 0.0
    %592 = vmatpush1.msra.mxu0 0.0
    %593 = vmatprep.mubr.f32.mxu0 0.0
    %594 = vmatmul.mubr.f32.gmra.mrb[0].mxu0 %v525
    %v595 = vpop.f32.mrb[0].mxu0
    %v596 = vadd.f32 0.0, %v595
    %v597 = vpop.f32.mrb[0].mxu0
    %v598 = vadd.f32 0.0, %v597
    %599 = vmatprep.mubr.f32.mxu0 0.0
    %600 = vmatmul.mubr.f32.gmra.mrb[0].mxu0 %v527
    %v601 = vpop.f32.mrb[0].mxu0
    %v602 = vadd.f32 0.0, %v601
    %v603 = vpop.f32.mrb[0].mxu0
    %v604 = vadd.f32 0.0, %v603
    %605 = vdwg.mxu0
    %v606 = vsel %vm28, %v596, %v598
    %v607 = vsel %vm29, %v602, %v604
    %v608 = vadd.f32 %v515, %v606
    %v609 = vadd.f32 %v516, %v607
    %v610 = vxor.u32 %v608, 2147483648
    %v611 = vxor.u32 %v609, 2147483648
    %v612 = vmul.f32 %v610, 1.442695
    %v613 = vpow.pop %v612
    %v614 = vmul.f32 %v611, 1.442695
    %v615 = vpow.pop %v614
    %v616 = vadd.f32 %v613, 1.0
    %v617 = vadd.f32 %v615, 1.0
    %v618 = vrcp.pop %v616
    %v619 = vmul.f32 1.0, %v618
    %v620 = vrcp.pop %v617
    %v621 = vmul.f32 1.0, %v620
    %v622 = vtanh.pop %v608
    %v623 = vtanh.pop %v609
    %v624 = vmul.f32 %v619, %v491
    %v625 = vmul.f32 %v621, %v492
    %628 = vrot.lane.b32.xlu0 %v622, 32
    %v629 = vpop.permute.xlu0 %628
    %630 = vrot.lane.b32.xlu0 %v623, 32
    %v631 = vpop.permute.xlu0 %630
    %v634 = vmul.f32 %v619, %v629
    %v635 = vmul.f32 %v621, %v631
    %638 = vrot.lane.b32.xlu0 %v634, 32
    %v639 = vpop.permute.xlu0 %638
    %640 = vrot.lane.b32.xlu0 %v635, 32
    %v641 = vpop.permute.xlu0 %640
    %v644 = vadd.f32 %v624, %v639
    %v645 = vadd.f32 %v625, %v641
    %v646 = vtanh.pop %v644
    %v647 = vtanh.pop %v645
    %650 = vrot.lane.b32.xlu0 %v646, 32
    %v651 = vpop.permute.xlu0 %650
    %652 = vrot.lane.b32.xlu0 %v647, 32
    %v653 = vpop.permute.xlu0 %652
    %v656 = vmul.f32 %v619, %v651
    %v657 = vmul.f32 %v621, %v653
    %659 = vrot.lane.b32.xlu0 %v656, 64
    %v660 = vpop.permute.xlu0 %659
    %662 = vst.msk [vmem:[#allocation3 + $0x10] sm:$0xff] %vm219, %v660
    %664 = vrot.lane.b32.xlu0 %v657, 64
    %v665 = vpop.permute.xlu0 %664
    %667 = vst.msk [vmem:[#allocation4 + $0x28] sm:$0xff] %vm219, %v665
    %v668 = vld [vmem:[#allocation2 + $0x30] sm:$0xff]
    %v669 = vld [vmem:[#allocation2 + $0x48] sm:$0xff]
    %v670 = vld [vmem:[#allocation5 + $0x20] sm:$0xff]
    %v671 = vld [vmem:[#allocation5 + $0x28] sm:$0xff]
    %v672 = vld [vmem:[#allocation5 + $0x30] sm:$0xff]
    %v673 = vld [vmem:[#allocation5 + $0x38] sm:$0xff]
    %v674 = vld [vmem:[#allocation5 + $0x40] sm:$0xff]
    %v675 = vld [vmem:[#allocation5 + $0x48] sm:$0xff]
    %v676 = vld [vmem:[#allocation5 + $0x50] sm:$0xff]
    %v677 = vld [vmem:[#allocation5 + $0x58] sm:$0xff]
    %v678 = vsel %vm219, %v660, 0
    %v680 = vsel %vm219, %v665, 0
    %682 = vmatprep.subr.mxu0 %v671
    %683 = vmatpush1.msra.mxu0 %v670
    %684 = vmatprep.subr.mxu0 %v673
    %685 = vmatpush1.msra.mxu0 %v672
    %686 = vmatprep.subr.mxu0 %v675
    %687 = vmatpush1.msra.mxu0 %v674
    %688 = vmatprep.subr.mxu0 %v677
    %689 = vmatpush1.msra.mxu0 %v676
    %690 = vmatprep.subr.mxu0 0.0
    %691 = vmatpush1.msra.mxu0 0.0
    %692 = vmatprep.subr.mxu0 0.0
    %693 = vmatpush1.msra.mxu0 0.0
    %694 = vmatprep.subr.mxu0 0.0
    %695 = vmatpush1.msra.mxu0 0.0
    %696 = vmatprep.subr.mxu0 0.0
    %697 = vmatpush1.msra.mxu0 0.0
    %698 = vmatprep.subr.mxu0 0.0
    %699 = vmatpush1.msra.mxu0 0.0
    %700 = vmatprep.subr.mxu0 0.0
    %701 = vmatpush1.msra.mxu0 0.0
    %702 = vmatprep.subr.mxu0 0.0
    %703 = vmatpush1.msra.mxu0 0.0
    %704 = vmatprep.subr.mxu0 0.0
    %705 = vmatpush1.msra.mxu0 0.0
    %706 = vmatprep.subr.mxu0 0.0
    %707 = vmatpush1.msra.mxu0 0.0
    %708 = vmatprep.subr.mxu0 0.0
    %709 = vmatpush1.msra.mxu0 0.0
    %710 = vmatprep.subr.mxu0 0.0
    %711 = vmatpush1.msra.mxu0 0.0
    %712 = vmatprep.subr.mxu0 0.0
    %713 = vmatpush1.msra.mxu0 0.0
    %714 = vmatprep.subr.mxu0 0.0
    %715 = vmatpush1.msra.mxu0 0.0
    %716 = vmatprep.subr.mxu0 0.0
    %717 = vmatpush1.msra.mxu0 0.0
    %718 = vmatprep.subr.mxu0 0.0
    %719 = vmatpush1.msra.mxu0 0.0
    %720 = vmatprep.subr.mxu0 0.0
    %721 = vmatpush1.msra.mxu0 0.0
    %722 = vmatprep.subr.mxu0 0.0
    %723 = vmatpush1.msra.mxu0 0.0
    %724 = vmatprep.subr.mxu0 0.0
    %725 = vmatpush1.msra.mxu0 0.0
    %726 = vmatprep.subr.mxu0 0.0
    %727 = vmatpush1.msra.mxu0 0.0
    %728 = vmatprep.subr.mxu0 0.0
    %729 = vmatpush1.msra.mxu0 0.0
    %730 = vmatprep.subr.mxu0 0.0
    %731 = vmatpush1.msra.mxu0 0.0
    %732 = vmatprep.subr.mxu0 0.0
    %733 = vmatpush1.msra.mxu0 0.0
    %734 = vmatprep.subr.mxu0 0.0
    %735 = vmatpush1.msra.mxu0 0.0
    %736 = vmatprep.subr.mxu0 0.0
    %737 = vmatpush1.msra.mxu0 0.0
    %738 = vmatprep.subr.mxu0 0.0
    %739 = vmatpush1.msra.mxu0 0.0
    %740 = vmatprep.subr.mxu0 0.0
    %741 = vmatpush1.msra.mxu0 0.0
    %742 = vmatprep.subr.mxu0 0.0
    %743 = vmatpush1.msra.mxu0 0.0
    %744 = vmatprep.subr.mxu0 0.0
    %745 = vmatpush1.msra.mxu0 0.0
    %746 = vmatprep.mubr.f32.mxu0 0.0
    %747 = vmatmul.mubr.f32.gmra.mrb[0].mxu0 %v678
    %v748 = vpop.f32.mrb[0].mxu0
    %v749 = vadd.f32 0.0, %v748
    %v750 = vpop.f32.mrb[0].mxu0
    %v751 = vadd.f32 0.0, %v750
    %752 = vmatprep.mubr.f32.mxu0 0.0
    %753 = vmatmul.mubr.f32.gmra.mrb[0].mxu0 %v680
    %v754 = vpop.f32.mrb[0].mxu0
    %v755 = vadd.f32 0.0, %v754
    %v756 = vpop.f32.mrb[0].mxu0
    %v757 = vadd.f32 0.0, %v756
    %758 = vdwg.mxu0
    %v759 = vsel %vm28, %v749, %v751
    %v760 = vsel %vm29, %v755, %v757
    %v761 = vadd.f32 %v668, %v759
    %v762 = vadd.f32 %v669, %v760
    %v763 = vxor.u32 %v761, 2147483648
    %v764 = vxor.u32 %v762, 2147483648
    %v765 = vmul.f32 %v763, 1.442695
    %v766 = vpow.pop %v765
    %v767 = vmul.f32 %v764, 1.442695
    %v768 = vpow.pop %v767
    %v769 = vadd.f32 %v766, 1.0
    %v770 = vadd.f32 %v768, 1.0
    %v771 = vrcp.pop %v769
    %v772 = vmul.f32 1.0, %v771
    %v773 = vrcp.pop %v770
    %v774 = vmul.f32 1.0, %v773
    %v775 = vtanh.pop %v761
    %v776 = vtanh.pop %v762
    %v777 = vmul.f32 %v772, %v644
    %v778 = vmul.f32 %v774, %v645
    %781 = vrot.lane.b32.xlu0 %v775, 32
    %v782 = vpop.permute.xlu0 %781
    %783 = vrot.lane.b32.xlu0 %v776, 32
    %v784 = vpop.permute.xlu0 %783
    %v787 = vmul.f32 %v772, %v782
    %v788 = vmul.f32 %v774, %v784
    %791 = vrot.lane.b32.xlu0 %v787, 32
    %v792 = vpop.permute.xlu0 %791
    %793 = vrot.lane.b32.xlu0 %v788, 32
    %v794 = vpop.permute.xlu0 %793
    %v797 = vadd.f32 %v777, %v792
    %v798 = vadd.f32 %v778, %v794
    %v799 = vtanh.pop %v797
    %v800 = vtanh.pop %v798
    %803 = vrot.lane.b32.xlu0 %v799, 32
    %v804 = vpop.permute.xlu0 %803
    %805 = vrot.lane.b32.xlu0 %v800, 32
    %v806 = vpop.permute.xlu0 %805
    %v809 = vmul.f32 %v772, %v804
    %v810 = vmul.f32 %v774, %v806
    %812 = vrot.lane.b32.xlu0 %v809, 64
    %v813 = vpop.permute.xlu0 %812
    %815 = vst.msk [vmem:[#allocation3 + $0x18] sm:$0xff] %vm219, %v813
    %817 = vrot.lane.b32.xlu0 %v810, 64
    %v818 = vpop.permute.xlu0 %817
    %820 = vst.msk [vmem:[#allocation4 + $0x20] sm:$0xff] %vm219, %v818
    %v821 = vld [vmem:[#allocation2 + $0x40] sm:$0xff]
    %v822 = vld [vmem:[#allocation2 + $0x38] sm:$0xff]
    %v823 = vld [vmem:[#allocation5 + $0x20] sm:$0xff]
    %v824 = vld [vmem:[#allocation5 + $0x28] sm:$0xff]
    %v825 = vld [vmem:[#allocation5 + $0x30] sm:$0xff]
    %v826 = vld [vmem:[#allocation5 + $0x38] sm:$0xff]
    %v827 = vld [vmem:[#allocation5 + $0x40] sm:$0xff]
    %v828 = vld [vmem:[#allocation5 + $0x48] sm:$0xff]
    %v829 = vld [vmem:[#allocation5 + $0x50] sm:$0xff]
    %v830 = vld [vmem:[#allocation5 + $0x58] sm:$0xff]
    %v831 = vsel %vm219, %v813, 0
    %v833 = vsel %vm219, %v818, 0
    %835 = vmatprep.subr.mxu0 %v824
    %836 = vmatpush1.msra.mxu0 %v823
    %837 = vmatprep.subr.mxu0 %v826
    %838 = vmatpush1.msra.mxu0 %v825
    %839 = vmatprep.subr.mxu0 %v828
    %840 = vmatpush1.msra.mxu0 %v827
    %841 = vmatprep.subr.mxu0 %v830
    %842 = vmatpush1.msra.mxu0 %v829
    %843 = vmatprep.subr.mxu0 0.0
    %844 = vmatpush1.msra.mxu0 0.0
    %845 = vmatprep.subr.mxu0 0.0
    %846 = vmatpush1.msra.mxu0 0.0
    %847 = vmatprep.subr.mxu0 0.0
    %848 = vmatpush1.msra.mxu0 0.0
    %849 = vmatprep.subr.mxu0 0.0
    %850 = vmatpush1.msra.mxu0 0.0
    %851 = vmatprep.subr.mxu0 0.0
    %852 = vmatpush1.msra.mxu0 0.0
    %853 = vmatprep.subr.mxu0 0.0
    %854 = vmatpush1.msra.mxu0 0.0
    %855 = vmatprep.subr.mxu0 0.0
    %856 = vmatpush1.msra.mxu0 0.0
    %857 = vmatprep.subr.mxu0 0.0
    %858 = vmatpush1.msra.mxu0 0.0
    %859 = vmatprep.subr.mxu0 0.0
    %860 = vmatpush1.msra.mxu0 0.0
    %861 = vmatprep.subr.mxu0 0.0
    %862 = vmatpush1.msra.mxu0 0.0
    %863 = vmatprep.subr.mxu0 0.0
    %864 = vmatpush1.msra.mxu0 0.0
    %865 = vmatprep.subr.mxu0 0.0
    %866 = vmatpush1.msra.mxu0 0.0
    %867 = vmatprep.subr.mxu0 0.0
    %868 = vmatpush1.msra.mxu0 0.0
    %869 = vmatprep.subr.mxu0 0.0
    %870 = vmatpush1.msra.mxu0 0.0
    %871 = vmatprep.subr.mxu0 0.0
    %872 = vmatpush1.msra.mxu0 0.0
    %873 = vmatprep.subr.mxu0 0.0
    %874 = vmatpush1.msra.mxu0 0.0
    %875 = vmatprep.subr.mxu0 0.0
    %876 = vmatpush1.msra.mxu0 0.0
    %877 = vmatprep.subr.mxu0 0.0
    %878 = vmatpush1.msra.mxu0 0.0
    %879 = vmatprep.subr.mxu0 0.0
    %880 = vmatpush1.msra.mxu0 0.0
    %881 = vmatprep.subr.mxu0 0.0
    %882 = vmatpush1.msra.mxu0 0.0
    %883 = vmatprep.subr.mxu0 0.0
    %884 = vmatpush1.msra.mxu0 0.0
    %885 = vmatprep.subr.mxu0 0.0
    %886 = vmatpush1.msra.mxu0 0.0
    %887 = vmatprep.subr.mxu0 0.0
    %888 = vmatpush1.msra.mxu0 0.0
    %889 = vmatprep.subr.mxu0 0.0
    %890 = vmatpush1.msra.mxu0 0.0
    %891 = vmatprep.subr.mxu0 0.0
    %892 = vmatpush1.msra.mxu0 0.0
    %893 = vmatprep.subr.mxu0 0.0
    %894 = vmatpush1.msra.mxu0 0.0
    %895 = vmatprep.subr.mxu0 0.0
    %896 = vmatpush1.msra.mxu0 0.0
    %897 = vmatprep.subr.mxu0 0.0
    %898 = vmatpush1.msra.mxu0 0.0
    %899 = vmatprep.mubr.f32.mxu0 0.0
    %900 = vmatmul.mubr.f32.gmra.mrb[0].mxu0 %v831
    %v901 = vpop.f32.mrb[0].mxu0
    %v902 = vadd.f32 0.0, %v901
    %v903 = vpop.f32.mrb[0].mxu0
    %v904 = vadd.f32 0.0, %v903
    %905 = vmatprep.mubr.f32.mxu0 0.0
    %906 = vmatmul.mubr.f32.gmra.mrb[0].mxu0 %v833
    %v907 = vpop.f32.mrb[0].mxu0
    %v908 = vadd.f32 0.0, %v907
    %v909 = vpop.f32.mrb[0].mxu0
    %v910 = vadd.f32 0.0, %v909
    %911 = vdwg.mxu0
    %v912 = vsel %vm28, %v902, %v904
    %v913 = vsel %vm29, %v908, %v910
    %v914 = vadd.f32 %v821, %v912
    %v915 = vadd.f32 %v822, %v913
    %v916 = vxor.u32 %v914, 2147483648
    %v917 = vxor.u32 %v915, 2147483648
    %v918 = vmul.f32 %v916, 1.442695
    %v919 = vpow.pop %v918
    %v920 = vmul.f32 %v917, 1.442695
    %v921 = vpow.pop %v920
    %v922 = vadd.f32 %v919, 1.0
    %v923 = vadd.f32 %v921, 1.0
    %v924 = vrcp.pop %v922
    %v925 = vmul.f32 1.0, %v924
    %v926 = vrcp.pop %v923
    %v927 = vmul.f32 1.0, %v926
    %v928 = vtanh.pop %v914
    %v929 = vtanh.pop %v915
    %v930 = vmul.f32 %v925, %v797
    %v931 = vmul.f32 %v927, %v798
    %934 = vrot.lane.b32.xlu0 %v928, 32
    %v935 = vpop.permute.xlu0 %934
    %936 = vrot.lane.b32.xlu0 %v929, 32
    %v937 = vpop.permute.xlu0 %936
    %v940 = vmul.f32 %v925, %v935
    %v941 = vmul.f32 %v927, %v937
    %944 = vrot.lane.b32.xlu0 %v940, 32
    %v945 = vpop.permute.xlu0 %944
    %946 = vrot.lane.b32.xlu0 %v941, 32
    %v947 = vpop.permute.xlu0 %946
    %v950 = vadd.f32 %v930, %v945
    %v951 = vadd.f32 %v931, %v947
    %v952 = vtanh.pop %v950
    %v953 = vtanh.pop %v951
    %956 = vrot.lane.b32.xlu0 %v952, 32
    %v957 = vpop.permute.xlu0 %956
    %958 = vrot.lane.b32.xlu0 %v953, 32
    %v959 = vpop.permute.xlu0 %958
    %v962 = vmul.f32 %v925, %v957
    %v963 = vmul.f32 %v927, %v959
    %965 = vrot.lane.b32.xlu0 %v962, 64
    %v966 = vpop.permute.xlu0 %965
    %968 = vst.msk [vmem:[#allocation3 + $0x20] sm:$0xff] %vm219, %v966
    %970 = vrot.lane.b32.xlu0 %v963, 64
    %v971 = vpop.permute.xlu0 %970
    %973 = vst.msk [vmem:[#allocation4 + $0x18] sm:$0xff] %vm219, %v971
    %v974 = vld [vmem:[#allocation2 + $0x50] sm:$0xff]
    %v975 = vld [vmem:[#allocation2 + $0x28] sm:$0xff]
    %v976 = vld [vmem:[#allocation5 + $0x20] sm:$0xff]
    %v977 = vld [vmem:[#allocation5 + $0x28] sm:$0xff]
    %v978 = vld [vmem:[#allocation5 + $0x30] sm:$0xff]
    %v979 = vld [vmem:[#allocation5 + $0x38] sm:$0xff]
    %v980 = vld [vmem:[#allocation5 + $0x40] sm:$0xff]
    %v981 = vld [vmem:[#allocation5 + $0x48] sm:$0xff]
    %v982 = vld [vmem:[#allocation5 + $0x50] sm:$0xff]
    %v983 = vld [vmem:[#allocation5 + $0x58] sm:$0xff]
    %v984 = vsel %vm219, %v966, 0
    %v986 = vsel %vm219, %v971, 0
    %988 = vmatprep.subr.mxu0 %v977
    %989 = vmatpush1.msra.mxu0 %v976
    %990 = vmatprep.subr.mxu0 %v979
    %991 = vmatpush1.msra.mxu0 %v978
    %992 = vmatprep.subr.mxu0 %v981
    %993 = vmatpush1.msra.mxu0 %v980
    %994 = vmatprep.subr.mxu0 %v983
    %995 = vmatpush1.msra.mxu0 %v982
    %996 = vmatprep.subr.mxu0 0.0
    %997 = vmatpush1.msra.mxu0 0.0
    %998 = vmatprep.subr.mxu0 0.0
    %999 = vmatpush1.msra.mxu0 0.0
    %1000 = vmatprep.subr.mxu0 0.0
    %1001 = vmatpush1.msra.mxu0 0.0
    %1002 = vmatprep.subr.mxu0 0.0
    %1003 = vmatpush1.msra.mxu0 0.0
    %1004 = vmatprep.subr.mxu0 0.0
    %1005 = vmatpush1.msra.mxu0 0.0
    %1006 = vmatprep.subr.mxu0 0.0
    %1007 = vmatpush1.msra.mxu0 0.0
    %1008 = vmatprep.subr.mxu0 0.0
    %1009 = vmatpush1.msra.mxu0 0.0
    %1010 = vmatprep.subr.mxu0 0.0
    %1011 = vmatpush1.msra.mxu0 0.0
    %1012 = vmatprep.subr.mxu0 0.0
    %1013 = vmatpush1.msra.mxu0 0.0
    %1014 = vmatprep.subr.mxu0 0.0
    %1015 = vmatpush1.msra.mxu0 0.0
    %1016 = vmatprep.subr.mxu0 0.0
    %1017 = vmatpush1.msra.mxu0 0.0
    %1018 = vmatprep.subr.mxu0 0.0
    %1019 = vmatpush1.msra.mxu0 0.0
    %1020 = vmatprep.subr.mxu0 0.0
    %1021 = vmatpush1.msra.mxu0 0.0
    %1022 = vmatprep.subr.mxu0 0.0
    %1023 = vmatpush1.msra.mxu0 0.0
    %1024 = vmatprep.subr.mxu0 0.0
    %1025 = vmatpush1.msra.mxu0 0.0
    %1026 = vmatprep.subr.mxu0 0.0
    %1027 = vmatpush1.msra.mxu0 0.0
    %1028 = vmatprep.subr.mxu0 0.0
    %1029 = vmatpush1.msra.mxu0 0.0
    %1030 = vmatprep.subr.mxu0 0.0
    %1031 = vmatpush1.msra.mxu0 0.0
    %1032 = vmatprep.subr.mxu0 0.0
    %1033 = vmatpush1.msra.mxu0 0.0
    %1034 = vmatprep.subr.mxu0 0.0
    %1035 = vmatpush1.msra.mxu0 0.0
    %1036 = vmatprep.subr.mxu0 0.0
    %1037 = vmatpush1.msra.mxu0 0.0
    %1038 = vmatprep.subr.mxu0 0.0
    %1039 = vmatpush1.msra.mxu0 0.0
    %1040 = vmatprep.subr.mxu0 0.0
    %1041 = vmatpush1.msra.mxu0 0.0
    %1042 = vmatprep.subr.mxu0 0.0
    %1043 = vmatpush1.msra.mxu0 0.0
    %1044 = vmatprep.subr.mxu0 0.0
    %1045 = vmatpush1.msra.mxu0 0.0
    %1046 = vmatprep.subr.mxu0 0.0
    %1047 = vmatpush1.msra.mxu0 0.0
    %1048 = vmatprep.subr.mxu0 0.0
    %1049 = vmatpush1.msra.mxu0 0.0
    %1050 = vmatprep.subr.mxu0 0.0
    %1051 = vmatpush1.msra.mxu0 0.0
    %1052 = vmatprep.mubr.f32.mxu0 0.0
    %1053 = vmatmul.mubr.f32.gmra.mrb[0].mxu0 %v984
    %v1054 = vpop.f32.mrb[0].mxu0
    %v1055 = vadd.f32 0.0, %v1054
    %v1056 = vpop.f32.mrb[0].mxu0
    %v1057 = vadd.f32 0.0, %v1056
    %1058 = vmatprep.mubr.f32.mxu0 0.0
    %1059 = vmatmul.mubr.f32.gmra.mrb[0].mxu0 %v986
    %v1060 = vpop.f32.mrb[0].mxu0
    %v1061 = vadd.f32 0.0, %v1060
    %v1062 = vpop.f32.mrb[0].mxu0
    %v1063 = vadd.f32 0.0, %v1062
    %1064 = vdwg.mxu0
    %v1065 = vsel %vm28, %v1055, %v1057
    %v1066 = vsel %vm29, %v1061, %v1063
    %v1067 = vadd.f32 %v974, %v1065
    %v1068 = vadd.f32 %v975, %v1066
    %v1069 = vxor.u32 %v1067, 2147483648
    %v1070 = vxor.u32 %v1068, 2147483648
    %v1071 = vmul.f32 %v1069, 1.442695
    %v1072 = vpow.pop %v1071
    %v1073 = vmul.f32 %v1070, 1.442695
    %v1074 = vpow.pop %v1073
    %v1075 = vadd.f32 %v1072, 1.0
    %v1076 = vadd.f32 %v1074, 1.0
    %v1077 = vrcp.pop %v1075
    %v1078 = vmul.f32 1.0, %v1077
    %v1079 = vrcp.pop %v1076
    %v1080 = vmul.f32 1.0, %v1079
    %v1081 = vtanh.pop %v1067
    %v1082 = vtanh.pop %v1068
    %v1083 = vmul.f32 %v1078, %v950
    %v1084 = vmul.f32 %v1080, %v951
    %1087 = vrot.lane.b32.xlu0 %v1081, 32
    %v1088 = vpop.permute.xlu0 %1087
    %1089 = vrot.lane.b32.xlu0 %v1082, 32
    %v1090 = vpop.permute.xlu0 %1089
    %v1093 = vmul.f32 %v1078, %v1088
    %v1094 = vmul.f32 %v1080, %v1090
    %1097 = vrot.lane.b32.xlu0 %v1093, 32
    %v1098 = vpop.permute.xlu0 %1097
    %1099 = vrot.lane.b32.xlu0 %v1094, 32
    %v1100 = vpop.permute.xlu0 %1099
    %v1103 = vadd.f32 %v1083, %v1098
    %v1104 = vadd.f32 %v1084, %v1100
    %v1105 = vtanh.pop %v1103
    %v1106 = vtanh.pop %v1104
    %1109 = vrot.lane.b32.xlu0 %v1105, 32
    %v1110 = vpop.permute.xlu0 %1109
    %1111 = vrot.lane.b32.xlu0 %v1106, 32
    %v1112 = vpop.permute.xlu0 %1111
    %v1115 = vmul.f32 %v1078, %v1110
    %v1116 = vmul.f32 %v1080, %v1112
    %1118 = vrot.lane.b32.xlu0 %v1115, 64
    %v1119 = vpop.permute.xlu0 %1118
    %1121 = vst.msk [vmem:[#allocation3 + $0x28] sm:$0xff] %vm219, %v1119
    %1123 = vrot.lane.b32.xlu0 %v1116, 64
    %v1124 = vpop.permute.xlu0 %1123
    %1126 = vst.msk [vmem:[#allocation4 + $0x10] sm:$0xff] %vm219, %v1124
    %v1127 = vld [vmem:[#allocation2 + $0x60] sm:$0xff]
    %v1128 = vld [vmem:[#allocation2 + $0x18] sm:$0xff]
    %v1129 = vld [vmem:[#allocation5 + $0x20] sm:$0xff]
    %v1130 = vld [vmem:[#allocation5 + $0x28] sm:$0xff]
    %v1131 = vld [vmem:[#allocation5 + $0x30] sm:$0xff]
    %v1132 = vld [vmem:[#allocation5 + $0x38] sm:$0xff]
    %v1133 = vld [vmem:[#allocation5 + $0x40] sm:$0xff]
    %v1134 = vld [vmem:[#allocation5 + $0x48] sm:$0xff]
    %v1135 = vld [vmem:[#allocation5 + $0x50] sm:$0xff]
    %v1136 = vld [vmem:[#allocation5 + $0x58] sm:$0xff]
    %v1137 = vsel %vm219, %v1119, 0
    %v1139 = vsel %vm219, %v1124, 0
    %1141 = vmatprep.subr.mxu0 %v1130
    %1142 = vmatpush1.msra.mxu0 %v1129
    %1143 = vmatprep.subr.mxu0 %v1132
    %1144 = vmatpush1.msra.mxu0 %v1131
    %1145 = vmatprep.subr.mxu0 %v1134
    %1146 = vmatpush1.msra.mxu0 %v1133
    %1147 = vmatprep.subr.mxu0 %v1136
    %1148 = vmatpush1.msra.mxu0 %v1135
    %1149 = vmatprep.subr.mxu0 0.0
    %1150 = vmatpush1.msra.mxu0 0.0
    %1151 = vmatprep.subr.mxu0 0.0
    %1152 = vmatpush1.msra.mxu0 0.0
    %1153 = vmatprep.subr.mxu0 0.0
    %1154 = vmatpush1.msra.mxu0 0.0
    %1155 = vmatprep.subr.mxu0 0.0
    %1156 = vmatpush1.msra.mxu0 0.0
    %1157 = vmatprep.subr.mxu0 0.0
    %1158 = vmatpush1.msra.mxu0 0.0
    %1159 = vmatprep.subr.mxu0 0.0
    %1160 = vmatpush1.msra.mxu0 0.0
    %1161 = vmatprep.subr.mxu0 0.0
    %1162 = vmatpush1.msra.mxu0 0.0
    %1163 = vmatprep.subr.mxu0 0.0
    %1164 = vmatpush1.msra.mxu0 0.0
    %1165 = vmatprep.subr.mxu0 0.0
    %1166 = vmatpush1.msra.mxu0 0.0
    %1167 = vmatprep.subr.mxu0 0.0
    %1168 = vmatpush1.msra.mxu0 0.0
    %1169 = vmatprep.subr.mxu0 0.0
    %1170 = vmatpush1.msra.mxu0 0.0
    %1171 = vmatprep.subr.mxu0 0.0
    %1172 = vmatpush1.msra.mxu0 0.0
    %1173 = vmatprep.subr.mxu0 0.0
    %1174 = vmatpush1.msra.mxu0 0.0
    %1175 = vmatprep.subr.mxu0 0.0
    %1176 = vmatpush1.msra.mxu0 0.0
    %1177 = vmatprep.subr.mxu0 0.0
    %1178 = vmatpush1.msra.mxu0 0.0
    %1179 = vmatprep.subr.mxu0 0.0
    %1180 = vmatpush1.msra.mxu0 0.0
    %1181 = vmatprep.subr.mxu0 0.0
    %1182 = vmatpush1.msra.mxu0 0.0
    %1183 = vmatprep.subr.mxu0 0.0
    %1184 = vmatpush1.msra.mxu0 0.0
    %1185 = vmatprep.subr.mxu0 0.0
    %1186 = vmatpush1.msra.mxu0 0.0
    %1187 = vmatprep.subr.mxu0 0.0
    %1188 = vmatpush1.msra.mxu0 0.0
    %1189 = vmatprep.subr.mxu0 0.0
    %1190 = vmatpush1.msra.mxu0 0.0
    %1191 = vmatprep.subr.mxu0 0.0
    %1192 = vmatpush1.msra.mxu0 0.0
    %1193 = vmatprep.subr.mxu0 0.0
    %1194 = vmatpush1.msra.mxu0 0.0
    %1195 = vmatprep.subr.mxu0 0.0
    %1196 = vmatpush1.msra.mxu0 0.0
    %1197 = vmatprep.subr.mxu0 0.0
    %1198 = vmatpush1.msra.mxu0 0.0
    %1199 = vmatprep.subr.mxu0 0.0
    %1200 = vmatpush1.msra.mxu0 0.0
    %1201 = vmatprep.subr.mxu0 0.0
    %1202 = vmatpush1.msra.mxu0 0.0
    %1203 = vmatprep.subr.mxu0 0.0
    %1204 = vmatpush1.msra.mxu0 0.0
    %1205 = vmatprep.mubr.f32.mxu0 0.0
    %1206 = vmatmul.mubr.f32.gmra.mrb[0].mxu0 %v1137
    %v1207 = vpop.f32.mrb[0].mxu0
    %v1208 = vadd.f32 0.0, %v1207
    %v1209 = vpop.f32.mrb[0].mxu0
    %v1210 = vadd.f32 0.0, %v1209
    %1211 = vmatprep.mubr.f32.mxu0 0.0
    %1212 = vmatmul.mubr.f32.gmra.mrb[0].mxu0 %v1139
    %v1213 = vpop.f32.mrb[0].mxu0
    %v1214 = vadd.f32 0.0, %v1213
    %v1215 = vpop.f32.mrb[0].mxu0
    %v1216 = vadd.f32 0.0, %v1215
    %1217 = vdwg.mxu0
    %v1218 = vsel %vm28, %v1208, %v1210
    %v1219 = vsel %vm29, %v1214, %v1216
    %v1220 = vadd.f32 %v1127, %v1218
    %v1221 = vadd.f32 %v1128, %v1219
    %v1222 = vxor.u32 %v1220, 2147483648
    %v1223 = vxor.u32 %v1221, 2147483648
    %v1224 = vmul.f32 %v1222, 1.442695
    %v1225 = vpow.pop %v1224
    %v1226 = vmul.f32 %v1223, 1.442695
    %v1227 = vpow.pop %v1226
    %v1228 = vadd.f32 %v1225, 1.0
    %v1229 = vadd.f32 %v1227, 1.0
    %v1230 = vrcp.pop %v1228
    %v1231 = vmul.f32 1.0, %v1230
    %v1232 = vrcp.pop %v1229
    %v1233 = vmul.f32 1.0, %v1232
    %v1234 = vtanh.pop %v1220
    %v1235 = vtanh.pop %v1221
    %v1236 = vmul.f32 %v1231, %v1103
    %v1237 = vmul.f32 %v1233, %v1104
    %1240 = vrot.lane.b32.xlu0 %v1234, 32
    %v1241 = vpop.permute.xlu0 %1240
    %1242 = vrot.lane.b32.xlu0 %v1235, 32
    %v1243 = vpop.permute.xlu0 %1242
    %v1246 = vmul.f32 %v1231, %v1241
    %v1247 = vmul.f32 %v1233, %v1243
    %1250 = vrot.lane.b32.xlu0 %v1246, 32
    %v1251 = vpop.permute.xlu0 %1250
    %1252 = vrot.lane.b32.xlu0 %v1247, 32
    %v1253 = vpop.permute.xlu0 %1252
    %v1256 = vadd.f32 %v1236, %v1251
    %v1257 = vadd.f32 %v1237, %v1253
    %v1258 = vtanh.pop %v1256
    %v1259 = vtanh.pop %v1257
    %1262 = vrot.lane.b32.xlu0 %v1258, 32
    %v1263 = vpop.permute.xlu0 %1262
    %1264 = vrot.lane.b32.xlu0 %v1259, 32
    %v1265 = vpop.permute.xlu0 %1264
    %v1268 = vmul.f32 %v1231, %v1263
    %v1269 = vmul.f32 %v1233, %v1265
    %1271 = vrot.lane.b32.xlu0 %v1268, 64
    %v1272 = vpop.permute.xlu0 %1271
    %1274 = vst.msk [vmem:[#allocation3 + $0x30] sm:$0xff] %vm219, %v1272
    %1276 = vrot.lane.b32.xlu0 %v1269, 64
    %v1277 = vpop.permute.xlu0 %1276
    %1279 = vst.msk [vmem:[#allocation4 + $0x8] sm:$0xff] %vm219, %v1277
    %v1280 = vld [vmem:[#allocation2 + $0x70] sm:$0xff]
    %v1281 = vld [vmem:[#allocation2 + $0x8] sm:$0xff]
    %v1282 = vld [vmem:[#allocation5 + $0x20] sm:$0xff]
    %v1283 = vld [vmem:[#allocation5 + $0x28] sm:$0xff]
    %v1284 = vld [vmem:[#allocation5 + $0x30] sm:$0xff]
    %v1285 = vld [vmem:[#allocation5 + $0x38] sm:$0xff]
    %v1286 = vld [vmem:[#allocation5 + $0x40] sm:$0xff]
    %v1287 = vld [vmem:[#allocation5 + $0x48] sm:$0xff]
    %v1288 = vld [vmem:[#allocation5 + $0x50] sm:$0xff]
    %v1289 = vld [vmem:[#allocation5 + $0x58] sm:$0xff]
    %v1290 = vsel %vm219, %v1272, 0
    %v1292 = vsel %vm219, %v1277, 0
    %1294 = vmatprep.subr.mxu0 %v1283
    %1295 = vmatpush1.msra.mxu0 %v1282
    %1296 = vmatprep.subr.mxu0 %v1285
    %1297 = vmatpush1.msra.mxu0 %v1284
    %1298 = vmatprep.subr.mxu0 %v1287
    %1299 = vmatpush1.msra.mxu0 %v1286
    %1300 = vmatprep.subr.mxu0 %v1289
    %1301 = vmatpush1.msra.mxu0 %v1288
    %1302 = vmatprep.subr.mxu0 0.0
    %1303 = vmatpush1.msra.mxu0 0.0
    %1304 = vmatprep.subr.mxu0 0.0
    %1305 = vmatpush1.msra.mxu0 0.0
    %1306 = vmatprep.subr.mxu0 0.0
    %1307 = vmatpush1.msra.mxu0 0.0
    %1308 = vmatprep.subr.mxu0 0.0
    %1309 = vmatpush1.msra.mxu0 0.0
    %1310 = vmatprep.subr.mxu0 0.0
    %1311 = vmatpush1.msra.mxu0 0.0
    %1312 = vmatprep.subr.mxu0 0.0
    %1313 = vmatpush1.msra.mxu0 0.0
    %1314 = vmatprep.subr.mxu0 0.0
    %1315 = vmatpush1.msra.mxu0 0.0
    %1316 = vmatprep.subr.mxu0 0.0
    %1317 = vmatpush1.msra.mxu0 0.0
    %1318 = vmatprep.subr.mxu0 0.0
    %1319 = vmatpush1.msra.mxu0 0.0
    %1320 = vmatprep.subr.mxu0 0.0
    %1321 = vmatpush1.msra.mxu0 0.0
    %1322 = vmatprep.subr.mxu0 0.0
    %1323 = vmatpush1.msra.mxu0 0.0
    %1324 = vmatprep.subr.mxu0 0.0
    %1325 = vmatpush1.msra.mxu0 0.0
    %1326 = vmatprep.subr.mxu0 0.0
    %1327 = vmatpush1.msra.mxu0 0.0
    %1328 = vmatprep.subr.mxu0 0.0
    %1329 = vmatpush1.msra.mxu0 0.0
    %1330 = vmatprep.subr.mxu0 0.0
    %1331 = vmatpush1.msra.mxu0 0.0
    %1332 = vmatprep.subr.mxu0 0.0
    %1333 = vmatpush1.msra.mxu0 0.0
    %1334 = vmatprep.subr.mxu0 0.0
    %1335 = vmatpush1.msra.mxu0 0.0
    %1336 = vmatprep.subr.mxu0 0.0
    %1337 = vmatpush1.msra.mxu0 0.0
    %1338 = vmatprep.subr.mxu0 0.0
    %1339 = vmatpush1.msra.mxu0 0.0
    %1340 = vmatprep.subr.mxu0 0.0
    %1341 = vmatpush1.msra.mxu0 0.0
    %1342 = vmatprep.subr.mxu0 0.0
    %1343 = vmatpush1.msra.mxu0 0.0
    %1344 = vmatprep.subr.mxu0 0.0
    %1345 = vmatpush1.msra.mxu0 0.0
    %1346 = vmatprep.subr.mxu0 0.0
    %1347 = vmatpush1.msra.mxu0 0.0
    %1348 = vmatprep.subr.mxu0 0.0
    %1349 = vmatpush1.msra.mxu0 0.0
    %1350 = vmatprep.subr.mxu0 0.0
    %1351 = vmatpush1.msra.mxu0 0.0
    %1352 = vmatprep.subr.mxu0 0.0
    %1353 = vmatpush1.msra.mxu0 0.0
    %1354 = vmatprep.subr.mxu0 0.0
    %1355 = vmatpush1.msra.mxu0 0.0
    %1356 = vmatprep.subr.mxu0 0.0
    %1357 = vmatpush1.msra.mxu0 0.0
    %1358 = vmatprep.mubr.f32.mxu0 0.0
    %1359 = vmatmul.mubr.f32.gmra.mrb[0].mxu0 %v1290
    %v1360 = vpop.f32.mrb[0].mxu0
    %v1361 = vadd.f32 0.0, %v1360
    %v1362 = vpop.f32.mrb[0].mxu0
    %v1363 = vadd.f32 0.0, %v1362
    %1364 = vmatprep.mubr.f32.mxu0 0.0
    %1365 = vmatmul.mubr.f32.gmra.mrb[0].mxu0 %v1292
    %v1366 = vpop.f32.mrb[0].mxu0
    %v1367 = vadd.f32 0.0, %v1366
    %v1368 = vpop.f32.mrb[0].mxu0
    %v1369 = vadd.f32 0.0, %v1368
    %1370 = vdwg.mxu0
    %v1371 = vsel %vm28, %v1361, %v1363
    %v1372 = vsel %vm29, %v1367, %v1369
    %v1373 = vadd.f32 %v1280, %v1371
    %v1374 = vadd.f32 %v1281, %v1372
    %v1375 = vxor.u32 %v1373, 2147483648
    %v1376 = vxor.u32 %v1374, 2147483648
    %v1377 = vmul.f32 %v1375, 1.442695
    %v1378 = vpow.pop %v1377
    %v1379 = vmul.f32 %v1376, 1.442695
    %v1380 = vpow.pop %v1379
    %v1381 = vadd.f32 %v1378, 1.0
    %v1382 = vadd.f32 %v1380, 1.0
    %v1383 = vrcp.pop %v1381
    %v1384 = vmul.f32 1.0, %v1383
    %v1385 = vrcp.pop %v1382
    %v1386 = vmul.f32 1.0, %v1385
    %v1387 = vtanh.pop %v1373
    %v1388 = vtanh.pop %v1374
    %v1389 = vmul.f32 %v1384, %v1256
    %v1390 = vmul.f32 %v1386, %v1257
    %1393 = vrot.lane.b32.xlu0 %v1387, 32
    %v1394 = vpop.permute.xlu0 %1393
    %1395 = vrot.lane.b32.xlu0 %v1388, 32
    %v1396 = vpop.permute.xlu0 %1395
    %v1399 = vmul.f32 %v1384, %v1394
    %v1400 = vmul.f32 %v1386, %v1396
    %1403 = vrot.lane.b32.xlu0 %v1399, 32
    %v1404 = vpop.permute.xlu0 %1403
    %1405 = vrot.lane.b32.xlu0 %v1400, 32
    %v1406 = vpop.permute.xlu0 %1405
    %v1409 = vadd.f32 %v1389, %v1404
    %v1410 = vadd.f32 %v1390, %v1406
    %v1411 = vtanh.pop %v1409
    %v1412 = vtanh.pop %v1410
    %1415 = vrot.lane.b32.xlu0 %v1411, 32
    %v1416 = vpop.permute.xlu0 %1415
    %1417 = vrot.lane.b32.xlu0 %v1412, 32
    %v1418 = vpop.permute.xlu0 %1417
    %v1421 = vmul.f32 %v1384, %v1416
    %v1422 = vmul.f32 %v1386, %v1418
    %1424 = vrot.lane.b32.xlu0 %v1421, 64
    %v1425 = vpop.permute.xlu0 %1424
    %1427 = vst.msk [vmem:[#allocation3 + $0x38] sm:$0xff] %vm219, %v1425
    %1429 = vrot.lane.b32.xlu0 %v1422, 64
    %v1430 = vpop.permute.xlu0 %1429
    %1432 = vst.msk [vmem:[#allocation4] sm:$0xff] %vm219, %v1430
    %v1433 = vld [vmem:[#allocation3] sm:$0xff]
    %v1434 = vld [vmem:[#allocation3 + $0x8] sm:$0xff]
    %v1435 = vld [vmem:[#allocation3 + $0x10] sm:$0xff]
    %v1436 = vld [vmem:[#allocation3 + $0x18] sm:$0xff]
    %v1437 = vld [vmem:[#allocation3 + $0x20] sm:$0xff]
    %v1438 = vld [vmem:[#allocation3 + $0x28] sm:$0xff]
    %v1439 = vld [vmem:[#allocation3 + $0x30] sm:$0xff]
    %v1440 = vld [vmem:[#allocation3 + $0x38] sm:$0xff]
    %v1441 = vld [vmem:[#allocation5 + $0x70] sm:$0xff]
    %v1442 = vld [vmem:[#allocation5 + $0x78] sm:$0xff]
    %v1443 = vld [vmem:[#allocation5 + $0x80] sm:$0xff]
    %v1444 = vld [vmem:[#allocation5 + $0x88] sm:$0xff]
    %v1445 = vld [vmem:[#allocation5 + $0x90] sm:$0xff]
    %v1446 = vld [vmem:[#allocation5 + $0x98] sm:$0xff]
    %v1447 = vld [vmem:[#allocation5 + $0xa0] sm:$0xff]
    %v1448 = vld [vmem:[#allocation5 + $0xa8] sm:$0xff]
    %v1449 = vld [vmem:[#allocation4] sm:$0xff]
    %v1450 = vld [vmem:[#allocation4 + $0x8] sm:$0xff]
    %v1451 = vld [vmem:[#allocation4 + $0x10] sm:$0xff]
    %v1452 = vld [vmem:[#allocation4 + $0x18] sm:$0xff]
    %v1453 = vld [vmem:[#allocation4 + $0x20] sm:$0xff]
    %v1454 = vld [vmem:[#allocation4 + $0x28] sm:$0xff]
    %v1455 = vld [vmem:[#allocation4 + $0x30] sm:$0xff]
    %v1456 = vld [vmem:[#allocation4 + $0x38] sm:$0xff]
    %v1457 = vld [vmem:[#allocation5 + $0xb0] sm:$0xff]
    %v1458 = vld [vmem:[#allocation5 + $0xb8] sm:$0xff]
    %v1459 = vld [vmem:[#allocation5 + $0xc0] sm:$0xff]
    %v1460 = vld [vmem:[#allocation5 + $0xc8] sm:$0xff]
    %v1461 = vld [vmem:[#allocation5 + $0xd0] sm:$0xff]
    %v1462 = vld [vmem:[#allocation5 + $0xd8] sm:$0xff]
    %v1463 = vld [vmem:[#allocation5 + $0xe0] sm:$0xff]
    %v1464 = vld [vmem:[#allocation5 + $0xe8] sm:$0xff]
    %v1466 = vsel %vm219, %v1449, 0
    %v1469 = vsel %vm219, %v1450, 0
    %v1472 = vsel %vm219, %v1451, 0
    %v1475 = vsel %vm219, %v1452, 0
    %v1478 = vsel %vm219, %v1453, 0
    %v1481 = vsel %vm219, %v1454, 0
    %v1484 = vsel %vm219, %v1455, 0
    %v1487 = vsel %vm219, %v1456, 0
    %1489 = vmatprep.subr.mxu0 %v1458
    %1490 = vmatpush1.msra.mxu0 %v1457
    %1491 = vmatprep.subr.mxu0 %v1460
    %1492 = vmatpush1.msra.mxu0 %v1459
    %1493 = vmatprep.subr.mxu0 %v1462
    %1494 = vmatpush1.msra.mxu0 %v1461
    %1495 = vmatprep.subr.mxu0 %v1464
    %1496 = vmatpush1.msra.mxu0 %v1463
    %1497 = vmatprep.subr.mxu0 0.0
    %1498 = vmatpush1.msra.mxu0 0.0
    %1499 = vmatprep.subr.mxu0 0.0
    %1500 = vmatpush1.msra.mxu0 0.0
    %1501 = vmatprep.subr.mxu0 0.0
    %1502 = vmatpush1.msra.mxu0 0.0
    %1503 = vmatprep.subr.mxu0 0.0
    %1504 = vmatpush1.msra.mxu0 0.0
    %1505 = vmatprep.subr.mxu0 0.0
    %1506 = vmatpush1.msra.mxu0 0.0
    %1507 = vmatprep.subr.mxu0 0.0
    %1508 = vmatpush1.msra.mxu0 0.0
    %1509 = vmatprep.subr.mxu0 0.0
    %1510 = vmatpush1.msra.mxu0 0.0
    %1511 = vmatprep.subr.mxu0 0.0
    %1512 = vmatpush1.msra.mxu0 0.0
    %1513 = vmatprep.subr.mxu0 0.0
    %1514 = vmatpush1.msra.mxu0 0.0
    %1515 = vmatprep.subr.mxu0 0.0
    %1516 = vmatpush1.msra.mxu0 0.0
    %1517 = vmatprep.subr.mxu0 0.0
    %1518 = vmatpush1.msra.mxu0 0.0
    %1519 = vmatprep.subr.mxu0 0.0
    %1520 = vmatpush1.msra.mxu0 0.0
    %1521 = vmatprep.subr.mxu0 0.0
    %1522 = vmatpush1.msra.mxu0 0.0
    %1523 = vmatprep.subr.mxu0 0.0
    %1524 = vmatpush1.msra.mxu0 0.0
    %1525 = vmatprep.subr.mxu0 0.0
    %1526 = vmatpush1.msra.mxu0 0.0
    %1527 = vmatprep.subr.mxu0 0.0
    %1528 = vmatpush1.msra.mxu0 0.0
    %1529 = vmatprep.subr.mxu0 0.0
    %1530 = vmatpush1.msra.mxu0 0.0
    %1531 = vmatprep.subr.mxu0 0.0
    %1532 = vmatpush1.msra.mxu0 0.0
    %1533 = vmatprep.subr.mxu0 0.0
    %1534 = vmatpush1.msra.mxu0 0.0
    %1535 = vmatprep.subr.mxu0 0.0
    %1536 = vmatpush1.msra.mxu0 0.0
    %1537 = vmatprep.subr.mxu0 0.0
    %1538 = vmatpush1.msra.mxu0 0.0
    %1539 = vmatprep.subr.mxu0 0.0
    %1540 = vmatpush1.msra.mxu0 0.0
    %1541 = vmatprep.subr.mxu0 0.0
    %1542 = vmatpush1.msra.mxu0 0.0
    %1543 = vmatprep.subr.mxu0 0.0
    %1544 = vmatpush1.msra.mxu0 0.0
    %1545 = vmatprep.subr.mxu0 0.0
    %1546 = vmatpush1.msra.mxu0 0.0
    %1547 = vmatprep.subr.mxu0 0.0
    %1548 = vmatpush1.msra.mxu0 0.0
    %1549 = vmatprep.subr.mxu0 0.0
    %1550 = vmatpush1.msra.mxu0 0.0
    %1551 = vmatprep.subr.mxu0 0.0
    %1552 = vmatpush1.msra.mxu0 0.0
    %1553 = vmatprep.mubr.f32.mxu0 0.0
    %1554 = vmatmul.mubr.f32.gmra.mrb[0].mxu0 %v1466
    %v1555 = vpop.f32.mrb[0].mxu0
    %v1556 = vadd.f32 0.0, %v1555
    %v1557 = vpop.f32.mrb[0].mxu0
    %v1558 = vadd.f32 0.0, %v1557
    %1559 = vmatprep.mubr.f32.mxu0 0.0
    %1560 = vmatmul.mubr.f32.gmra.mrb[0].mxu0 %v1469
    %v1561 = vpop.f32.mrb[0].mxu0
    %v1562 = vadd.f32 0.0, %v1561
    %v1563 = vpop.f32.mrb[0].mxu0
    %v1564 = vadd.f32 0.0, %v1563
    %1565 = vmatprep.mubr.f32.mxu0 0.0
    %1566 = vmatmul.mubr.f32.gmra.mrb[0].mxu0 %v1472
    %v1567 = vpop.f32.mrb[0].mxu0
    %v1568 = vadd.f32 0.0, %v1567
    %v1569 = vpop.f32.mrb[0].mxu0
    %v1570 = vadd.f32 0.0, %v1569
    %1571 = vmatprep.mubr.f32.mxu0 0.0
    %1572 = vmatmul.mubr.f32.gmra.mrb[0].mxu0 %v1475
    %v1573 = vpop.f32.mrb[0].mxu0
    %v1574 = vadd.f32 0.0, %v1573
    %v1575 = vpop.f32.mrb[0].mxu0
    %v1576 = vadd.f32 0.0, %v1575
    %1577 = vmatprep.mubr.f32.mxu0 0.0
    %1578 = vmatmul.mubr.f32.gmra.mrb[0].mxu0 %v1478
    %v1579 = vpop.f32.mrb[0].mxu0
    %v1580 = vadd.f32 0.0, %v1579
    %v1581 = vpop.f32.mrb[0].mxu0
    %v1582 = vadd.f32 0.0, %v1581
    %1583 = vmatprep.mubr.f32.mxu0 0.0
    %1584 = vmatmul.mubr.f32.gmra.mrb[0].mxu0 %v1481
    %v1585 = vpop.f32.mrb[0].mxu0
    %v1586 = vadd.f32 0.0, %v1585
    %v1587 = vpop.f32.mrb[0].mxu0
    %v1588 = vadd.f32 0.0, %v1587
    %1589 = vmatprep.mubr.f32.mxu0 0.0
    %1590 = vmatmul.mubr.f32.gmra.mrb[0].mxu0 %v1484
    %v1591 = vpop.f32.mrb[0].mxu0
    %v1592 = vadd.f32 0.0, %v1591
    %v1593 = vpop.f32.mrb[0].mxu0
    %v1594 = vadd.f32 0.0, %v1593
    %1595 = vmatprep.mubr.f32.mxu0 0.0
    %1596 = vmatmul.mubr.f32.gmra.mrb[0].mxu0 %v1487
    %v1597 = vpop.f32.mrb[0].mxu0
    %v1598 = vadd.f32 0.0, %v1597
    %v1599 = vpop.f32.mrb[0].mxu0
    %v1600 = vadd.f32 0.0, %v1599
    %1601 = vdwg.mxu0
    %v1603 = vsel %vm219, %v1433, 0
    %v1606 = vsel %vm219, %v1434, 0
    %v1609 = vsel %vm219, %v1435, 0
    %v1612 = vsel %vm219, %v1436, 0
    %v1615 = vsel %vm219, %v1437, 0
    %v1618 = vsel %vm219, %v1438, 0
    %v1621 = vsel %vm219, %v1439, 0
    %v1624 = vsel %vm219, %v1440, 0
    %1626 = vmatprep.subr.mxu0 %v1442
    %1627 = vmatpush1.msra.mxu0 %v1441
    %1628 = vmatprep.subr.mxu0 %v1444
    %1629 = vmatpush1.msra.mxu0 %v1443
    %1630 = vmatprep.subr.mxu0 %v1446
    %1631 = vmatpush1.msra.mxu0 %v1445
    %1632 = vmatprep.subr.mxu0 %v1448
    %1633 = vmatpush1.msra.mxu0 %v1447
    %1634 = vmatprep.subr.mxu0 0.0
    %1635 = vmatpush1.msra.mxu0 0.0
    %1636 = vmatprep.subr.mxu0 0.0
    %1637 = vmatpush1.msra.mxu0 0.0
    %1638 = vmatprep.subr.mxu0 0.0
    %1639 = vmatpush1.msra.mxu0 0.0
    %1640 = vmatprep.subr.mxu0 0.0
    %1641 = vmatpush1.msra.mxu0 0.0
    %1642 = vmatprep.subr.mxu0 0.0
    %1643 = vmatpush1.msra.mxu0 0.0
    %1644 = vmatprep.subr.mxu0 0.0
    %1645 = vmatpush1.msra.mxu0 0.0
    %1646 = vmatprep.subr.mxu0 0.0
    %1647 = vmatpush1.msra.mxu0 0.0
    %1648 = vmatprep.subr.mxu0 0.0
    %1649 = vmatpush1.msra.mxu0 0.0
    %1650 = vmatprep.subr.mxu0 0.0
    %1651 = vmatpush1.msra.mxu0 0.0
    %1652 = vmatprep.subr.mxu0 0.0
    %1653 = vmatpush1.msra.mxu0 0.0
    %1654 = vmatprep.subr.mxu0 0.0
    %1655 = vmatpush1.msra.mxu0 0.0
    %1656 = vmatprep.subr.mxu0 0.0
    %1657 = vmatpush1.msra.mxu0 0.0
    %1658 = vmatprep.subr.mxu0 0.0
    %1659 = vmatpush1.msra.mxu0 0.0
    %1660 = vmatprep.subr.mxu0 0.0
    %1661 = vmatpush1.msra.mxu0 0.0
    %1662 = vmatprep.subr.mxu0 0.0
    %1663 = vmatpush1.msra.mxu0 0.0
    %1664 = vmatprep.subr.mxu0 0.0
    %1665 = vmatpush1.msra.mxu0 0.0
    %1666 = vmatprep.subr.mxu0 0.0
    %1667 = vmatpush1.msra.mxu0 0.0
    %1668 = vmatprep.subr.mxu0 0.0
    %1669 = vmatpush1.msra.mxu0 0.0
    %1670 = vmatprep.subr.mxu0 0.0
    %1671 = vmatpush1.msra.mxu0 0.0
    %1672 = vmatprep.subr.mxu0 0.0
    %1673 = vmatpush1.msra.mxu0 0.0
    %1674 = vmatprep.subr.mxu0 0.0
    %1675 = vmatpush1.msra.mxu0 0.0
    %1676 = vmatprep.subr.mxu0 0.0
    %1677 = vmatpush1.msra.mxu0 0.0
    %1678 = vmatprep.subr.mxu0 0.0
    %1679 = vmatpush1.msra.mxu0 0.0
    %1680 = vmatprep.subr.mxu0 0.0
    %1681 = vmatpush1.msra.mxu0 0.0
    %1682 = vmatprep.subr.mxu0 0.0
    %1683 = vmatpush1.msra.mxu0 0.0
    %1684 = vmatprep.subr.mxu0 0.0
    %1685 = vmatpush1.msra.mxu0 0.0
    %1686 = vmatprep.subr.mxu0 0.0
    %1687 = vmatpush1.msra.mxu0 0.0
    %1688 = vmatprep.subr.mxu0 0.0
    %1689 = vmatpush1.msra.mxu0 0.0
    %1690 = vmatprep.mubr.f32.mxu0 0.0
    %1691 = vmatmul.mubr.f32.gmra.mrb[0].mxu0 %v1603
    %v1692 = vpop.f32.mrb[0].mxu0
    %v1693 = vadd.f32 %v1556, %v1692
    %v1694 = vpop.f32.mrb[0].mxu0
    %v1695 = vadd.f32 %v1558, %v1694
    %1696 = vmatprep.mubr.f32.mxu0 0.0
    %1697 = vmatmul.mubr.f32.gmra.mrb[0].mxu0 %v1606
    %v1698 = vpop.f32.mrb[0].mxu0
    %v1699 = vadd.f32 %v1562, %v1698
    %v1700 = vpop.f32.mrb[0].mxu0
    %v1701 = vadd.f32 %v1564, %v1700
    %1702 = vmatprep.mubr.f32.mxu0 0.0
    %1703 = vmatmul.mubr.f32.gmra.mrb[0].mxu0 %v1609
    %v1704 = vpop.f32.mrb[0].mxu0
    %v1705 = vadd.f32 %v1568, %v1704
    %v1706 = vpop.f32.mrb[0].mxu0
    %v1707 = vadd.f32 %v1570, %v1706
    %1708 = vmatprep.mubr.f32.mxu0 0.0
    %1709 = vmatmul.mubr.f32.gmra.mrb[0].mxu0 %v1612
    %v1710 = vpop.f32.mrb[0].mxu0
    %v1711 = vadd.f32 %v1574, %v1710
    %v1712 = vpop.f32.mrb[0].mxu0
    %v1713 = vadd.f32 %v1576, %v1712
    %1714 = vmatprep.mubr.f32.mxu0 0.0
    %1715 = vmatmul.mubr.f32.gmra.mrb[0].mxu0 %v1615
    %v1716 = vpop.f32.mrb[0].mxu0
    %v1717 = vadd.f32 %v1580, %v1716
    %v1718 = vpop.f32.mrb[0].mxu0
    %v1719 = vadd.f32 %v1582, %v1718
    %1720 = vmatprep.mubr.f32.mxu0 0.0
    %1721 = vmatmul.mubr.f32.gmra.mrb[0].mxu0 %v1618
    %v1722 = vpop.f32.mrb[0].mxu0
    %v1723 = vadd.f32 %v1586, %v1722
    %v1724 = vpop.f32.mrb[0].mxu0
    %v1725 = vadd.f32 %v1588, %v1724
    %1726 = vmatprep.mubr.f32.mxu0 0.0
    %1727 = vmatmul.mubr.f32.gmra.mrb[0].mxu0 %v1621
    %v1728 = vpop.f32.mrb[0].mxu0
    %v1729 = vadd.f32 %v1592, %v1728
    %v1730 = vpop.f32.mrb[0].mxu0
    %v1731 = vadd.f32 %v1594, %v1730
    %1732 = vmatprep.mubr.f32.mxu0 0.0
    %1733 = vmatmul.mubr.f32.gmra.mrb[0].mxu0 %v1624
    %v1734 = vpop.f32.mrb[0].mxu0
    %v1735 = vadd.f32 %v1598, %v1734
    %v1736 = vpop.f32.mrb[0].mxu0
    %v1737 = vadd.f32 %v1600, %v1736
    %1738 = vdwg.mxu0
    %s1739 = scalar_lea.vmem [#allocation5], 304
    %v1740 = vld [vmem:[%s1739] ss:$8 sm:$0x3]
    %v1742 = vlaneseq
    %v1743 = vshrl.u32 %v1742, 7
    %v1744 = vsub.s32 0, %v1743
    %v1745 = vrot.slane %v1740, %v1744
    %v1746 = vlaneseq
    %v1747 = vshrl.u32 %v1746, 7
    %v1748 = vsub.s32 1, %v1747
    %v1749 = vrot.slane %v1740, %v1748
    %v1752 = vadd.f32 %v1693, %v1745
    %v1753 = vadd.f32 %v1695, %v1749
    %v1754 = vadd.f32 %v1699, %v1745
    %v1755 = vadd.f32 %v1701, %v1749
    %v1756 = vadd.f32 %v1705, %v1745
    %v1757 = vadd.f32 %v1707, %v1749
    %v1758 = vadd.f32 %v1711, %v1745
    %v1759 = vadd.f32 %v1713, %v1749
    %v1760 = vadd.f32 %v1717, %v1745
    %v1761 = vadd.f32 %v1719, %v1749
    %v1762 = vadd.f32 %v1723, %v1745
    %v1763 = vadd.f32 %v1725, %v1749
    %v1764 = vadd.f32 %v1729, %v1745
    %v1765 = vadd.f32 %v1731, %v1749
    %v1766 = vadd.f32 %v1735, %v1745
    %v1767 = vadd.f32 %v1737, %v1749
    %1768 = vst [vmem:[#allocation2] sm:$0xff] %v1752
    %1769 = vst [vmem:[#allocation2 + $0x8] sm:$0xff] %v1753
    %1770 = vst [vmem:[#allocation2 + $0x10] sm:$0xff] %v1754
    %1771 = vst [vmem:[#allocation2 + $0x18] sm:$0xff] %v1755
    %1772 = vst [vmem:[#allocation2 + $0x20] sm:$0xff] %v1756
    %1773 = vst [vmem:[#allocation2 + $0x28] sm:$0xff] %v1757
    %1774 = vst [vmem:[#allocation2 + $0x30] sm:$0xff] %v1758
    %1775 = vst [vmem:[#allocation2 + $0x38] sm:$0xff] %v1759
    %1776 = vst [vmem:[#allocation2 + $0x40] sm:$0xff] %v1760
    %1777 = vst [vmem:[#allocation2 + $0x48] sm:$0xff] %v1761
    %1778 = vst [vmem:[#allocation2 + $0x50] sm:$0xff] %v1762
    %1779 = vst [vmem:[#allocation2 + $0x58] sm:$0xff] %v1763
    %1780 = vst [vmem:[#allocation2 + $0x60] sm:$0xff] %v1764
    %1781 = vst [vmem:[#allocation2 + $0x68] sm:$0xff] %v1765
    %1782 = vst [vmem:[#allocation2 + $0x70] sm:$0xff] %v1766
    %1783 = vst [vmem:[#allocation2 + $0x78] sm:$0xff] %v1767
    %v1784 = vld [vmem:[#allocation2] sm:$0xff]
    %v1785 = vld [vmem:[#allocation2 + $0x78] sm:$0xff]
    %v1786 = vld [vmem:[#allocation5 + $0xf0] sm:$0xff]
    %v1787 = vld [vmem:[#allocation5 + $0xf8] sm:$0xff]
    %v1788 = vld [vmem:[#allocation5 + $0x100] sm:$0xff]
    %v1789 = vld [vmem:[#allocation5 + $0x108] sm:$0xff]
    %v1790 = vld [vmem:[#allocation5 + $0x110] sm:$0xff]
    %v1791 = vld [vmem:[#allocation5 + $0x118] sm:$0xff]
    %v1792 = vld [vmem:[#allocation5 + $0x120] sm:$0xff]
    %v1793 = vld [vmem:[#allocation5 + $0x128] sm:$0xff]
    %1794 = vmatprep.subr.mxu0 %v1787
    %1795 = vmatpush1.msra.mxu0 %v1786
    %1796 = vmatprep.subr.mxu0 %v1789
    %1797 = vmatpush1.msra.mxu0 %v1788
    %1798 = vmatprep.subr.mxu0 %v1791
    %1799 = vmatpush1.msra.mxu0 %v1790
    %1800 = vmatprep.subr.mxu0 %v1793
    %1801 = vmatpush1.msra.mxu0 %v1792
    %1802 = vmatprep.subr.mxu0 0.0
    %1803 = vmatpush1.msra.mxu0 0.0
    %1804 = vmatprep.subr.mxu0 0.0
    %1805 = vmatpush1.msra.mxu0 0.0
    %1806 = vmatprep.subr.mxu0 0.0
    %1807 = vmatpush1.msra.mxu0 0.0
    %1808 = vmatprep.subr.mxu0 0.0
    %1809 = vmatpush1.msra.mxu0 0.0
    %1810 = vmatprep.subr.mxu0 0.0
    %1811 = vmatpush1.msra.mxu0 0.0
    %1812 = vmatprep.subr.mxu0 0.0
    %1813 = vmatpush1.msra.mxu0 0.0
    %1814 = vmatprep.subr.mxu0 0.0
    %1815 = vmatpush1.msra.mxu0 0.0
    %1816 = vmatprep.subr.mxu0 0.0
    %1817 = vmatpush1.msra.mxu0 0.0
    %1818 = vmatprep.subr.mxu0 0.0
    %1819 = vmatpush1.msra.mxu0 0.0
    %1820 = vmatprep.subr.mxu0 0.0
    %1821 = vmatpush1.msra.mxu0 0.0
    %1822 = vmatprep.subr.mxu0 0.0
    %1823 = vmatpush1.msra.mxu0 0.0
    %1824 = vmatprep.subr.mxu0 0.0
    %1825 = vmatpush1.msra.mxu0 0.0
    %1826 = vmatprep.subr.mxu0 0.0
    %1827 = vmatpush1.msra.mxu0 0.0
    %1828 = vmatprep.subr.mxu0 0.0
    %1829 = vmatpush1.msra.mxu0 0.0
    %1830 = vmatprep.subr.mxu0 0.0
    %1831 = vmatpush1.msra.mxu0 0.0
    %1832 = vmatprep.subr.mxu0 0.0
    %1833 = vmatpush1.msra.mxu0 0.0
    %1834 = vmatprep.subr.mxu0 0.0
    %1835 = vmatpush1.msra.mxu0 0.0
    %1836 = vmatprep.subr.mxu0 0.0
    %1837 = vmatpush1.msra.mxu0 0.0
    %1838 = vmatprep.subr.mxu0 0.0
    %1839 = vmatpush1.msra.mxu0 0.0
    %1840 = vmatprep.subr.mxu0 0.0
    %1841 = vmatpush1.msra.mxu0 0.0
    %1842 = vmatprep.subr.mxu0 0.0
    %1843 = vmatpush1.msra.mxu0 0.0
    %1844 = vmatprep.subr.mxu0 0.0
    %1845 = vmatpush1.msra.mxu0 0.0
    %1846 = vmatprep.subr.mxu0 0.0
    %1847 = vmatpush1.msra.mxu0 0.0
    %1848 = vmatprep.subr.mxu0 0.0
    %1849 = vmatpush1.msra.mxu0 0.0
    %1850 = vmatprep.subr.mxu0 0.0
    %1851 = vmatpush1.msra.mxu0 0.0
    %1852 = vmatprep.subr.mxu0 0.0
    %1853 = vmatpush1.msra.mxu0 0.0
    %1854 = vmatprep.subr.mxu0 0.0
    %1855 = vmatpush1.msra.mxu0 0.0
    %1856 = vmatprep.subr.mxu0 0.0
    %1857 = vmatpush1.msra.mxu0 0.0
    %1858 = vmatprep.mubr.f32.mxu0 0.0
    %1859 = vmatmul.mubr.f32.gmra.mrb[0].mxu0 %v221
    %v1860 = vpop.f32.mrb[0].mxu0
    %v1861 = vadd.f32 0.0, %v1860
    %v1862 = vpop.f32.mrb[0].mxu0
    %v1863 = vadd.f32 0.0, %v1862
    %1864 = vmatprep.mubr.f32.mxu0 0.0
    %1865 = vmatmul.mubr.f32.gmra.mrb[0].mxu0 %v221
    %v1866 = vpop.f32.mrb[0].mxu0
    %v1867 = vadd.f32 0.0, %v1866
    %v1868 = vpop.f32.mrb[0].mxu0
    %v1869 = vadd.f32 0.0, %v1868
    %1870 = vdwg.mxu0
    %v1871 = vsel %vm28, %v1861, %v1863
    %v1872 = vsel %vm29, %v1867, %v1869
    %v1873 = vadd.f32 %v1784, %v1871
    %v1874 = vadd.f32 %v1785, %v1872
    %v1875 = vxor.u32 %v1873, 2147483648
    %v1876 = vxor.u32 %v1874, 2147483648
    %v1877 = vmul.f32 %v1875, 1.442695
    %v1878 = vpow.pop %v1877
    %v1879 = vmul.f32 %v1876, 1.442695
    %v1880 = vpow.pop %v1879
    %v1881 = vadd.f32 %v1878, 1.0
    %v1882 = vadd.f32 %v1880, 1.0
    %v1883 = vrcp.pop %v1881
    %v1884 = vmul.f32 1.0, %v1883
    %v1885 = vrcp.pop %v1882
    %v1886 = vmul.f32 1.0, %v1885
    %v1887 = vtanh.pop %v1873
    %v1888 = vtanh.pop %v1874
    %v1889 = vmul.f32 %v1884, 0.0
    %v1890 = vmul.f32 %v1886, 0.0
    %1893 = vrot.lane.b32.xlu0 %v1887, 32
    %v1894 = vpop.permute.xlu0 %1893
    %1895 = vrot.lane.b32.xlu0 %v1888, 32
    %v1896 = vpop.permute.xlu0 %1895
    %v1899 = vmul.f32 %v1884, %v1894
    %v1900 = vmul.f32 %v1886, %v1896
    %1903 = vrot.lane.b32.xlu0 %v1899, 32
    %v1904 = vpop.permute.xlu0 %1903
    %1905 = vrot.lane.b32.xlu0 %v1900, 32
    %v1906 = vpop.permute.xlu0 %1905
    %v1909 = vadd.f32 %v1889, %v1904
    %v1910 = vadd.f32 %v1890, %v1906
    %v1911 = vtanh.pop %v1909
    %v1912 = vtanh.pop %v1910
    %1915 = vrot.lane.b32.xlu0 %v1911, 32
    %v1916 = vpop.permute.xlu0 %1915
    %1917 = vrot.lane.b32.xlu0 %v1912, 32
    %v1918 = vpop.permute.xlu0 %1917
    %v1921 = vmul.f32 %v1884, %v1916
    %v1922 = vmul.f32 %v1886, %v1918
    %v1923 = vadd.f32 %v1921, 0.0
    %v1924 = vadd.f32 %v1922, 0.0
    %v1925 = vld [vmem:[#allocation2 + $0x10] sm:$0xff]
    %v1926 = vld [vmem:[#allocation2 + $0x68] sm:$0xff]
    %1929 = vrot.lane.b32.xlu0 %v1921, 64
    %v1930 = vpop.permute.xlu0 %1929
    %1931 = vrot.lane.b32.xlu0 %v1922, 64
    %v1932 = vpop.permute.xlu0 %1931
    %v1933 = vsel %vm219, %v1930, 0
    %v1935 = vsel %vm219, %v1932, 0
    %1937 = vmatprep.subr.mxu0 %v1787
    %1938 = vmatpush1.msra.mxu0 %v1786
    %1939 = vmatprep.subr.mxu0 %v1789
    %1940 = vmatpush1.msra.mxu0 %v1788
    %1941 = vmatprep.subr.mxu0 %v1791
    %1942 = vmatpush1.msra.mxu0 %v1790
    %1943 = vmatprep.subr.mxu0 %v1793
    %1944 = vmatpush1.msra.mxu0 %v1792
    %1945 = vmatprep.subr.mxu0 0.0
    %1946 = vmatpush1.msra.mxu0 0.0
    %1947 = vmatprep.subr.mxu0 0.0
    %1948 = vmatpush1.msra.mxu0 0.0
    %1949 = vmatprep.subr.mxu0 0.0
    %1950 = vmatpush1.msra.mxu0 0.0
    %1951 = vmatprep.subr.mxu0 0.0
    %1952 = vmatpush1.msra.mxu0 0.0
    %1953 = vmatprep.subr.mxu0 0.0
    %1954 = vmatpush1.msra.mxu0 0.0
    %1955 = vmatprep.subr.mxu0 0.0
    %1956 = vmatpush1.msra.mxu0 0.0
    %1957 = vmatprep.subr.mxu0 0.0
    %1958 = vmatpush1.msra.mxu0 0.0
    %1959 = vmatprep.subr.mxu0 0.0
    %1960 = vmatpush1.msra.mxu0 0.0
    %1961 = vmatprep.subr.mxu0 0.0
    %1962 = vmatpush1.msra.mxu0 0.0
    %1963 = vmatprep.subr.mxu0 0.0
    %1964 = vmatpush1.msra.mxu0 0.0
    %1965 = vmatprep.subr.mxu0 0.0
    %1966 = vmatpush1.msra.mxu0 0.0
    %1967 = vmatprep.subr.mxu0 0.0
    %1968 = vmatpush1.msra.mxu0 0.0
    %1969 = vmatprep.subr.mxu0 0.0
    %1970 = vmatpush1.msra.mxu0 0.0
    %1971 = vmatprep.subr.mxu0 0.0
    %1972 = vmatpush1.msra.mxu0 0.0
    %1973 = vmatprep.subr.mxu0 0.0
    %1974 = vmatpush1.msra.mxu0 0.0
    %1975 = vmatprep.subr.mxu0 0.0
    %1976 = vmatpush1.msra.mxu0 0.0
    %1977 = vmatprep.subr.mxu0 0.0
    %1978 = vmatpush1.msra.mxu0 0.0
    %1979 = vmatprep.subr.mxu0 0.0
    %1980 = vmatpush1.msra.mxu0 0.0
    %1981 = vmatprep.subr.mxu0 0.0
    %1982 = vmatpush1.msra.mxu0 0.0
    %1983 = vmatprep.subr.mxu0 0.0
    %1984 = vmatpush1.msra.mxu0 0.0
    %1985 = vmatprep.subr.mxu0 0.0
    %1986 = vmatpush1.msra.mxu0 0.0
    %1987 = vmatprep.subr.mxu0 0.0
    %1988 = vmatpush1.msra.mxu0 0.0
    %1989 = vmatprep.subr.mxu0 0.0
    %1990 = vmatpush1.msra.mxu0 0.0
    %1991 = vmatprep.subr.mxu0 0.0
    %1992 = vmatpush1.msra.mxu0 0.0
    %1993 = vmatprep.subr.mxu0 0.0
    %1994 = vmatpush1.msra.mxu0 0.0
    %1995 = vmatprep.subr.mxu0 0.0
    %1996 = vmatpush1.msra.mxu0 0.0
    %1997 = vmatprep.subr.mxu0 0.0
    %1998 = vmatpush1.msra.mxu0 0.0
    %1999 = vmatprep.subr.mxu0 0.0
    %2000 = vmatpush1.msra.mxu0 0.0
    %2001 = vmatprep.mubr.f32.mxu0 0.0
    %2002 = vmatmul.mubr.f32.gmra.mrb[0].mxu0 %v1933
    %v2003 = vpop.f32.mrb[0].mxu0
    %v2004 = vadd.f32 0.0, %v2003
    %v2005 = vpop.f32.mrb[0].mxu0
    %v2006 = vadd.f32 0.0, %v2005
    %2007 = vmatprep.mubr.f32.mxu0 0.0
    %2008 = vmatmul.mubr.f32.gmra.mrb[0].mxu0 %v1935
    %v2009 = vpop.f32.mrb[0].mxu0
    %v2010 = vadd.f32 0.0, %v2009
    %v2011 = vpop.f32.mrb[0].mxu0
    %v2012 = vadd.f32 0.0, %v2011
    %2013 = vdwg.mxu0
    %v2014 = vsel %vm28, %v2004, %v2006
    %v2015 = vsel %vm29, %v2010, %v2012
    %v2016 = vadd.f32 %v1925, %v2014
    %v2017 = vadd.f32 %v1926, %v2015
    %v2018 = vxor.u32 %v2016, 2147483648
    %v2019 = vxor.u32 %v2017, 2147483648
    %v2020 = vmul.f32 %v2018, 1.442695
    %v2021 = vpow.pop %v2020
    %v2022 = vmul.f32 %v2019, 1.442695
    %v2023 = vpow.pop %v2022
    %v2024 = vadd.f32 %v2021, 1.0
    %v2025 = vadd.f32 %v2023, 1.0
    %v2026 = vrcp.pop %v2024
    %v2027 = vmul.f32 1.0, %v2026
    %v2028 = vrcp.pop %v2025
    %v2029 = vmul.f32 1.0, %v2028
    %v2030 = vtanh.pop %v2016
    %v2031 = vtanh.pop %v2017
    %v2032 = vmul.f32 %v2027, %v1909
    %v2033 = vmul.f32 %v2029, %v1910
    %2036 = vrot.lane.b32.xlu0 %v2030, 32
    %v2037 = vpop.permute.xlu0 %2036
    %2038 = vrot.lane.b32.xlu0 %v2031, 32
    %v2039 = vpop.permute.xlu0 %2038
    %v2042 = vmul.f32 %v2027, %v2037
    %v2043 = vmul.f32 %v2029, %v2039
    %2046 = vrot.lane.b32.xlu0 %v2042, 32
    %v2047 = vpop.permute.xlu0 %2046
    %2048 = vrot.lane.b32.xlu0 %v2043, 32
    %v2049 = vpop.permute.xlu0 %2048
    %v2052 = vadd.f32 %v2032, %v2047
    %v2053 = vadd.f32 %v2033, %v2049
    %v2054 = vtanh.pop %v2052
    %v2055 = vtanh.pop %v2053
    %2058 = vrot.lane.b32.xlu0 %v2054, 32
    %v2059 = vpop.permute.xlu0 %2058
    %2060 = vrot.lane.b32.xlu0 %v2055, 32
    %v2061 = vpop.permute.xlu0 %2060
    %v2064 = vmul.f32 %v2027, %v2059
    %v2065 = vmul.f32 %v2029, %v2061
    %v2066 = vadd.f32 %v1923, %v2064
    %v2067 = vadd.f32 %v1924, %v2065
    %v2068 = vld [vmem:[#allocation2 + $0x20] sm:$0xff]
    %v2069 = vld [vmem:[#allocation2 + $0x58] sm:$0xff]
    %2072 = vrot.lane.b32.xlu0 %v2064, 64
    %v2073 = vpop.permute.xlu0 %2072
    %2074 = vrot.lane.b32.xlu0 %v2065, 64
    %v2075 = vpop.permute.xlu0 %2074
    %v2076 = vsel %vm219, %v2073, 0
    %v2078 = vsel %vm219, %v2075, 0
    %2080 = vmatprep.subr.mxu0 %v1787
    %2081 = vmatpush1.msra.mxu0 %v1786
    %2082 = vmatprep.subr.mxu0 %v1789
    %2083 = vmatpush1.msra.mxu0 %v1788
    %2084 = vmatprep.subr.mxu0 %v1791
    %2085 = vmatpush1.msra.mxu0 %v1790
    %2086 = vmatprep.subr.mxu0 %v1793
    %2087 = vmatpush1.msra.mxu0 %v1792
    %2088 = vmatprep.subr.mxu0 0.0
    %2089 = vmatpush1.msra.mxu0 0.0
    %2090 = vmatprep.subr.mxu0 0.0
    %2091 = vmatpush1.msra.mxu0 0.0
    %2092 = vmatprep.subr.mxu0 0.0
    %2093 = vmatpush1.msra.mxu0 0.0
    %2094 = vmatprep.subr.mxu0 0.0
    %2095 = vmatpush1.msra.mxu0 0.0
    %2096 = vmatprep.subr.mxu0 0.0
    %2097 = vmatpush1.msra.mxu0 0.0
    %2098 = vmatprep.subr.mxu0 0.0
    %2099 = vmatpush1.msra.mxu0 0.0
    %2100 = vmatprep.subr.mxu0 0.0
    %2101 = vmatpush1.msra.mxu0 0.0
    %2102 = vmatprep.subr.mxu0 0.0
    %2103 = vmatpush1.msra.mxu0 0.0
    %2104 = vmatprep.subr.mxu0 0.0
    %2105 = vmatpush1.msra.mxu0 0.0
    %2106 = vmatprep.subr.mxu0 0.0
    %2107 = vmatpush1.msra.mxu0 0.0
    %2108 = vmatprep.subr.mxu0 0.0
    %2109 = vmatpush1.msra.mxu0 0.0
    %2110 = vmatprep.subr.mxu0 0.0
    %2111 = vmatpush1.msra.mxu0 0.0
    %2112 = vmatprep.subr.mxu0 0.0
    %2113 = vmatpush1.msra.mxu0 0.0
    %2114 = vmatprep.subr.mxu0 0.0
    %2115 = vmatpush1.msra.mxu0 0.0
    %2116 = vmatprep.subr.mxu0 0.0
    %2117 = vmatpush1.msra.mxu0 0.0
    %2118 = vmatprep.subr.mxu0 0.0
    %2119 = vmatpush1.msra.mxu0 0.0
    %2120 = vmatprep.subr.mxu0 0.0
    %2121 = vmatpush1.msra.mxu0 0.0
    %2122 = vmatprep.subr.mxu0 0.0
    %2123 = vmatpush1.msra.mxu0 0.0
    %2124 = vmatprep.subr.mxu0 0.0
    %2125 = vmatpush1.msra.mxu0 0.0
    %2126 = vmatprep.subr.mxu0 0.0
    %2127 = vmatpush1.msra.mxu0 0.0
    %2128 = vmatprep.subr.mxu0 0.0
    %2129 = vmatpush1.msra.mxu0 0.0
    %2130 = vmatprep.subr.mxu0 0.0
    %2131 = vmatpush1.msra.mxu0 0.0
    %2132 = vmatprep.subr.mxu0 0.0
    %2133 = vmatpush1.msra.mxu0 0.0
    %2134 = vmatprep.subr.mxu0 0.0
    %2135 = vmatpush1.msra.mxu0 0.0
    %2136 = vmatprep.subr.mxu0 0.0
    %2137 = vmatpush1.msra.mxu0 0.0
    %2138 = vmatprep.subr.mxu0 0.0
    %2139 = vmatpush1.msra.mxu0 0.0
    %2140 = vmatprep.subr.mxu0 0.0
    %2141 = vmatpush1.msra.mxu0 0.0
    %2142 = vmatprep.subr.mxu0 0.0
    %2143 = vmatpush1.msra.mxu0 0.0
    %2144 = vmatprep.mubr.f32.mxu0 0.0
    %2145 = vmatmul.mubr.f32.gmra.mrb[0].mxu0 %v2076
    %v2146 = vpop.f32.mrb[0].mxu0
    %v2147 = vadd.f32 0.0, %v2146
    %v2148 = vpop.f32.mrb[0].mxu0
    %v2149 = vadd.f32 0.0, %v2148
    %2150 = vmatprep.mubr.f32.mxu0 0.0
    %2151 = vmatmul.mubr.f32.gmra.mrb[0].mxu0 %v2078
    %v2152 = vpop.f32.mrb[0].mxu0
    %v2153 = vadd.f32 0.0, %v2152
    %v2154 = vpop.f32.mrb[0].mxu0
    %v2155 = vadd.f32 0.0, %v2154
    %2156 = vdwg.mxu0
    %v2157 = vsel %vm28, %v2147, %v2149
    %v2158 = vsel %vm29, %v2153, %v2155
    %v2159 = vadd.f32 %v2068, %v2157
    %v2160 = vadd.f32 %v2069, %v2158
    %v2161 = vxor.u32 %v2159, 2147483648
    %v2162 = vxor.u32 %v2160, 2147483648
    %v2163 = vmul.f32 %v2161, 1.442695
    %v2164 = vpow.pop %v2163
    %v2165 = vmul.f32 %v2162, 1.442695
    %v2166 = vpow.pop %v2165
    %v2167 = vadd.f32 %v2164, 1.0
    %v2168 = vadd.f32 %v2166, 1.0
    %v2169 = vrcp.pop %v2167
    %v2170 = vmul.f32 1.0, %v2169
    %v2171 = vrcp.pop %v2168
    %v2172 = vmul.f32 1.0, %v2171
    %v2173 = vtanh.pop %v2159
    %v2174 = vtanh.pop %v2160
    %v2175 = vmul.f32 %v2170, %v2052
    %v2176 = vmul.f32 %v2172, %v2053
    %2179 = vrot.lane.b32.xlu0 %v2173, 32
    %v2180 = vpop.permute.xlu0 %2179
    %2181 = vrot.lane.b32.xlu0 %v2174, 32
    %v2182 = vpop.permute.xlu0 %2181
    %v2185 = vmul.f32 %v2170, %v2180
    %v2186 = vmul.f32 %v2172, %v2182
    %2189 = vrot.lane.b32.xlu0 %v2185, 32
    %v2190 = vpop.permute.xlu0 %2189
    %2191 = vrot.lane.b32.xlu0 %v2186, 32
    %v2192 = vpop.permute.xlu0 %2191
    %v2195 = vadd.f32 %v2175, %v2190
    %v2196 = vadd.f32 %v2176, %v2192
    %v2197 = vtanh.pop %v2195
    %v2198 = vtanh.pop %v2196
    %2201 = vrot.lane.b32.xlu0 %v2197, 32
    %v2202 = vpop.permute.xlu0 %2201
    %2203 = vrot.lane.b32.xlu0 %v2198, 32
    %v2204 = vpop.permute.xlu0 %2203
    %v2207 = vmul.f32 %v2170, %v2202
    %v2208 = vmul.f32 %v2172, %v2204
    %v2209 = vadd.f32 %v2066, %v2207
    %v2210 = vadd.f32 %v2067, %v2208
    %v2211 = vld [vmem:[#allocation2 + $0x30] sm:$0xff]
    %v2212 = vld [vmem:[#allocation2 + $0x48] sm:$0xff]
    %2215 = vrot.lane.b32.xlu0 %v2207, 64
    %v2216 = vpop.permute.xlu0 %2215
    %2217 = vrot.lane.b32.xlu0 %v2208, 64
    %v2218 = vpop.permute.xlu0 %2217
    %v2219 = vsel %vm219, %v2216, 0
    %v2221 = vsel %vm219, %v2218, 0
    %2223 = vmatprep.subr.mxu0 %v1787
    %2224 = vmatpush1.msra.mxu0 %v1786
    %2225 = vmatprep.subr.mxu0 %v1789
    %2226 = vmatpush1.msra.mxu0 %v1788
    %2227 = vmatprep.subr.mxu0 %v1791
    %2228 = vmatpush1.msra.mxu0 %v1790
    %2229 = vmatprep.subr.mxu0 %v1793
    %2230 = vmatpush1.msra.mxu0 %v1792
    %2231 = vmatprep.subr.mxu0 0.0
    %2232 = vmatpush1.msra.mxu0 0.0
    %2233 = vmatprep.subr.mxu0 0.0
    %2234 = vmatpush1.msra.mxu0 0.0
    %2235 = vmatprep.subr.mxu0 0.0
    %2236 = vmatpush1.msra.mxu0 0.0
    %2237 = vmatprep.subr.mxu0 0.0
    %2238 = vmatpush1.msra.mxu0 0.0
    %2239 = vmatprep.subr.mxu0 0.0
    %2240 = vmatpush1.msra.mxu0 0.0
    %2241 = vmatprep.subr.mxu0 0.0
    %2242 = vmatpush1.msra.mxu0 0.0
    %2243 = vmatprep.subr.mxu0 0.0
    %2244 = vmatpush1.msra.mxu0 0.0
    %2245 = vmatprep.subr.mxu0 0.0
    %2246 = vmatpush1.msra.mxu0 0.0
    %2247 = vmatprep.subr.mxu0 0.0
    %2248 = vmatpush1.msra.mxu0 0.0
    %2249 = vmatprep.subr.mxu0 0.0
    %2250 = vmatpush1.msra.mxu0 0.0
    %2251 = vmatprep.subr.mxu0 0.0
    %2252 = vmatpush1.msra.mxu0 0.0
    %2253 = vmatprep.subr.mxu0 0.0
    %2254 = vmatpush1.msra.mxu0 0.0
    %2255 = vmatprep.subr.mxu0 0.0
    %2256 = vmatpush1.msra.mxu0 0.0
    %2257 = vmatprep.subr.mxu0 0.0
    %2258 = vmatpush1.msra.mxu0 0.0
    %2259 = vmatprep.subr.mxu0 0.0
    %2260 = vmatpush1.msra.mxu0 0.0
    %2261 = vmatprep.subr.mxu0 0.0
    %2262 = vmatpush1.msra.mxu0 0.0
    %2263 = vmatprep.subr.mxu0 0.0
    %2264 = vmatpush1.msra.mxu0 0.0
    %2265 = vmatprep.subr.mxu0 0.0
    %2266 = vmatpush1.msra.mxu0 0.0
    %2267 = vmatprep.subr.mxu0 0.0
    %2268 = vmatpush1.msra.mxu0 0.0
    %2269 = vmatprep.subr.mxu0 0.0
    %2270 = vmatpush1.msra.mxu0 0.0
    %2271 = vmatprep.subr.mxu0 0.0
    %2272 = vmatpush1.msra.mxu0 0.0
    %2273 = vmatprep.subr.mxu0 0.0
    %2274 = vmatpush1.msra.mxu0 0.0
    %2275 = vmatprep.subr.mxu0 0.0
    %2276 = vmatpush1.msra.mxu0 0.0
    %2277 = vmatprep.subr.mxu0 0.0
    %2278 = vmatpush1.msra.mxu0 0.0
    %2279 = vmatprep.subr.mxu0 0.0
    %2280 = vmatpush1.msra.mxu0 0.0
    %2281 = vmatprep.subr.mxu0 0.0
    %2282 = vmatpush1.msra.mxu0 0.0
    %2283 = vmatprep.subr.mxu0 0.0
    %2284 = vmatpush1.msra.mxu0 0.0
    %2285 = vmatprep.subr.mxu0 0.0
    %2286 = vmatpush1.msra.mxu0 0.0
    %2287 = vmatprep.mubr.f32.mxu0 0.0
    %2288 = vmatmul.mubr.f32.gmra.mrb[0].mxu0 %v2219
    %v2289 = vpop.f32.mrb[0].mxu0
    %v2290 = vadd.f32 0.0, %v2289
    %v2291 = vpop.f32.mrb[0].mxu0
    %v2292 = vadd.f32 0.0, %v2291
    %2293 = vmatprep.mubr.f32.mxu0 0.0
    %2294 = vmatmul.mubr.f32.gmra.mrb[0].mxu0 %v2221
    %v2295 = vpop.f32.mrb[0].mxu0
    %v2296 = vadd.f32 0.0, %v2295
    %v2297 = vpop.f32.mrb[0].mxu0
    %v2298 = vadd.f32 0.0, %v2297
    %2299 = vdwg.mxu0
    %v2300 = vsel %vm28, %v2290, %v2292
    %v2301 = vsel %vm29, %v2296, %v2298
    %v2302 = vadd.f32 %v2211, %v2300
    %v2303 = vadd.f32 %v2212, %v2301
    %v2304 = vxor.u32 %v2302, 2147483648
    %v2305 = vxor.u32 %v2303, 2147483648
    %v2306 = vmul.f32 %v2304, 1.442695
    %v2307 = vpow.pop %v2306
    %v2308 = vmul.f32 %v2305, 1.442695
    %v2309 = vpow.pop %v2308
    %v2310 = vadd.f32 %v2307, 1.0
    %v2311 = vadd.f32 %v2309, 1.0
    %v2312 = vrcp.pop %v2310
    %v2313 = vmul.f32 1.0, %v2312
    %v2314 = vrcp.pop %v2311
    %v2315 = vmul.f32 1.0, %v2314
    %v2316 = vtanh.pop %v2302
    %v2317 = vtanh.pop %v2303
    %v2318 = vmul.f32 %v2313, %v2195
    %v2319 = vmul.f32 %v2315, %v2196
    %2322 = vrot.lane.b32.xlu0 %v2316, 32
    %v2323 = vpop.permute.xlu0 %2322
    %2324 = vrot.lane.b32.xlu0 %v2317, 32
    %v2325 = vpop.permute.xlu0 %2324
    %v2328 = vmul.f32 %v2313, %v2323
    %v2329 = vmul.f32 %v2315, %v2325
    %2332 = vrot.lane.b32.xlu0 %v2328, 32
    %v2333 = vpop.permute.xlu0 %2332
    %2334 = vrot.lane.b32.xlu0 %v2329, 32
    %v2335 = vpop.permute.xlu0 %2334
    %v2338 = vadd.f32 %v2318, %v2333
    %v2339 = vadd.f32 %v2319, %v2335
    %v2340 = vtanh.pop %v2338
    %v2341 = vtanh.pop %v2339
    %2344 = vrot.lane.b32.xlu0 %v2340, 32
    %v2345 = vpop.permute.xlu0 %2344
    %2346 = vrot.lane.b32.xlu0 %v2341, 32
    %v2347 = vpop.permute.xlu0 %2346
    %v2350 = vmul.f32 %v2313, %v2345
    %v2351 = vmul.f32 %v2315, %v2347
    %v2352 = vadd.f32 %v2209, %v2350
    %v2353 = vadd.f32 %v2210, %v2351
    %v2354 = vld [vmem:[#allocation2 + $0x40] sm:$0xff]
    %v2355 = vld [vmem:[#allocation2 + $0x38] sm:$0xff]
    %2358 = vrot.lane.b32.xlu0 %v2350, 64
    %v2359 = vpop.permute.xlu0 %2358
    %2360 = vrot.lane.b32.xlu0 %v2351, 64
    %v2361 = vpop.permute.xlu0 %2360
    %v2362 = vsel %vm219, %v2359, 0
    %v2364 = vsel %vm219, %v2361, 0
    %2366 = vmatprep.subr.mxu0 %v1787
    %2367 = vmatpush1.msra.mxu0 %v1786
    %2368 = vmatprep.subr.mxu0 %v1789
    %2369 = vmatpush1.msra.mxu0 %v1788
    %2370 = vmatprep.subr.mxu0 %v1791
    %2371 = vmatpush1.msra.mxu0 %v1790
    %2372 = vmatprep.subr.mxu0 %v1793
    %2373 = vmatpush1.msra.mxu0 %v1792
    %2374 = vmatprep.subr.mxu0 0.0
    %2375 = vmatpush1.msra.mxu0 0.0
    %2376 = vmatprep.subr.mxu0 0.0
    %2377 = vmatpush1.msra.mxu0 0.0
    %2378 = vmatprep.subr.mxu0 0.0
    %2379 = vmatpush1.msra.mxu0 0.0
    %2380 = vmatprep.subr.mxu0 0.0
    %2381 = vmatpush1.msra.mxu0 0.0
    %2382 = vmatprep.subr.mxu0 0.0
    %2383 = vmatpush1.msra.mxu0 0.0
    %2384 = vmatprep.subr.mxu0 0.0
    %2385 = vmatpush1.msra.mxu0 0.0
    %2386 = vmatprep.subr.mxu0 0.0
    %2387 = vmatpush1.msra.mxu0 0.0
    %2388 = vmatprep.subr.mxu0 0.0
    %2389 = vmatpush1.msra.mxu0 0.0
    %2390 = vmatprep.subr.mxu0 0.0
    %2391 = vmatpush1.msra.mxu0 0.0
    %2392 = vmatprep.subr.mxu0 0.0
    %2393 = vmatpush1.msra.mxu0 0.0
    %2394 = vmatprep.subr.mxu0 0.0
    %2395 = vmatpush1.msra.mxu0 0.0
    %2396 = vmatprep.subr.mxu0 0.0
    %2397 = vmatpush1.msra.mxu0 0.0
    %2398 = vmatprep.subr.mxu0 0.0
    %2399 = vmatpush1.msra.mxu0 0.0
    %2400 = vmatprep.subr.mxu0 0.0
    %2401 = vmatpush1.msra.mxu0 0.0
    %2402 = vmatprep.subr.mxu0 0.0
    %2403 = vmatpush1.msra.mxu0 0.0
    %2404 = vmatprep.subr.mxu0 0.0
    %2405 = vmatpush1.msra.mxu0 0.0
    %2406 = vmatprep.subr.mxu0 0.0
    %2407 = vmatpush1.msra.mxu0 0.0
    %2408 = vmatprep.subr.mxu0 0.0
    %2409 = vmatpush1.msra.mxu0 0.0
    %2410 = vmatprep.subr.mxu0 0.0
    %2411 = vmatpush1.msra.mxu0 0.0
    %2412 = vmatprep.subr.mxu0 0.0
    %2413 = vmatpush1.msra.mxu0 0.0
    %2414 = vmatprep.subr.mxu0 0.0
    %2415 = vmatpush1.msra.mxu0 0.0
    %2416 = vmatprep.subr.mxu0 0.0
    %2417 = vmatpush1.msra.mxu0 0.0
    %2418 = vmatprep.subr.mxu0 0.0
    %2419 = vmatpush1.msra.mxu0 0.0
    %2420 = vmatprep.subr.mxu0 0.0
    %2421 = vmatpush1.msra.mxu0 0.0
    %2422 = vmatprep.subr.mxu0 0.0
    %2423 = vmatpush1.msra.mxu0 0.0
    %2424 = vmatprep.subr.mxu0 0.0
    %2425 = vmatpush1.msra.mxu0 0.0
    %2426 = vmatprep.subr.mxu0 0.0
    %2427 = vmatpush1.msra.mxu0 0.0
    %2428 = vmatprep.subr.mxu0 0.0
    %2429 = vmatpush1.msra.mxu0 0.0
    %2430 = vmatprep.mubr.f32.mxu0 0.0
    %2431 = vmatmul.mubr.f32.gmra.mrb[0].mxu0 %v2362
    %v2432 = vpop.f32.mrb[0].mxu0
    %v2433 = vadd.f32 0.0, %v2432
    %v2434 = vpop.f32.mrb[0].mxu0
    %v2435 = vadd.f32 0.0, %v2434
    %2436 = vmatprep.mubr.f32.mxu0 0.0
    %2437 = vmatmul.mubr.f32.gmra.mrb[0].mxu0 %v2364
    %v2438 = vpop.f32.mrb[0].mxu0
    %v2439 = vadd.f32 0.0, %v2438
    %v2440 = vpop.f32.mrb[0].mxu0
    %v2441 = vadd.f32 0.0, %v2440
    %2442 = vdwg.mxu0
    %v2443 = vsel %vm28, %v2433, %v2435
    %v2444 = vsel %vm29, %v2439, %v2441
    %v2445 = vadd.f32 %v2354, %v2443
    %v2446 = vadd.f32 %v2355, %v2444
    %v2447 = vxor.u32 %v2445, 2147483648
    %v2448 = vxor.u32 %v2446, 2147483648
    %v2449 = vmul.f32 %v2447, 1.442695
    %v2450 = vpow.pop %v2449
    %v2451 = vmul.f32 %v2448, 1.442695
    %v2452 = vpow.pop %v2451
    %v2453 = vadd.f32 %v2450, 1.0
    %v2454 = vadd.f32 %v2452, 1.0
    %v2455 = vrcp.pop %v2453
    %v2456 = vmul.f32 1.0, %v2455
    %v2457 = vrcp.pop %v2454
    %v2458 = vmul.f32 1.0, %v2457
    %v2459 = vtanh.pop %v2445
    %v2460 = vtanh.pop %v2446
    %v2461 = vmul.f32 %v2456, %v2338
    %v2462 = vmul.f32 %v2458, %v2339
    %2465 = vrot.lane.b32.xlu0 %v2459, 32
    %v2466 = vpop.permute.xlu0 %2465
    %2467 = vrot.lane.b32.xlu0 %v2460, 32
    %v2468 = vpop.permute.xlu0 %2467
    %v2471 = vmul.f32 %v2456, %v2466
    %v2472 = vmul.f32 %v2458, %v2468
    %2475 = vrot.lane.b32.xlu0 %v2471, 32
    %v2476 = vpop.permute.xlu0 %2475
    %2477 = vrot.lane.b32.xlu0 %v2472, 32
    %v2478 = vpop.permute.xlu0 %2477
    %v2481 = vadd.f32 %v2461, %v2476
    %v2482 = vadd.f32 %v2462, %v2478
    %v2483 = vtanh.pop %v2481
    %v2484 = vtanh.pop %v2482
    %2487 = vrot.lane.b32.xlu0 %v2483, 32
    %v2488 = vpop.permute.xlu0 %2487
    %2489 = vrot.lane.b32.xlu0 %v2484, 32
    %v2490 = vpop.permute.xlu0 %2489
    %v2493 = vmul.f32 %v2456, %v2488
    %v2494 = vmul.f32 %v2458, %v2490
    %v2495 = vadd.f32 %v2352, %v2493
    %v2496 = vadd.f32 %v2353, %v2494
    %v2497 = vld [vmem:[#allocation2 + $0x50] sm:$0xff]
    %v2498 = vld [vmem:[#allocation2 + $0x28] sm:$0xff]
    %2501 = vrot.lane.b32.xlu0 %v2493, 64
    %v2502 = vpop.permute.xlu0 %2501
    %2503 = vrot.lane.b32.xlu0 %v2494, 64
    %v2504 = vpop.permute.xlu0 %2503
    %v2505 = vsel %vm219, %v2502, 0
    %v2507 = vsel %vm219, %v2504, 0
    %2509 = vmatprep.subr.mxu0 %v1787
    %2510 = vmatpush1.msra.mxu0 %v1786
    %2511 = vmatprep.subr.mxu0 %v1789
    %2512 = vmatpush1.msra.mxu0 %v1788
    %2513 = vmatprep.subr.mxu0 %v1791
    %2514 = vmatpush1.msra.mxu0 %v1790
    %2515 = vmatprep.subr.mxu0 %v1793
    %2516 = vmatpush1.msra.mxu0 %v1792
    %2517 = vmatprep.subr.mxu0 0.0
    %2518 = vmatpush1.msra.mxu0 0.0
    %2519 = vmatprep.subr.mxu0 0.0
    %2520 = vmatpush1.msra.mxu0 0.0
    %2521 = vmatprep.subr.mxu0 0.0
    %2522 = vmatpush1.msra.mxu0 0.0
    %2523 = vmatprep.subr.mxu0 0.0
    %2524 = vmatpush1.msra.mxu0 0.0
    %2525 = vmatprep.subr.mxu0 0.0
    %2526 = vmatpush1.msra.mxu0 0.0
    %2527 = vmatprep.subr.mxu0 0.0
    %2528 = vmatpush1.msra.mxu0 0.0
    %2529 = vmatprep.subr.mxu0 0.0
    %2530 = vmatpush1.msra.mxu0 0.0
    %2531 = vmatprep.subr.mxu0 0.0
    %2532 = vmatpush1.msra.mxu0 0.0
    %2533 = vmatprep.subr.mxu0 0.0
    %2534 = vmatpush1.msra.mxu0 0.0
    %2535 = vmatprep.subr.mxu0 0.0
    %2536 = vmatpush1.msra.mxu0 0.0
    %2537 = vmatprep.subr.mxu0 0.0
    %2538 = vmatpush1.msra.mxu0 0.0
    %2539 = vmatprep.subr.mxu0 0.0
    %2540 = vmatpush1.msra.mxu0 0.0
    %2541 = vmatprep.subr.mxu0 0.0
    %2542 = vmatpush1.msra.mxu0 0.0
    %2543 = vmatprep.subr.mxu0 0.0
    %2544 = vmatpush1.msra.mxu0 0.0
    %2545 = vmatprep.subr.mxu0 0.0
    %2546 = vmatpush1.msra.mxu0 0.0
    %2547 = vmatprep.subr.mxu0 0.0
    %2548 = vmatpush1.msra.mxu0 0.0
    %2549 = vmatprep.subr.mxu0 0.0
    %2550 = vmatpush1.msra.mxu0 0.0
    %2551 = vmatprep.subr.mxu0 0.0
    %2552 = vmatpush1.msra.mxu0 0.0
    %2553 = vmatprep.subr.mxu0 0.0
    %2554 = vmatpush1.msra.mxu0 0.0
    %2555 = vmatprep.subr.mxu0 0.0
    %2556 = vmatpush1.msra.mxu0 0.0
    %2557 = vmatprep.subr.mxu0 0.0
    %2558 = vmatpush1.msra.mxu0 0.0
    %2559 = vmatprep.subr.mxu0 0.0
    %2560 = vmatpush1.msra.mxu0 0.0
    %2561 = vmatprep.subr.mxu0 0.0
    %2562 = vmatpush1.msra.mxu0 0.0
    %2563 = vmatprep.subr.mxu0 0.0
    %2564 = vmatpush1.msra.mxu0 0.0
    %2565 = vmatprep.subr.mxu0 0.0
    %2566 = vmatpush1.msra.mxu0 0.0
    %2567 = vmatprep.subr.mxu0 0.0
    %2568 = vmatpush1.msra.mxu0 0.0
    %2569 = vmatprep.subr.mxu0 0.0
    %2570 = vmatpush1.msra.mxu0 0.0
    %2571 = vmatprep.subr.mxu0 0.0
    %2572 = vmatpush1.msra.mxu0 0.0
    %2573 = vmatprep.mubr.f32.mxu0 0.0
    %2574 = vmatmul.mubr.f32.gmra.mrb[0].mxu0 %v2505
    %v2575 = vpop.f32.mrb[0].mxu0
    %v2576 = vadd.f32 0.0, %v2575
    %v2577 = vpop.f32.mrb[0].mxu0
    %v2578 = vadd.f32 0.0, %v2577
    %2579 = vmatprep.mubr.f32.mxu0 0.0
    %2580 = vmatmul.mubr.f32.gmra.mrb[0].mxu0 %v2507
    %v2581 = vpop.f32.mrb[0].mxu0
    %v2582 = vadd.f32 0.0, %v2581
    %v2583 = vpop.f32.mrb[0].mxu0
    %v2584 = vadd.f32 0.0, %v2583
    %2585 = vdwg.mxu0
    %v2586 = vsel %vm28, %v2576, %v2578
    %v2587 = vsel %vm29, %v2582, %v2584
    %v2588 = vadd.f32 %v2497, %v2586
    %v2589 = vadd.f32 %v2498, %v2587
    %v2590 = vxor.u32 %v2588, 2147483648
    %v2591 = vxor.u32 %v2589, 2147483648
    %v2592 = vmul.f32 %v2590, 1.442695
    %v2593 = vpow.pop %v2592
    %v2594 = vmul.f32 %v2591, 1.442695
    %v2595 = vpow.pop %v2594
    %v2596 = vadd.f32 %v2593, 1.0
    %v2597 = vadd.f32 %v2595, 1.0
    %v2598 = vrcp.pop %v2596
    %v2599 = vmul.f32 1.0, %v2598
    %v2600 = vrcp.pop %v2597
    %v2601 = vmul.f32 1.0, %v2600
    %v2602 = vtanh.pop %v2588
    %v2603 = vtanh.pop %v2589
    %v2604 = vmul.f32 %v2599, %v2481
    %v2605 = vmul.f32 %v2601, %v2482
    %2608 = vrot.lane.b32.xlu0 %v2602, 32
    %v2609 = vpop.permute.xlu0 %2608
    %2610 = vrot.lane.b32.xlu0 %v2603, 32
    %v2611 = vpop.permute.xlu0 %2610
    %v2614 = vmul.f32 %v2599, %v2609
    %v2615 = vmul.f32 %v2601, %v2611
    %2618 = vrot.lane.b32.xlu0 %v2614, 32
    %v2619 = vpop.permute.xlu0 %2618
    %2620 = vrot.lane.b32.xlu0 %v2615, 32
    %v2621 = vpop.permute.xlu0 %2620
    %v2624 = vadd.f32 %v2604, %v2619
    %v2625 = vadd.f32 %v2605, %v2621
    %v2626 = vtanh.pop %v2624
    %v2627 = vtanh.pop %v2625
    %2630 = vrot.lane.b32.xlu0 %v2626, 32
    %v2631 = vpop.permute.xlu0 %2630
    %2632 = vrot.lane.b32.xlu0 %v2627, 32
    %v2633 = vpop.permute.xlu0 %2632
    %v2636 = vmul.f32 %v2599, %v2631
    %v2637 = vmul.f32 %v2601, %v2633
    %v2638 = vadd.f32 %v2495, %v2636
    %v2639 = vadd.f32 %v2496, %v2637
    %v2640 = vld [vmem:[#allocation2 + $0x60] sm:$0xff]
    %v2641 = vld [vmem:[#allocation2 + $0x18] sm:$0xff]
    %2644 = vrot.lane.b32.xlu0 %v2636, 64
    %v2645 = vpop.permute.xlu0 %2644
    %2646 = vrot.lane.b32.xlu0 %v2637, 64
    %v2647 = vpop.permute.xlu0 %2646
    %v2648 = vsel %vm219, %v2645, 0
    %v2650 = vsel %vm219, %v2647, 0
    %2652 = vmatprep.subr.mxu0 %v1787
    %2653 = vmatpush1.msra.mxu0 %v1786
    %2654 = vmatprep.subr.mxu0 %v1789
    %2655 = vmatpush1.msra.mxu0 %v1788
    %2656 = vmatprep.subr.mxu0 %v1791
    %2657 = vmatpush1.msra.mxu0 %v1790
    %2658 = vmatprep.subr.mxu0 %v1793
    %2659 = vmatpush1.msra.mxu0 %v1792
    %2660 = vmatprep.subr.mxu0 0.0
    %2661 = vmatpush1.msra.mxu0 0.0
    %2662 = vmatprep.subr.mxu0 0.0
    %2663 = vmatpush1.msra.mxu0 0.0
    %2664 = vmatprep.subr.mxu0 0.0
    %2665 = vmatpush1.msra.mxu0 0.0
    %2666 = vmatprep.subr.mxu0 0.0
    %2667 = vmatpush1.msra.mxu0 0.0
    %2668 = vmatprep.subr.mxu0 0.0
    %2669 = vmatpush1.msra.mxu0 0.0
    %2670 = vmatprep.subr.mxu0 0.0
    %2671 = vmatpush1.msra.mxu0 0.0
    %2672 = vmatprep.subr.mxu0 0.0
    %2673 = vmatpush1.msra.mxu0 0.0
    %2674 = vmatprep.subr.mxu0 0.0
    %2675 = vmatpush1.msra.mxu0 0.0
    %2676 = vmatprep.subr.mxu0 0.0
    %2677 = vmatpush1.msra.mxu0 0.0
    %2678 = vmatprep.subr.mxu0 0.0
    %2679 = vmatpush1.msra.mxu0 0.0
    %2680 = vmatprep.subr.mxu0 0.0
    %2681 = vmatpush1.msra.mxu0 0.0
    %2682 = vmatprep.subr.mxu0 0.0
    %2683 = vmatpush1.msra.mxu0 0.0
    %2684 = vmatprep.subr.mxu0 0.0
    %2685 = vmatpush1.msra.mxu0 0.0
    %2686 = vmatprep.subr.mxu0 0.0
    %2687 = vmatpush1.msra.mxu0 0.0
    %2688 = vmatprep.subr.mxu0 0.0
    %2689 = vmatpush1.msra.mxu0 0.0
    %2690 = vmatprep.subr.mxu0 0.0
    %2691 = vmatpush1.msra.mxu0 0.0
    %2692 = vmatprep.subr.mxu0 0.0
    %2693 = vmatpush1.msra.mxu0 0.0
    %2694 = vmatprep.subr.mxu0 0.0
    %2695 = vmatpush1.msra.mxu0 0.0
    %2696 = vmatprep.subr.mxu0 0.0
    %2697 = vmatpush1.msra.mxu0 0.0
    %2698 = vmatprep.subr.mxu0 0.0
    %2699 = vmatpush1.msra.mxu0 0.0
    %2700 = vmatprep.subr.mxu0 0.0
    %2701 = vmatpush1.msra.mxu0 0.0
    %2702 = vmatprep.subr.mxu0 0.0
    %2703 = vmatpush1.msra.mxu0 0.0
    %2704 = vmatprep.subr.mxu0 0.0
    %2705 = vmatpush1.msra.mxu0 0.0
    %2706 = vmatprep.subr.mxu0 0.0
    %2707 = vmatpush1.msra.mxu0 0.0
    %2708 = vmatprep.subr.mxu0 0.0
    %2709 = vmatpush1.msra.mxu0 0.0
    %2710 = vmatprep.subr.mxu0 0.0
    %2711 = vmatpush1.msra.mxu0 0.0
    %2712 = vmatprep.subr.mxu0 0.0
    %2713 = vmatpush1.msra.mxu0 0.0
    %2714 = vmatprep.subr.mxu0 0.0
    %2715 = vmatpush1.msra.mxu0 0.0
    %2716 = vmatprep.mubr.f32.mxu0 0.0
    %2717 = vmatmul.mubr.f32.gmra.mrb[0].mxu0 %v2648
    %v2718 = vpop.f32.mrb[0].mxu0
    %v2719 = vadd.f32 0.0, %v2718
    %v2720 = vpop.f32.mrb[0].mxu0
    %v2721 = vadd.f32 0.0, %v2720
    %2722 = vmatprep.mubr.f32.mxu0 0.0
    %2723 = vmatmul.mubr.f32.gmra.mrb[0].mxu0 %v2650
    %v2724 = vpop.f32.mrb[0].mxu0
    %v2725 = vadd.f32 0.0, %v2724
    %v2726 = vpop.f32.mrb[0].mxu0
    %v2727 = vadd.f32 0.0, %v2726
    %2728 = vdwg.mxu0
    %v2729 = vsel %vm28, %v2719, %v2721
    %v2730 = vsel %vm29, %v2725, %v2727
    %v2731 = vadd.f32 %v2640, %v2729
    %v2732 = vadd.f32 %v2641, %v2730
    %v2733 = vxor.u32 %v2731, 2147483648
    %v2734 = vxor.u32 %v2732, 2147483648
    %v2735 = vmul.f32 %v2733, 1.442695
    %v2736 = vpow.pop %v2735
    %v2737 = vmul.f32 %v2734, 1.442695
    %v2738 = vpow.pop %v2737
    %v2739 = vadd.f32 %v2736, 1.0
    %v2740 = vadd.f32 %v2738, 1.0
    %v2741 = vrcp.pop %v2739
    %v2742 = vmul.f32 1.0, %v2741
    %v2743 = vrcp.pop %v2740
    %v2744 = vmul.f32 1.0, %v2743
    %v2745 = vtanh.pop %v2731
    %v2746 = vtanh.pop %v2732
    %v2747 = vmul.f32 %v2742, %v2624
    %v2748 = vmul.f32 %v2744, %v2625
    %2751 = vrot.lane.b32.xlu0 %v2745, 32
    %v2752 = vpop.permute.xlu0 %2751
    %2753 = vrot.lane.b32.xlu0 %v2746, 32
    %v2754 = vpop.permute.xlu0 %2753
    %v2757 = vmul.f32 %v2742, %v2752
    %v2758 = vmul.f32 %v2744, %v2754
    %2761 = vrot.lane.b32.xlu0 %v2757, 32
    %v2762 = vpop.permute.xlu0 %2761
    %2763 = vrot.lane.b32.xlu0 %v2758, 32
    %v2764 = vpop.permute.xlu0 %2763
    %v2767 = vadd.f32 %v2747, %v2762
    %v2768 = vadd.f32 %v2748, %v2764
    %v2769 = vtanh.pop %v2767
    %v2770 = vtanh.pop %v2768
    %2773 = vrot.lane.b32.xlu0 %v2769, 32
    %v2774 = vpop.permute.xlu0 %2773
    %2775 = vrot.lane.b32.xlu0 %v2770, 32
    %v2776 = vpop.permute.xlu0 %2775
    %v2779 = vmul.f32 %v2742, %v2774
    %v2780 = vmul.f32 %v2744, %v2776
    %v2781 = vadd.f32 %v2638, %v2779
    %v2782 = vadd.f32 %v2639, %v2780
    %v2783 = vld [vmem:[#allocation2 + $0x70] sm:$0xff]
    %v2784 = vld [vmem:[#allocation2 + $0x8] sm:$0xff]
    %2787 = vrot.lane.b32.xlu0 %v2779, 64
    %v2788 = vpop.permute.xlu0 %2787
    %2789 = vrot.lane.b32.xlu0 %v2780, 64
    %v2790 = vpop.permute.xlu0 %2789
    %v2791 = vsel %vm219, %v2788, 0
    %v2793 = vsel %vm219, %v2790, 0
    %2795 = vmatprep.subr.mxu0 %v1787
    %2796 = vmatpush1.msra.mxu0 %v1786
    %2797 = vmatprep.subr.mxu0 %v1789
    %2798 = vmatpush1.msra.mxu0 %v1788
    %2799 = vmatprep.subr.mxu0 %v1791
    %2800 = vmatpush1.msra.mxu0 %v1790
    %2801 = vmatprep.subr.mxu0 %v1793
    %2802 = vmatpush1.msra.mxu0 %v1792
    %2803 = vmatprep.subr.mxu0 0.0
    %2804 = vmatpush1.msra.mxu0 0.0
    %2805 = vmatprep.subr.mxu0 0.0
    %2806 = vmatpush1.msra.mxu0 0.0
    %2807 = vmatprep.subr.mxu0 0.0
    %2808 = vmatpush1.msra.mxu0 0.0
    %2809 = vmatprep.subr.mxu0 0.0
    %2810 = vmatpush1.msra.mxu0 0.0
    %2811 = vmatprep.subr.mxu0 0.0
    %2812 = vmatpush1.msra.mxu0 0.0
    %2813 = vmatprep.subr.mxu0 0.0
    %2814 = vmatpush1.msra.mxu0 0.0
    %2815 = vmatprep.subr.mxu0 0.0
    %2816 = vmatpush1.msra.mxu0 0.0
    %2817 = vmatprep.subr.mxu0 0.0
    %2818 = vmatpush1.msra.mxu0 0.0
    %2819 = vmatprep.subr.mxu0 0.0
    %2820 = vmatpush1.msra.mxu0 0.0
    %2821 = vmatprep.subr.mxu0 0.0
    %2822 = vmatpush1.msra.mxu0 0.0
    %2823 = vmatprep.subr.mxu0 0.0
    %2824 = vmatpush1.msra.mxu0 0.0
    %2825 = vmatprep.subr.mxu0 0.0
    %2826 = vmatpush1.msra.mxu0 0.0
    %2827 = vmatprep.subr.mxu0 0.0
    %2828 = vmatpush1.msra.mxu0 0.0
    %2829 = vmatprep.subr.mxu0 0.0
    %2830 = vmatpush1.msra.mxu0 0.0
    %2831 = vmatprep.subr.mxu0 0.0
    %2832 = vmatpush1.msra.mxu0 0.0
    %2833 = vmatprep.subr.mxu0 0.0
    %2834 = vmatpush1.msra.mxu0 0.0
    %2835 = vmatprep.subr.mxu0 0.0
    %2836 = vmatpush1.msra.mxu0 0.0
    %2837 = vmatprep.subr.mxu0 0.0
    %2838 = vmatpush1.msra.mxu0 0.0
    %2839 = vmatprep.subr.mxu0 0.0
    %2840 = vmatpush1.msra.mxu0 0.0
    %2841 = vmatprep.subr.mxu0 0.0
    %2842 = vmatpush1.msra.mxu0 0.0
    %2843 = vmatprep.subr.mxu0 0.0
    %2844 = vmatpush1.msra.mxu0 0.0
    %2845 = vmatprep.subr.mxu0 0.0
    %2846 = vmatpush1.msra.mxu0 0.0
    %2847 = vmatprep.subr.mxu0 0.0
    %2848 = vmatpush1.msra.mxu0 0.0
    %2849 = vmatprep.subr.mxu0 0.0
    %2850 = vmatpush1.msra.mxu0 0.0
    %2851 = vmatprep.subr.mxu0 0.0
    %2852 = vmatpush1.msra.mxu0 0.0
    %2853 = vmatprep.subr.mxu0 0.0
    %2854 = vmatpush1.msra.mxu0 0.0
    %2855 = vmatprep.subr.mxu0 0.0
    %2856 = vmatpush1.msra.mxu0 0.0
    %2857 = vmatprep.subr.mxu0 0.0
    %2858 = vmatpush1.msra.mxu0 0.0
    %2859 = vmatprep.mubr.f32.mxu0 0.0
    %2860 = vmatmul.mubr.f32.gmra.mrb[0].mxu0 %v2791
    %v2861 = vpop.f32.mrb[0].mxu0
    %v2862 = vadd.f32 0.0, %v2861
    %v2863 = vpop.f32.mrb[0].mxu0
    %v2864 = vadd.f32 0.0, %v2863
    %2865 = vmatprep.mubr.f32.mxu0 0.0
    %2866 = vmatmul.mubr.f32.gmra.mrb[0].mxu0 %v2793
    %v2867 = vpop.f32.mrb[0].mxu0
    %v2868 = vadd.f32 0.0, %v2867
    %v2869 = vpop.f32.mrb[0].mxu0
    %v2870 = vadd.f32 0.0, %v2869
    %2871 = vdwg.mxu0
    %v2872 = vsel %vm28, %v2862, %v2864
    %v2873 = vsel %vm29, %v2868, %v2870
    %v2874 = vadd.f32 %v2783, %v2872
    %v2875 = vadd.f32 %v2784, %v2873
    %v2876 = vxor.u32 %v2874, 2147483648
    %v2877 = vxor.u32 %v2875, 2147483648
    %v2878 = vmul.f32 %v2876, 1.442695
    %v2879 = vpow.pop %v2878
    %v2880 = vmul.f32 %v2877, 1.442695
    %v2881 = vpow.pop %v2880
    %v2882 = vadd.f32 %v2879, 1.0
    %v2883 = vadd.f32 %v2881, 1.0
    %v2884 = vrcp.pop %v2882
    %v2885 = vmul.f32 1.0, %v2884
    %v2886 = vrcp.pop %v2883
    %v2887 = vmul.f32 1.0, %v2886
    %v2888 = vtanh.pop %v2874
    %v2889 = vtanh.pop %v2875
    %v2890 = vmul.f32 %v2885, %v2767
    %v2891 = vmul.f32 %v2887, %v2768
    %2894 = vrot.lane.b32.xlu0 %v2888, 32
    %v2895 = vpop.permute.xlu0 %2894
    %2896 = vrot.lane.b32.xlu0 %v2889, 32
    %v2897 = vpop.permute.xlu0 %2896
    %v2900 = vmul.f32 %v2885, %v2895
    %v2901 = vmul.f32 %v2887, %v2897
    %2904 = vrot.lane.b32.xlu0 %v2900, 32
    %v2905 = vpop.permute.xlu0 %2904
    %2906 = vrot.lane.b32.xlu0 %v2901, 32
    %v2907 = vpop.permute.xlu0 %2906
    %v2910 = vadd.f32 %v2890, %v2905
    %v2911 = vadd.f32 %v2891, %v2907
    %v2912 = vtanh.pop %v2910
    %v2913 = vtanh.pop %v2911
    %2916 = vrot.lane.b32.xlu0 %v2912, 32
    %v2917 = vpop.permute.xlu0 %2916
    %2918 = vrot.lane.b32.xlu0 %v2913, 32
    %v2919 = vpop.permute.xlu0 %2918
    %v2922 = vmul.f32 %v2885, %v2917
    %v2923 = vmul.f32 %v2887, %v2919
    %v2924 = vadd.f32 %v2781, %v2922
    %v2925 = vadd.f32 %v2782, %v2923
    %v2926 = vld [vmem:[#allocation5 + $0x140] sm:$0xff]
    %v2927 = vld [vmem:[#allocation5 + $0x150] sm:$0xff]
    %v2928 = vld [vmem:[#allocation5 + $0x160] sm:$0xff]
    %v2929 = vld [vmem:[#allocation5 + $0x170] sm:$0xff]
    %v2930 = vld [vmem:[#allocation5 + $0x180] sm:$0xff]
    %v2931 = vld [vmem:[#allocation5 + $0x190] sm:$0xff]
    %v2932 = vld [vmem:[#allocation5 + $0x1a0] sm:$0xff]
    %v2933 = vld [vmem:[#allocation5 + $0x1b0] sm:$0xff]
    %v2934 = vld [vmem:[#allocation5 + $0x1c0] ss:$0 sm:$0xff]
    %2936 = vrot.lane.b32.xlu0 %v2925, 64
    %v2937 = vpop.permute.xlu0 %2936
    %v2938 = vsel %vm219, %v2937, 0
    %2940 = vmatprep.subr.mxu0 0.0
    %2941 = vmatpush1.msra.mxu0 %v2930
    %2942 = vmatprep.subr.mxu0 0.0
    %2943 = vmatpush1.msra.mxu0 %v2931
    %2944 = vmatprep.subr.mxu0 0.0
    %2945 = vmatpush1.msra.mxu0 %v2932
    %2946 = vmatprep.subr.mxu0 0.0
    %2947 = vmatpush1.msra.mxu0 %v2933
    %2948 = vmatprep.subr.mxu0 0.0
    %2949 = vmatpush1.msra.mxu0 0.0
    %2950 = vmatprep.subr.mxu0 0.0
    %2951 = vmatpush1.msra.mxu0 0.0
    %2952 = vmatprep.subr.mxu0 0.0
    %2953 = vmatpush1.msra.mxu0 0.0
    %2954 = vmatprep.subr.mxu0 0.0
    %2955 = vmatpush1.msra.mxu0 0.0
    %2956 = vmatprep.subr.mxu0 0.0
    %2957 = vmatpush1.msra.mxu0 0.0
    %2958 = vmatprep.subr.mxu0 0.0
    %2959 = vmatpush1.msra.mxu0 0.0
    %2960 = vmatprep.subr.mxu0 0.0
    %2961 = vmatpush1.msra.mxu0 0.0
    %2962 = vmatprep.subr.mxu0 0.0
    %2963 = vmatpush1.msra.mxu0 0.0
    %2964 = vmatprep.subr.mxu0 0.0
    %2965 = vmatpush1.msra.mxu0 0.0
    %2966 = vmatprep.subr.mxu0 0.0
    %2967 = vmatpush1.msra.mxu0 0.0
    %2968 = vmatprep.subr.mxu0 0.0
    %2969 = vmatpush1.msra.mxu0 0.0
    %2970 = vmatprep.subr.mxu0 0.0
    %2971 = vmatpush1.msra.mxu0 0.0
    %2972 = vmatprep.subr.mxu0 0.0
    %2973 = vmatpush1.msra.mxu0 0.0
    %2974 = vmatprep.subr.mxu0 0.0
    %2975 = vmatpush1.msra.mxu0 0.0
    %2976 = vmatprep.subr.mxu0 0.0
    %2977 = vmatpush1.msra.mxu0 0.0
    %2978 = vmatprep.subr.mxu0 0.0
    %2979 = vmatpush1.msra.mxu0 0.0
    %2980 = vmatprep.subr.mxu0 0.0
    %2981 = vmatpush1.msra.mxu0 0.0
    %2982 = vmatprep.subr.mxu0 0.0
    %2983 = vmatpush1.msra.mxu0 0.0
    %2984 = vmatprep.subr.mxu0 0.0
    %2985 = vmatpush1.msra.mxu0 0.0
    %2986 = vmatprep.subr.mxu0 0.0
    %2987 = vmatpush1.msra.mxu0 0.0
    %2988 = vmatprep.subr.mxu0 0.0
    %2989 = vmatpush1.msra.mxu0 0.0
    %2990 = vmatprep.subr.mxu0 0.0
    %2991 = vmatpush1.msra.mxu0 0.0
    %2992 = vmatprep.subr.mxu0 0.0
    %2993 = vmatpush1.msra.mxu0 0.0
    %2994 = vmatprep.subr.mxu0 0.0
    %2995 = vmatpush1.msra.mxu0 0.0
    %2996 = vmatprep.subr.mxu0 0.0
    %2997 = vmatpush1.msra.mxu0 0.0
    %2998 = vmatprep.subr.mxu0 0.0
    %2999 = vmatpush1.msra.mxu0 0.0
    %3000 = vmatprep.subr.mxu0 0.0
    %3001 = vmatpush1.msra.mxu0 0.0
    %3002 = vmatprep.subr.mxu0 0.0
    %3003 = vmatpush1.msra.mxu0 0.0
    %3004 = vmatprep.mubr.f32.mxu0 0.0
    %3005 = vmatmul.mubr.f32.gmra.mrb[0].mxu0 %v2938
    %v3006 = vpop.f32.mrb[0].mxu0
    %v3007 = vadd.f32 0.0, %v3006
    %v3008 = vpop.f32.mrb[0].mxu0
    %3009 = vdwg.mxu0
    %3011 = vrot.lane.b32.xlu0 %v2924, 64
    %v3012 = vpop.permute.xlu0 %3011
    %v3013 = vsel %vm219, %v3012, 0
    %3015 = vmatprep.subr.mxu0 0.0
    %3016 = vmatpush1.msra.mxu0 %v2926
    %3017 = vmatprep.subr.mxu0 0.0
    %3018 = vmatpush1.msra.mxu0 %v2927
    %3019 = vmatprep.subr.mxu0 0.0
    %3020 = vmatpush1.msra.mxu0 %v2928
    %3021 = vmatprep.subr.mxu0 0.0
    %3022 = vmatpush1.msra.mxu0 %v2929
    %3023 = vmatprep.subr.mxu0 0.0
    %3024 = vmatpush1.msra.mxu0 0.0
    %3025 = vmatprep.subr.mxu0 0.0
    %3026 = vmatpush1.msra.mxu0 0.0
    %3027 = vmatprep.subr.mxu0 0.0
    %3028 = vmatpush1.msra.mxu0 0.0
    %3029 = vmatprep.subr.mxu0 0.0
    %3030 = vmatpush1.msra.mxu0 0.0
    %3031 = vmatprep.subr.mxu0 0.0
    %3032 = vmatpush1.msra.mxu0 0.0
    %3033 = vmatprep.subr.mxu0 0.0
    %3034 = vmatpush1.msra.mxu0 0.0
    %3035 = vmatprep.subr.mxu0 0.0
    %3036 = vmatpush1.msra.mxu0 0.0
    %3037 = vmatprep.subr.mxu0 0.0
    %3038 = vmatpush1.msra.mxu0 0.0
    %3039 = vmatprep.subr.mxu0 0.0
    %3040 = vmatpush1.msra.mxu0 0.0
    %3041 = vmatprep.subr.mxu0 0.0
    %3042 = vmatpush1.msra.mxu0 0.0
    %3043 = vmatprep.subr.mxu0 0.0
    %3044 = vmatpush1.msra.mxu0 0.0
    %3045 = vmatprep.subr.mxu0 0.0
    %3046 = vmatpush1.msra.mxu0 0.0
    %3047 = vmatprep.subr.mxu0 0.0
    %3048 = vmatpush1.msra.mxu0 0.0
    %3049 = vmatprep.subr.mxu0 0.0
    %3050 = vmatpush1.msra.mxu0 0.0
    %3051 = vmatprep.subr.mxu0 0.0
    %3052 = vmatpush1.msra.mxu0 0.0
    %3053 = vmatprep.subr.mxu0 0.0
    %3054 = vmatpush1.msra.mxu0 0.0
    %3055 = vmatprep.subr.mxu0 0.0
    %3056 = vmatpush1.msra.mxu0 0.0
    %3057 = vmatprep.subr.mxu0 0.0
    %3058 = vmatpush1.msra.mxu0 0.0
    %3059 = vmatprep.subr.mxu0 0.0
    %3060 = vmatpush1.msra.mxu0 0.0
    %3061 = vmatprep.subr.mxu0 0.0
    %3062 = vmatpush1.msra.mxu0 0.0
    %3063 = vmatprep.subr.mxu0 0.0
    %3064 = vmatpush1.msra.mxu0 0.0
    %3065 = vmatprep.subr.mxu0 0.0
    %3066 = vmatpush1.msra.mxu0 0.0
    %3067 = vmatprep.subr.mxu0 0.0
    %3068 = vmatpush1.msra.mxu0 0.0
    %3069 = vmatprep.subr.mxu0 0.0
    %3070 = vmatpush1.msra.mxu0 0.0
    %3071 = vmatprep.subr.mxu0 0.0
    %3072 = vmatpush1.msra.mxu0 0.0
    %3073 = vmatprep.subr.mxu0 0.0
    %3074 = vmatpush1.msra.mxu0 0.0
    %3075 = vmatprep.subr.mxu0 0.0
    %3076 = vmatpush1.msra.mxu0 0.0
    %3077 = vmatprep.subr.mxu0 0.0
    %3078 = vmatpush1.msra.mxu0 0.0
    %3079 = vmatprep.mubr.f32.mxu0 0.0
    %3080 = vmatmul.mubr.f32.gmra.mrb[0].mxu0 %v3013
    %v3081 = vpop.f32.mrb[0].mxu0
    %v3082 = vadd.f32 %v3007, %v3081
    %v3083 = vpop.f32.mrb[0].mxu0
    %3084 = vdwg.mxu0
    %v3085 = vmul.f32 %v3082, 0.125
    %v3086 = vadd.f32 %v3085, %v2934
    %vm3087 = vcmask 31744
    %3088 = vst.msk [vmem:[%s2] sm:$0xff] %vm3087, %v3086
    // Predicated region
    $region14: #{tpu_custom_call.1} parent=1 // pred_check
      _
    $region15: #{tpu_custom_call.1} parent=1 // pred_check_branch
      %3090 = sbr.rel (0) target = $region17
    $region16: #{tpu_custom_call.1} parent=1 // pred_region
      _
    $region17: #{tpu_custom_call.1} parent=1 // pred_fallthru
      _
    // Predicated region
    $region18: #{tpu_custom_call.1} parent=1 // pred_check
      _
    $region19: #{tpu_custom_call.1} parent=1 // pred_check_branch
      %3092 = sbr.rel (0) target = $region21
    $region20: #{tpu_custom_call.1} parent=1 // pred_region
      _
    $region21: #{tpu_custom_call.1} parent=1 // pred_fallthru
      _
    %3093 = vsyncpa [#allocation6], 1

</llo_original>
